<compile_context>
chip_gen: v7x
topology: tpu7x:2x2x1
jax: 0.10.0
libtpu: 0.0.40
codegen_flags: <defaults>
</compile_context>

<pallas_src>
import itertools
import math

import numpy as np
import jax
import jax.numpy as jnp
from jax.experimental import pallas as pl
from jax.experimental.pallas import tpu as pltpu

POLYORDER = 3
R_DESMO = 4
_HI = jax.lax.Precision.HIGHEST  # keep f32 accuracy through the MXU


def calculate_number_of_terms(nvars, polyorder):
    return sum(math.comb(nvars + k - 1, k) for k in range(polyorder + 1))


def _poly_terms(nvars, polyorder):
    # Same column ordering as POOL_DATA: constant, linear, then i<=j, i<=j<=k.
    terms = [()]
    for order in range(1, polyorder + 1):
        terms.extend(itertools.combinations_with_replacement(range(nvars), order))
    return terms


POLY_TERMS = _poly_terms(R_DESMO, POLYORDER)
NUM_TERMS = len(POLY_TERMS)
assert NUM_TERMS == calculate_number_of_terms(R_DESMO, POLYORDER)  # 35 for r=4, p=3


def _selection_matrices():
    # S_k[j, i] == 1  <=>  the k-th factor of polynomial term j is row i of
    # L1 = [latent_0 .. latent_{r-1}; ones].  Terms of order < 3 are padded with
    # the ones row, so   theta^T = (S0 @ L1) * (S1 @ L1) * (S2 @ L1).
    s = np.zeros((3, NUM_TERMS, R_DESMO + 1), np.float32)
    for j, tup in enumerate(POLY_TERMS):
        idx = list(tup) + [R_DESMO] * (3 - len(tup))
        for k in range(3):
            s[k, j, idx[k]] = 1.0
    return s


def desmo_kernel(lat1_ref, s0_ref, s1_ref, s2_ref, wz_ref, ws_ref, wc_ref, wt_ref,
                 osin_ref, ocos_ref, otanh_ref, out_ref):
    l1 = lat1_ref[...]                       # (r+1, tn): rows = [latent_0..3, ones]
    lat = l1[:R_DESMO, :]                    # (r, tn)

    # ---- polynomial library (POOL_DATA) via selection matmuls on the MXU ----
    f0 = jnp.dot(s0_ref[...], l1, preferred_element_type=jnp.float32, precision=_HI)
    f1 = jnp.dot(s1_ref[...], l1, preferred_element_type=jnp.float32, precision=_HI)
    f2 = jnp.dot(s2_ref[...], l1, preferred_element_type=jnp.float32, precision=_HI)
    theta_t = f0 * f1 * f2                   # (num_terms, tn), lane-dense

    # c_coef already folded into wz_ref in the wrapper.
    out = jnp.dot(wz_ref[...], theta_t, preferred_element_type=jnp.float32,
                  precision=_HI)             # (m, tn)

    # ---- fourier / tanh rank-(3r) contribution (one transcendental each) ----
    sin_a = jnp.sin(lat * osin_ref[...])     # (r, tn)
    cos_a = jnp.cos(lat * ocos_ref[...])
    tanh_a = jnp.tanh(lat * otanh_ref[...])
    out = out + jnp.dot(ws_ref[...], sin_a, preferred_element_type=jnp.float32,
                        precision=_HI)
    out = out + jnp.dot(wc_ref[...], cos_a, preferred_element_type=jnp.float32,
                        precision=_HI)
    out = out + jnp.dot(wt_ref[...], tanh_a, preferred_element_type=jnp.float32,
                        precision=_HI)

    out_ref[...] = out                       # (m, tn): lane-dense store


def desmo_forward(phi_stack, pod_modes, c_coef, z_values,
                  zsin, zcos, ztanh, sin_coef, cos_coef, tanh_coef, omega, *, tn=512):
    """Returns (final_reconstruction.T -> (m, n), latent_spatial (n, r), z_values)."""
    n, r = phi_stack.shape
    num_terms, m = z_values.shape
    assert r == R_DESMO and num_terms == NUM_TERMS
    assert tn % 128 == 0

    f32 = jnp.float32
    phi_stack = phi_stack.astype(f32)
    pod_modes = pod_modes.astype(f32)
    z_values = z_values.astype(f32)

    # latent_spatial = phi_i * POD_modes[:, i]  (trivial XLA elementwise; also
    # the module's second return value).
    latent = phi_stack * pod_modes                                       # (n, r)

    # Pad the spatial/lane axis so every block is (8,128)-tileable.  Padded
    # columns hold latent = 0 (finite everywhere) and are sliced off below.
    n_pad128 = ((n + 127) // 128) * 128
    if n_pad128 <= tn:
        tn = n_pad128
        n_pad = n_pad128
    else:
        n_pad = ((n + tn - 1) // tn) * tn
    lat_t = jnp.zeros((r, n_pad), f32).at[:, :n].set(latent.T)           # (r, n_pad)
    lat1_t = jnp.concatenate([lat_t, jnp.ones((1, n_pad), f32)], axis=0)  # (r+1, n_pad)

    s = jnp.asarray(_selection_matrices())                               # (3, 35, r+1)

    # Fold the scalar coefficients into the reused weight matrices once.
    wz_t = (z_values * c_coef.astype(f32)[:, None]).T                    # (m, 35)
    ws_t = (zsin.astype(f32) * sin_coef.astype(f32)[:, None]).T          # (m, r)
    wc_t = (zcos.astype(f32) * cos_coef.astype(f32)[:, None]).T          # (m, r)
    wt_t = (ztanh.astype(f32) * tanh_coef.astype(f32)[:, None]).T        # (m, r)
    omega = omega.astype(f32)
    osin = omega[0::3].reshape(r, 1)
    ocos = omega[1::3].reshape(r, 1)
    otanh = omega[2::3].reshape(r, 1)

    const = lambda i: (0, 0)
    recon_t_pad = pl.pallas_call(
        desmo_kernel,
        out_shape=jax.ShapeDtypeStruct((m, n_pad), f32),
        grid_spec=pltpu.PrefetchScalarGridSpec(
            num_scalar_prefetch=0,
            grid=(n_pad // tn,),
            in_specs=[
                pl.BlockSpec((r + 1, tn), lambda i: (0, i)),   # [latent.T; ones]
                pl.BlockSpec((num_terms, r + 1), const),       # S0
                pl.BlockSpec((num_terms, r + 1), const),       # S1
                pl.BlockSpec((num_terms, r + 1), const),       # S2
                pl.BlockSpec((m, num_terms), const),           # (c_coef * z).T
                pl.BlockSpec((m, r), const),                   # (sin_coef * zsin).T
                pl.BlockSpec((m, r), const),                   # (cos_coef * zcos).T
                pl.BlockSpec((m, r), const),                   # (tanh_coef * ztanh).T
                pl.BlockSpec((r, 1), const),                   # omega_sin
                pl.BlockSpec((r, 1), const),                   # omega_cos
                pl.BlockSpec((r, 1), const),                   # omega_tanh
            ],
            out_specs=pl.BlockSpec((m, tn), lambda i: (0, i)), # reconstruction.T
        ),
        compiler_params=pltpu.CompilerParams(dimension_semantics=("parallel",)),
    )(lat1_t, s[0], s[1], s[2], wz_t, ws_t, wc_t, wt_t, osin, ocos, otanh)

    recon_t = recon_t_pad[:, :n] if n_pad != n else recon_t_pad
    return recon_t, latent, z_values


# ---------------- pure-JAX reference (mirrors the PyTorch forward) -----------
def desmo_ref(phi_stack, pod, c_coef, z_values, zsin, zcos, ztanh,
              sin_coef, cos_coef, tanh_coef, omega):
    latent = phi_stack * pod
    nn_ = latent.shape[0]
    cols = [jnp.ones((nn_, 1), jnp.float32)]
    for tup in POLY_TERMS[1:]:
        col = latent[:, tup[0]]
        for t in tup[1:]:
            col = col * latent[:, t]
        cols.append(col[:, None])
    theta = jnp.concatenate(cols, axis=1) * c_coef[None, :]
    recon = jnp.dot(theta, z_values, precision=_HI)
    for i in range(R_DESMO):
        phi = latent[:, i]
        recon = recon + sin_coef[i] * jnp.sin(omega[3 * i] * phi)[:, None] * zsin[i][None, :]
        recon = recon + cos_coef[i] * jnp.cos(omega[3 * i + 1] * phi)[:, None] * zcos[i][None, :]
        recon = recon + tanh_coef[i] * jnp.tanh(omega[3 * i + 2] * phi)[:, None] * ztanh[i][None, :]
    return recon.T, latent, z_values


def _run_case(key, n, m):
    ks = jax.random.split(key, 12)
    r = R_DESMO
    # Module default omega_init is 10000; f32 sin/cos argument reduction at that
    # magnitude is ill-conditioned, so the test uses a smaller deterministic value.
    omega_init = 10.0

    POD_modes = jax.random.normal(ks[0], (n, r), jnp.float32)
    phi_stack = jnp.ones((n, r), jnp.float32) + 0.01 * jax.random.normal(ks[2], (n, r))
    c_coef = jnp.ones((NUM_TERMS,), jnp.float32) + 0.01 * jax.random.normal(ks[3], (NUM_TERMS,))
    z_values = jnp.ones((NUM_TERMS, m), jnp.float32) + 0.01 * jax.random.normal(ks[4], (NUM_TERMS, m))
    zsin = jnp.ones((r, m), jnp.float32) + 0.01 * jax.random.normal(ks[5], (r, m))
    zcos = jnp.ones((r, m), jnp.float32) + 0.01 * jax.random.normal(ks[6], (r, m))
    ztanh = jnp.ones((r, m), jnp.float32) + 0.01 * jax.random.normal(ks[7], (r, m))
    sin_coef = jnp.ones((r,), jnp.float32) + 0.01 * jax.random.normal(ks[8], (r,))
    cos_coef = jnp.ones((r,), jnp.float32) + 0.01 * jax.random.normal(ks[9], (r,))
    tanh_coef = jnp.ones((r,), jnp.float32) + 0.01 * jax.random.normal(ks[10], (r,))
    omega = jnp.full((3 * r,), omega_init, jnp.float32)

    recon_t, latent, zvals = desmo_forward(phi_stack, POD_modes, c_coef, z_values,
                                           zsin, zcos, ztanh,
                                           sin_coef, cos_coef, tanh_coef, omega)
    jax.block_until_ready((recon_t, latent, zvals))

    ref_recon_t, ref_latent, _ = desmo_ref(phi_stack, POD_modes, c_coef, z_values,
                                           zsin, zcos, ztanh,
                                           sin_coef, cos_coef, tanh_coef, omega)

    assert recon_t.shape == (m, n) and latent.shape == (n, r) and zvals.shape == (NUM_TERMS, m)
    assert jnp.allclose(recon_t, ref_recon_t, rtol=1e-4, atol=1e-3)
    assert jnp.allclose(latent, ref_latent, rtol=1e-5, atol=1e-5)


if __name__ == "__main__":
    key = jax.random.PRNGKey(0)
    k1, k2 = jax.random.split(key, 2)
    _run_case(k1, n=256, m=32)   # lane-aligned spatial size
    _run_case(k2, n=200, m=32)   # ragged spatial size (exercises padding path)
    print("KERNEL_OK")
</pallas_src>

<mosaic_0001>
module attributes {stable_mosaic.version = 11 : i64} {
  func.func @desmo_kernel(%arg0: i32, %arg1: memref<5x256xf32, #tpu.memory_space<vmem>>, %arg2: memref<35x5xf32, #tpu.memory_space<vmem>>, %arg3: memref<35x5xf32, #tpu.memory_space<vmem>>, %arg4: memref<35x5xf32, #tpu.memory_space<vmem>>, %arg5: memref<32x35xf32, #tpu.memory_space<vmem>>, %arg6: memref<32x4xf32, #tpu.memory_space<vmem>>, %arg7: memref<32x4xf32, #tpu.memory_space<vmem>>, %arg8: memref<32x4xf32, #tpu.memory_space<vmem>>, %arg9: memref<4x1xf32, #tpu.memory_space<vmem>>, %arg10: memref<4x1xf32, #tpu.memory_space<vmem>>, %arg11: memref<4x1xf32, #tpu.memory_space<vmem>>, %arg12: memref<32x256xf32, #tpu.memory_space<vmem>>) attributes {dimension_semantics = [#tpu.dimension_semantics<parallel>], iteration_bounds = array<i64: 1>, scalar_prefetch = 0 : i64, scratch_operands = 0 : i64, tpu.core_type = #tpu.core_type<tc>, window_params = [{transform_indices = @transform_0, window_bounds = array<i64: 5, 256>}, {pipeline_mode = #tpu.pipeline_mode<synchronous>, transform_indices = @transform_1, window_bounds = array<i64: 35, 5>}, {pipeline_mode = #tpu.pipeline_mode<synchronous>, transform_indices = @transform_2, window_bounds = array<i64: 35, 5>}, {pipeline_mode = #tpu.pipeline_mode<synchronous>, transform_indices = @transform_3, window_bounds = array<i64: 35, 5>}, {pipeline_mode = #tpu.pipeline_mode<synchronous>, transform_indices = @transform_4, window_bounds = array<i64: 32, 35>}, {pipeline_mode = #tpu.pipeline_mode<synchronous>, transform_indices = @transform_5, window_bounds = array<i64: 32, 4>}, {pipeline_mode = #tpu.pipeline_mode<synchronous>, transform_indices = @transform_6, window_bounds = array<i64: 32, 4>}, {pipeline_mode = #tpu.pipeline_mode<synchronous>, transform_indices = @transform_7, window_bounds = array<i64: 32, 4>}, {pipeline_mode = #tpu.pipeline_mode<synchronous>, transform_indices = @transform_8, window_bounds = array<i64: 4, 1>}, {pipeline_mode = #tpu.pipeline_mode<synchronous>, transform_indices = @transform_9, window_bounds = array<i64: 4, 1>}, {pipeline_mode = #tpu.pipeline_mode<synchronous>, transform_indices = @transform_10, window_bounds = array<i64: 4, 1>}, {transform_indices = @transform_11, window_bounds = array<i64: 32, 256>}]} {
    %c0 = arith.constant 0 : index
    %c0_0 = arith.constant 0 : index
    %0 = vector.load %arg1[%c0, %c0_0] : memref<5x256xf32, #tpu.memory_space<vmem>>, vector<5x256xf32>
    %1 = vector.extract_strided_slice %0 {offsets = [0, 0], sizes = [4, 256], strides = [1, 1]} : vector<5x256xf32> to vector<4x256xf32>
    %c0_1 = arith.constant 0 : index
    %c0_2 = arith.constant 0 : index
    %2 = vector.load %arg2[%c0_1, %c0_2] : memref<35x5xf32, #tpu.memory_space<vmem>>, vector<35x5xf32>
    %cst = arith.constant dense<0.000000e+00> : vector<35x256xf32>
    %3 = tpu.matmul %2, %0, %cst {dimension_numbers = #tpu.dot_dimension_numbers<[1], [0], [0], [1], [0, 0, 1, 1], [], []>, precision = #tpu.contract_precision<fp32>} : vector<35x5xf32>, vector<5x256xf32>, vector<35x256xf32> -> vector<35x256xf32>
    %c0_3 = arith.constant 0 : index
    %c0_4 = arith.constant 0 : index
    %4 = vector.load %arg3[%c0_3, %c0_4] : memref<35x5xf32, #tpu.memory_space<vmem>>, vector<35x5xf32>
    %cst_5 = arith.constant dense<0.000000e+00> : vector<35x256xf32>
    %5 = tpu.matmul %4, %0, %cst_5 {dimension_numbers = #tpu.dot_dimension_numbers<[1], [0], [0], [1], [0, 0, 1, 1], [], []>, precision = #tpu.contract_precision<fp32>} : vector<35x5xf32>, vector<5x256xf32>, vector<35x256xf32> -> vector<35x256xf32>
    %c0_6 = arith.constant 0 : index
    %c0_7 = arith.constant 0 : index
    %6 = vector.load %arg4[%c0_6, %c0_7] : memref<35x5xf32, #tpu.memory_space<vmem>>, vector<35x5xf32>
    %cst_8 = arith.constant dense<0.000000e+00> : vector<35x256xf32>
    %7 = tpu.matmul %6, %0, %cst_8 {dimension_numbers = #tpu.dot_dimension_numbers<[1], [0], [0], [1], [0, 0, 1, 1], [], []>, precision = #tpu.contract_precision<fp32>} : vector<35x5xf32>, vector<5x256xf32>, vector<35x256xf32> -> vector<35x256xf32>
    %8 = arith.mulf %3, %5 : vector<35x256xf32>
    %9 = arith.mulf %8, %7 : vector<35x256xf32>
    %c0_9 = arith.constant 0 : index
    %c0_10 = arith.constant 0 : index
    %10 = vector.load %arg5[%c0_9, %c0_10] : memref<32x35xf32, #tpu.memory_space<vmem>>, vector<32x35xf32>
    %cst_11 = arith.constant dense<0.000000e+00> : vector<32x256xf32>
    %11 = tpu.matmul %10, %9, %cst_11 {dimension_numbers = #tpu.dot_dimension_numbers<[1], [0], [0], [1], [0, 0, 1, 1], [], []>, precision = #tpu.contract_precision<fp32>} : vector<32x35xf32>, vector<35x256xf32>, vector<32x256xf32> -> vector<32x256xf32>
    %c0_12 = arith.constant 0 : index
    %c0_13 = arith.constant 0 : index
    %12 = vector.load %arg9[%c0_12, %c0_13] : memref<4x1xf32, #tpu.memory_space<vmem>>, vector<4x1xf32>
    %13 = vector.broadcast %12 : vector<4x1xf32> to vector<4x256xf32>
    %14 = arith.mulf %1, %13 : vector<4x256xf32>
    %15 = math.sin %14 : vector<4x256xf32>
    %c0_14 = arith.constant 0 : index
    %c0_15 = arith.constant 0 : index
    %16 = vector.load %arg10[%c0_14, %c0_15] : memref<4x1xf32, #tpu.memory_space<vmem>>, vector<4x1xf32>
    %17 = vector.broadcast %16 : vector<4x1xf32> to vector<4x256xf32>
    %18 = arith.mulf %1, %17 : vector<4x256xf32>
    %19 = math.cos %18 : vector<4x256xf32>
    %c0_16 = arith.constant 0 : index
    %c0_17 = arith.constant 0 : index
    %20 = vector.load %arg11[%c0_16, %c0_17] : memref<4x1xf32, #tpu.memory_space<vmem>>, vector<4x1xf32>
    %21 = vector.broadcast %20 : vector<4x1xf32> to vector<4x256xf32>
    %22 = arith.mulf %1, %21 : vector<4x256xf32>
    %23 = math.tanh %22 : vector<4x256xf32>
    %c0_18 = arith.constant 0 : index
    %c0_19 = arith.constant 0 : index
    %24 = vector.load %arg6[%c0_18, %c0_19] : memref<32x4xf32, #tpu.memory_space<vmem>>, vector<32x4xf32>
    %cst_20 = arith.constant dense<0.000000e+00> : vector<32x256xf32>
    %25 = tpu.matmul %24, %15, %cst_20 {dimension_numbers = #tpu.dot_dimension_numbers<[1], [0], [0], [1], [0, 0, 1, 1], [], []>, precision = #tpu.contract_precision<fp32>} : vector<32x4xf32>, vector<4x256xf32>, vector<32x256xf32> -> vector<32x256xf32>
    %26 = arith.addf %11, %25 : vector<32x256xf32>
    %c0_21 = arith.constant 0 : index
    %c0_22 = arith.constant 0 : index
    %27 = vector.load %arg7[%c0_21, %c0_22] : memref<32x4xf32, #tpu.memory_space<vmem>>, vector<32x4xf32>
    %cst_23 = arith.constant dense<0.000000e+00> : vector<32x256xf32>
    %28 = tpu.matmul %27, %19, %cst_23 {dimension_numbers = #tpu.dot_dimension_numbers<[1], [0], [0], [1], [0, 0, 1, 1], [], []>, precision = #tpu.contract_precision<fp32>} : vector<32x4xf32>, vector<4x256xf32>, vector<32x256xf32> -> vector<32x256xf32>
    %29 = arith.addf %26, %28 : vector<32x256xf32>
    %c0_24 = arith.constant 0 : index
    %c0_25 = arith.constant 0 : index
    %30 = vector.load %arg8[%c0_24, %c0_25] : memref<32x4xf32, #tpu.memory_space<vmem>>, vector<32x4xf32>
    %cst_26 = arith.constant dense<0.000000e+00> : vector<32x256xf32>
    %31 = tpu.matmul %30, %23, %cst_26 {dimension_numbers = #tpu.dot_dimension_numbers<[1], [0], [0], [1], [0, 0, 1, 1], [], []>, precision = #tpu.contract_precision<fp32>} : vector<32x4xf32>, vector<4x256xf32>, vector<32x256xf32> -> vector<32x256xf32>
    %32 = arith.addf %29, %31 : vector<32x256xf32>
    %c0_27 = arith.constant 0 : index
    %c0_28 = arith.constant 0 : index
    %33 = vector.load %arg12[%c0_27, %c0_28] : memref<32x256xf32, #tpu.memory_space<vmem>>, vector<32x256xf32>
    tpu.vector_store %arg12[%c0_27, %c0_28], %32 {strides = array<i32>} : memref<32x256xf32, #tpu.memory_space<vmem>>, vector<32x256xf32>,
    return
  }
  func.func @transform_0(%arg0: i32) -> (i32, i32) {
    %c0_i32 = arith.constant 0 : i32
    %c0_i32_0 = arith.constant 0 : i32
    return %c0_i32, %arg0 : i32, i32
  }
  func.func @transform_1(%arg0: i32) -> (i32, i32) {
    %c0_i32 = arith.constant 0 : i32
    %c0_i32_0 = arith.constant 0 : i32
    %c0_i32_1 = arith.constant 0 : i32
    return %c0_i32, %c0_i32_0 : i32, i32
  }
  func.func @transform_2(%arg0: i32) -> (i32, i32) {
    %c0_i32 = arith.constant 0 : i32
    %c0_i32_0 = arith.constant 0 : i32
    %c0_i32_1 = arith.constant 0 : i32
    return %c0_i32, %c0_i32_0 : i32, i32
  }
  func.func @transform_3(%arg0: i32) -> (i32, i32) {
    %c0_i32 = arith.constant 0 : i32
    %c0_i32_0 = arith.constant 0 : i32
    %c0_i32_1 = arith.constant 0 : i32
    return %c0_i32, %c0_i32_0 : i32, i32
  }
  func.func @transform_4(%arg0: i32) -> (i32, i32) {
    %c0_i32 = arith.constant 0 : i32
    %c0_i32_0 = arith.constant 0 : i32
    %c0_i32_1 = arith.constant 0 : i32
    return %c0_i32, %c0_i32_0 : i32, i32
  }
  func.func @transform_5(%arg0: i32) -> (i32, i32) {
    %c0_i32 = arith.constant 0 : i32
    %c0_i32_0 = arith.constant 0 : i32
    %c0_i32_1 = arith.constant 0 : i32
    return %c0_i32, %c0_i32_0 : i32, i32
  }
  func.func @transform_6(%arg0: i32) -> (i32, i32) {
    %c0_i32 = arith.constant 0 : i32
    %c0_i32_0 = arith.constant 0 : i32
    %c0_i32_1 = arith.constant 0 : i32
    return %c0_i32, %c0_i32_0 : i32, i32
  }
  func.func @transform_7(%arg0: i32) -> (i32, i32) {
    %c0_i32 = arith.constant 0 : i32
    %c0_i32_0 = arith.constant 0 : i32
    %c0_i32_1 = arith.constant 0 : i32
    return %c0_i32, %c0_i32_0 : i32, i32
  }
  func.func @transform_8(%arg0: i32) -> (i32, i32) {
    %c0_i32 = arith.constant 0 : i32
    %c0_i32_0 = arith.constant 0 : i32
    %c0_i32_1 = arith.constant 0 : i32
    return %c0_i32, %c0_i32_0 : i32, i32
  }
  func.func @transform_9(%arg0: i32) -> (i32, i32) {
    %c0_i32 = arith.constant 0 : i32
    %c0_i32_0 = arith.constant 0 : i32
    %c0_i32_1 = arith.constant 0 : i32
    return %c0_i32, %c0_i32_0 : i32, i32
  }
  func.func @transform_10(%arg0: i32) -> (i32, i32) {
    %c0_i32 = arith.constant 0 : i32
    %c0_i32_0 = arith.constant 0 : i32
    %c0_i32_1 = arith.constant 0 : i32
    return %c0_i32, %c0_i32_0 : i32, i32
  }
  func.func @transform_11(%arg0: i32) -> (i32, i32) {
    %c0_i32 = arith.constant 0 : i32
    %c0_i32_0 = arith.constant 0 : i32
    return %c0_i32, %arg0 : i32, i32
  }
}

</mosaic_0001>

<llo_original>
// kernel: tpu_custom_call.1
$region0: #{tpu_custom_call.1}
  #allocation0 [shape = 'u32[]', space=smem, size = 0x4, offset = 0x4, fixed_abs, tag = 'smem constant byte address 0x4 - core index']
  #allocation1 [shape = 'u32[144,128]{1,0:T(1,128)}', space=vmem, size = 0x12000, scoped, tag = 'internal scratch']
  %s0 = inlined_call_operand.vmem [shape: f32[5,256], index: 0, kind: input, shape index: {}]
  %s1 = inlined_call_operand.vmem [shape: f32[35,5], index: 1, kind: input, shape index: {}]
  %s2 = inlined_call_operand.vmem [shape: f32[35,5], index: 2, kind: input, shape index: {}]
  %s3 = inlined_call_operand.vmem [shape: f32[35,5], index: 3, kind: input, shape index: {}]
  %s4 = inlined_call_operand.vmem [shape: f32[32,35], index: 4, kind: input, shape index: {}]
  %s5 = inlined_call_operand.vmem [shape: f32[32,4], index: 5, kind: input, shape index: {}]
  %s6 = inlined_call_operand.vmem [shape: f32[32,4], index: 6, kind: input, shape index: {}]
  %s7 = inlined_call_operand.vmem [shape: f32[32,4], index: 7, kind: input, shape index: {}]
  %s8 = inlined_call_operand.vmem [shape: f32[4,1], index: 8, kind: input, shape index: {}]
  %s9 = inlined_call_operand.vmem [shape: f32[4,1], index: 9, kind: input, shape index: {}]
  %s10 = inlined_call_operand.vmem [shape: f32[4,1], index: 10, kind: input, shape index: {}]
  %s11 = inlined_call_operand.hbm [shape: f32[32,256], index: 11, kind: output, shape index: {}]
  %s12 = sld [smem:[#allocation0]]
  $region54: #{tpu_custom_call.1} parent=0
    _
  %s14 = ssub.s32 1, %s12
  %s15 = scalar_select 0, %s14, %s12
  $region1: #{tpu_custom_call.1} parent=0
    #allocation2 [shape = 'u8[32768]{0}', space=vmem, size = 0x8000, scoped, tag = 'output window, operand 0, single buffered']
    #allocation3 [shape = 's32[1]{0}', space=sflag, size = 0x4, scoped, tag = 'scoped memory for tpu_custom_call.1']
    %16 = vsyncpa [#allocation3], 0
    // Predicated region
    $region2: #{tpu_custom_call.1} parent=1 // pred_check
      _
    $region3: #{tpu_custom_call.1} parent=1 // pred_check_branch
      %18 = sbr.rel (0) target = $region5
    $region4: #{tpu_custom_call.1} parent=1 // pred_region
      _
    $region5: #{tpu_custom_call.1} parent=1 // pred_fallthru
      _
    // Predicated region
    $region6: #{tpu_custom_call.1} parent=1 // pred_check
      _
    $region7: #{tpu_custom_call.1} parent=1 // pred_check_branch
      %20 = sbr.rel (0) target = $region9
    $region8: #{tpu_custom_call.1} parent=1 // pred_region
      _
    $region9: #{tpu_custom_call.1} parent=1 // pred_fallthru
      _
    // Predicated region
    $region10: #{tpu_custom_call.1} parent=1 // pred_check
      _
    $region11: #{tpu_custom_call.1} parent=1 // pred_check_branch
      %22 = sbr.rel (0) target = $region13
    $region12: #{tpu_custom_call.1} parent=1 // pred_region
      _
    $region13: #{tpu_custom_call.1} parent=1 // pred_fallthru
      _
    // Predicated region
    $region14: #{tpu_custom_call.1} parent=1 // pred_check
      _
    $region15: #{tpu_custom_call.1} parent=1 // pred_check_branch
      %24 = sbr.rel (0) target = $region17
    $region16: #{tpu_custom_call.1} parent=1 // pred_region
      _
    $region17: #{tpu_custom_call.1} parent=1 // pred_fallthru
      _
    // Predicated region
    $region18: #{tpu_custom_call.1} parent=1 // pred_check
      _
    $region19: #{tpu_custom_call.1} parent=1 // pred_check_branch
      %26 = sbr.rel (0) target = $region21
    $region20: #{tpu_custom_call.1} parent=1 // pred_region
      _
    $region21: #{tpu_custom_call.1} parent=1 // pred_fallthru
      _
    // Predicated region
    $region22: #{tpu_custom_call.1} parent=1 // pred_check
      _
    $region23: #{tpu_custom_call.1} parent=1 // pred_check_branch
      %28 = sbr.rel (0) target = $region25
    $region24: #{tpu_custom_call.1} parent=1 // pred_region
      _
    $region25: #{tpu_custom_call.1} parent=1 // pred_fallthru
      _
    // Predicated region
    $region26: #{tpu_custom_call.1} parent=1 // pred_check
      _
    $region27: #{tpu_custom_call.1} parent=1 // pred_check_branch
      %30 = sbr.rel (0) target = $region29
    $region28: #{tpu_custom_call.1} parent=1 // pred_region
      _
    $region29: #{tpu_custom_call.1} parent=1 // pred_fallthru
      _
    // Predicated region
    $region30: #{tpu_custom_call.1} parent=1 // pred_check
      _
    $region31: #{tpu_custom_call.1} parent=1 // pred_check_branch
      %32 = sbr.rel (0) target = $region33
    $region32: #{tpu_custom_call.1} parent=1 // pred_region
      _
    $region33: #{tpu_custom_call.1} parent=1 // pred_fallthru
      _
    // Predicated region
    $region34: #{tpu_custom_call.1} parent=1 // pred_check
      _
    $region35: #{tpu_custom_call.1} parent=1 // pred_check_branch
      %34 = sbr.rel (0) target = $region37
    $region36: #{tpu_custom_call.1} parent=1 // pred_region
      _
    $region37: #{tpu_custom_call.1} parent=1 // pred_fallthru
      _
    // Predicated region
    $region38: #{tpu_custom_call.1} parent=1 // pred_check
      _
    $region39: #{tpu_custom_call.1} parent=1 // pred_check_branch
      %36 = sbr.rel (0) target = $region41
    $region40: #{tpu_custom_call.1} parent=1 // pred_region
      _
    $region41: #{tpu_custom_call.1} parent=1 // pred_fallthru
      _
    // Predicated region
    $region42: #{tpu_custom_call.1} parent=1 // pred_check
      _
    $region43: #{tpu_custom_call.1} parent=1 // pred_check_branch
      %38 = sbr.rel (0) target = $region45
    $region44: #{tpu_custom_call.1} parent=1 // pred_region
      _
    $region45: #{tpu_custom_call.1} parent=1 // pred_fallthru
      _
    %v39 = vld [vmem:[%s0] sm:$0x1f]
    %v40 = vld [vmem:[%s0 + $0x8] sm:$0x1f]
    %v41 = vld [vmem:[%s1] sm:$0xff]
    %v42 = vld [vmem:[%s1 + $0x8] sm:$0xff]
    %v43 = vld [vmem:[%s1 + $0x10] sm:$0xff]
    %v44 = vld [vmem:[%s1 + $0x18] sm:$0xff]
    %v45 = vld [vmem:[%s1 + $0x20] sm:$0x7]
    %vm46 = vcmask 39936
    %v48 = vsel %vm46, %v41, 0
    %v51 = vsel %vm46, %v42, 0
    %v54 = vsel %vm46, %v43, 0
    %v57 = vsel %vm46, %v44, 0
    %v60 = vsel %vm46, %v45, 0
    %vm62 = vcmask 1044480
    %v64 = vsel %vm62, %v39, 0
    %v67 = vsel %vm62, %v40, 0
    %v69 = vand.u32 %v67, 4294901760
    %70 = vmatprep.subr.mxu0 %v69
    %v71 = vand.u32 %v64, 4294901760
    %72 = vmatpush1.msra.mxu0 %v71
    %73 = vmatprep.subr.mxu0 0.0
    %74 = vmatpush1.msra.mxu0 0.0
    %75 = vmatprep.subr.mxu0 0.0
    %76 = vmatpush1.msra.mxu0 0.0
    %77 = vmatprep.subr.mxu0 0.0
    %78 = vmatpush1.msra.mxu0 0.0
    %79 = vmatprep.subr.mxu0 0.0
    %80 = vmatpush1.msra.mxu0 0.0
    %81 = vmatprep.subr.mxu0 0.0
    %82 = vmatpush1.msra.mxu0 0.0
    %83 = vmatprep.subr.mxu0 0.0
    %84 = vmatpush1.msra.mxu0 0.0
    %85 = vmatprep.subr.mxu0 0.0
    %86 = vmatpush1.msra.mxu0 0.0
    %87 = vmatprep.subr.mxu0 0.0
    %88 = vmatpush1.msra.mxu0 0.0
    %89 = vmatprep.subr.mxu0 0.0
    %90 = vmatpush1.msra.mxu0 0.0
    %91 = vmatprep.subr.mxu0 0.0
    %92 = vmatpush1.msra.mxu0 0.0
    %93 = vmatprep.subr.mxu0 0.0
    %94 = vmatpush1.msra.mxu0 0.0
    %95 = vmatprep.subr.mxu0 0.0
    %96 = vmatpush1.msra.mxu0 0.0
    %97 = vmatprep.subr.mxu0 0.0
    %98 = vmatpush1.msra.mxu0 0.0
    %99 = vmatprep.subr.mxu0 0.0
    %100 = vmatpush1.msra.mxu0 0.0
    %101 = vmatprep.subr.mxu0 0.0
    %102 = vmatpush1.msra.mxu0 0.0
    %103 = vmatprep.subr.mxu0 0.0
    %104 = vmatpush1.msra.mxu0 0.0
    %105 = vmatprep.subr.mxu0 0.0
    %106 = vmatpush1.msra.mxu0 0.0
    %107 = vmatprep.subr.mxu0 0.0
    %108 = vmatpush1.msra.mxu0 0.0
    %109 = vmatprep.subr.mxu0 0.0
    %110 = vmatpush1.msra.mxu0 0.0
    %111 = vmatprep.subr.mxu0 0.0
    %112 = vmatpush1.msra.mxu0 0.0
    %113 = vmatprep.subr.mxu0 0.0
    %114 = vmatpush1.msra.mxu0 0.0
    %115 = vmatprep.subr.mxu0 0.0
    %116 = vmatpush1.msra.mxu0 0.0
    %117 = vmatprep.subr.mxu0 0.0
    %118 = vmatpush1.msra.mxu0 0.0
    %119 = vmatprep.subr.mxu0 0.0
    %120 = vmatpush1.msra.mxu0 0.0
    %121 = vmatprep.subr.mxu0 0.0
    %122 = vmatpush1.msra.mxu0 0.0
    %123 = vmatprep.subr.mxu0 0.0
    %124 = vmatpush1.msra.mxu0 0.0
    %125 = vmatprep.subr.mxu0 0.0
    %126 = vmatpush1.msra.mxu0 0.0
    %127 = vmatprep.subr.mxu0 0.0
    %128 = vmatpush1.msra.mxu0 0.0
    %129 = vmatprep.subr.mxu0 0.0
    %130 = vmatpush1.msra.mxu0 0.0
    %131 = vmatprep.subr.mxu0 0.0
    %132 = vmatpush1.msra.mxu0 0.0
    %133 = vmatprep.subr.mxu0 0.0
    %134 = vmatpush1.msra.mxu0 0.0
    %135 = vmatprep.mubr.f32.mxu0 0.0
    %v136 = vand.u32 %v48, 4294901760
    %v137 = vsub.f32 %v48, %v136
    %v138 = vand.u32 %v137, 4294901760
    %v139 = vsub.f32 %v137, %v138
    %v140 = vand.u32 %v139, 4294901760
    %141 = vmatmul.mubr.f32.gmra.mrb[0].mxu0 %v140
    %v142 = vpop.f32.mrb[0].mxu0
    %v143 = vadd.f32 0.0, %v142
    %v144 = vpop.f32.mrb[0].mxu0
    %v145 = vadd.f32 0.0, %v144
    %146 = vmatprep.mubr.f32.mxu0 0.0
    %v147 = vand.u32 %v51, 4294901760
    %v148 = vsub.f32 %v51, %v147
    %v149 = vand.u32 %v148, 4294901760
    %v150 = vsub.f32 %v148, %v149
    %v151 = vand.u32 %v150, 4294901760
    %152 = vmatmul.mubr.f32.gmra.mrb[0].mxu0 %v151
    %v153 = vpop.f32.mrb[0].mxu0
    %v154 = vadd.f32 0.0, %v153
    %v155 = vpop.f32.mrb[0].mxu0
    %v156 = vadd.f32 0.0, %v155
    %157 = vmatprep.mubr.f32.mxu0 0.0
    %v158 = vand.u32 %v54, 4294901760
    %v159 = vsub.f32 %v54, %v158
    %v160 = vand.u32 %v159, 4294901760
    %v161 = vsub.f32 %v159, %v160
    %v162 = vand.u32 %v161, 4294901760
    %163 = vmatmul.mubr.f32.gmra.mrb[0].mxu0 %v162
    %v164 = vpop.f32.mrb[0].mxu0
    %v165 = vadd.f32 0.0, %v164
    %v166 = vpop.f32.mrb[0].mxu0
    %v167 = vadd.f32 0.0, %v166
    %168 = vmatprep.mubr.f32.mxu0 0.0
    %v169 = vand.u32 %v57, 4294901760
    %v170 = vsub.f32 %v57, %v169
    %v171 = vand.u32 %v170, 4294901760
    %v172 = vsub.f32 %v170, %v171
    %v173 = vand.u32 %v172, 4294901760
    %174 = vmatmul.mubr.f32.gmra.mrb[0].mxu0 %v173
    %v175 = vpop.f32.mrb[0].mxu0
    %v176 = vadd.f32 0.0, %v175
    %v177 = vpop.f32.mrb[0].mxu0
    %v178 = vadd.f32 0.0, %v177
    %179 = vmatprep.mubr.f32.mxu0 0.0
    %v180 = vand.u32 %v60, 4294901760
    %v181 = vsub.f32 %v60, %v180
    %v182 = vand.u32 %v181, 4294901760
    %v183 = vsub.f32 %v181, %v182
    %v184 = vand.u32 %v183, 4294901760
    %185 = vmatmul.mubr.f32.gmra.mrb[0].mxu0 %v184
    %v186 = vpop.f32.mrb[0].mxu0
    %v187 = vadd.f32 0.0, %v186
    %v188 = vpop.f32.mrb[0].mxu0
    %v189 = vadd.f32 0.0, %v188
    %190 = vdwg.mxu0
    %v191 = vand.u32 %v67, 4294901760
    %v192 = vsub.f32 %v67, %v191
    %v193 = vand.u32 %v192, 4294901760
    %v194 = vsub.f32 %v192, %v193
    %v195 = vand.u32 %v194, 4294901760
    %196 = vmatprep.subr.mxu0 %v195
    %v197 = vand.u32 %v64, 4294901760
    %v198 = vsub.f32 %v64, %v197
    %v199 = vand.u32 %v198, 4294901760
    %v200 = vsub.f32 %v198, %v199
    %v201 = vand.u32 %v200, 4294901760
    %202 = vmatpush1.msra.mxu0 %v201
    %203 = vmatprep.subr.mxu0 0.0
    %204 = vmatpush1.msra.mxu0 0.0
    %205 = vmatprep.subr.mxu0 0.0
    %206 = vmatpush1.msra.mxu0 0.0
    %207 = vmatprep.subr.mxu0 0.0
    %208 = vmatpush1.msra.mxu0 0.0
    %209 = vmatprep.subr.mxu0 0.0
    %210 = vmatpush1.msra.mxu0 0.0
    %211 = vmatprep.subr.mxu0 0.0
    %212 = vmatpush1.msra.mxu0 0.0
    %213 = vmatprep.subr.mxu0 0.0
    %214 = vmatpush1.msra.mxu0 0.0
    %215 = vmatprep.subr.mxu0 0.0
    %216 = vmatpush1.msra.mxu0 0.0
    %217 = vmatprep.subr.mxu0 0.0
    %218 = vmatpush1.msra.mxu0 0.0
    %219 = vmatprep.subr.mxu0 0.0
    %220 = vmatpush1.msra.mxu0 0.0
    %221 = vmatprep.subr.mxu0 0.0
    %222 = vmatpush1.msra.mxu0 0.0
    %223 = vmatprep.subr.mxu0 0.0
    %224 = vmatpush1.msra.mxu0 0.0
    %225 = vmatprep.subr.mxu0 0.0
    %226 = vmatpush1.msra.mxu0 0.0
    %227 = vmatprep.subr.mxu0 0.0
    %228 = vmatpush1.msra.mxu0 0.0
    %229 = vmatprep.subr.mxu0 0.0
    %230 = vmatpush1.msra.mxu0 0.0
    %231 = vmatprep.subr.mxu0 0.0
    %232 = vmatpush1.msra.mxu0 0.0
    %233 = vmatprep.subr.mxu0 0.0
    %234 = vmatpush1.msra.mxu0 0.0
    %235 = vmatprep.subr.mxu0 0.0
    %236 = vmatpush1.msra.mxu0 0.0
    %237 = vmatprep.subr.mxu0 0.0
    %238 = vmatpush1.msra.mxu0 0.0
    %239 = vmatprep.subr.mxu0 0.0
    %240 = vmatpush1.msra.mxu0 0.0
    %241 = vmatprep.subr.mxu0 0.0
    %242 = vmatpush1.msra.mxu0 0.0
    %243 = vmatprep.subr.mxu0 0.0
    %244 = vmatpush1.msra.mxu0 0.0
    %245 = vmatprep.subr.mxu0 0.0
    %246 = vmatpush1.msra.mxu0 0.0
    %247 = vmatprep.subr.mxu0 0.0
    %248 = vmatpush1.msra.mxu0 0.0
    %249 = vmatprep.subr.mxu0 0.0
    %250 = vmatpush1.msra.mxu0 0.0
    %251 = vmatprep.subr.mxu0 0.0
    %252 = vmatpush1.msra.mxu0 0.0
    %253 = vmatprep.subr.mxu0 0.0
    %254 = vmatpush1.msra.mxu0 0.0
    %255 = vmatprep.subr.mxu0 0.0
    %256 = vmatpush1.msra.mxu0 0.0
    %257 = vmatprep.subr.mxu0 0.0
    %258 = vmatpush1.msra.mxu0 0.0
    %259 = vmatprep.subr.mxu0 0.0
    %260 = vmatpush1.msra.mxu0 0.0
    %261 = vmatprep.subr.mxu0 0.0
    %262 = vmatpush1.msra.mxu0 0.0
    %263 = vmatprep.subr.mxu0 0.0
    %264 = vmatpush1.msra.mxu0 0.0
    %265 = vmatprep.mubr.f32.mxu0 0.0
    %v266 = vand.u32 %v48, 4294901760
    %267 = vmatmul.mubr.f32.gmra.mrb[0].mxu0 %v266
    %v268 = vpop.f32.mrb[0].mxu0
    %v269 = vadd.f32 %v143, %v268
    %v270 = vpop.f32.mrb[0].mxu0
    %v271 = vadd.f32 %v145, %v270
    %272 = vmatprep.mubr.f32.mxu0 0.0
    %v273 = vand.u32 %v51, 4294901760
    %274 = vmatmul.mubr.f32.gmra.mrb[0].mxu0 %v273
    %v275 = vpop.f32.mrb[0].mxu0
    %v276 = vadd.f32 %v154, %v275
    %v277 = vpop.f32.mrb[0].mxu0
    %v278 = vadd.f32 %v156, %v277
    %279 = vmatprep.mubr.f32.mxu0 0.0
    %v280 = vand.u32 %v54, 4294901760
    %281 = vmatmul.mubr.f32.gmra.mrb[0].mxu0 %v280
    %v282 = vpop.f32.mrb[0].mxu0
    %v283 = vadd.f32 %v165, %v282
    %v284 = vpop.f32.mrb[0].mxu0
    %v285 = vadd.f32 %v167, %v284
    %286 = vmatprep.mubr.f32.mxu0 0.0
    %v287 = vand.u32 %v57, 4294901760
    %288 = vmatmul.mubr.f32.gmra.mrb[0].mxu0 %v287
    %v289 = vpop.f32.mrb[0].mxu0
    %v290 = vadd.f32 %v176, %v289
    %v291 = vpop.f32.mrb[0].mxu0
    %v292 = vadd.f32 %v178, %v291
    %293 = vmatprep.mubr.f32.mxu0 0.0
    %v294 = vand.u32 %v60, 4294901760
    %295 = vmatmul.mubr.f32.gmra.mrb[0].mxu0 %v294
    %v296 = vpop.f32.mrb[0].mxu0
    %v297 = vadd.f32 %v187, %v296
    %v298 = vpop.f32.mrb[0].mxu0
    %v299 = vadd.f32 %v189, %v298
    %300 = vdwg.mxu0
    %v301 = vand.u32 %v67, 4294901760
    %v302 = vsub.f32 %v67, %v301
    %303 = vmatprep.subr.mxu0 %v302
    %v304 = vand.u32 %v64, 4294901760
    %v305 = vsub.f32 %v64, %v304
    %306 = vmatpush1.msra.mxu0 %v305
    %307 = vmatprep.subr.mxu0 0.0
    %308 = vmatpush1.msra.mxu0 0.0
    %309 = vmatprep.subr.mxu0 0.0
    %310 = vmatpush1.msra.mxu0 0.0
    %311 = vmatprep.subr.mxu0 0.0
    %312 = vmatpush1.msra.mxu0 0.0
    %313 = vmatprep.subr.mxu0 0.0
    %314 = vmatpush1.msra.mxu0 0.0
    %315 = vmatprep.subr.mxu0 0.0
    %316 = vmatpush1.msra.mxu0 0.0
    %317 = vmatprep.subr.mxu0 0.0
    %318 = vmatpush1.msra.mxu0 0.0
    %319 = vmatprep.subr.mxu0 0.0
    %320 = vmatpush1.msra.mxu0 0.0
    %321 = vmatprep.subr.mxu0 0.0
    %322 = vmatpush1.msra.mxu0 0.0
    %323 = vmatprep.subr.mxu0 0.0
    %324 = vmatpush1.msra.mxu0 0.0
    %325 = vmatprep.subr.mxu0 0.0
    %326 = vmatpush1.msra.mxu0 0.0
    %327 = vmatprep.subr.mxu0 0.0
    %328 = vmatpush1.msra.mxu0 0.0
    %329 = vmatprep.subr.mxu0 0.0
    %330 = vmatpush1.msra.mxu0 0.0
    %331 = vmatprep.subr.mxu0 0.0
    %332 = vmatpush1.msra.mxu0 0.0
    %333 = vmatprep.subr.mxu0 0.0
    %334 = vmatpush1.msra.mxu0 0.0
    %335 = vmatprep.subr.mxu0 0.0
    %336 = vmatpush1.msra.mxu0 0.0
    %337 = vmatprep.subr.mxu0 0.0
    %338 = vmatpush1.msra.mxu0 0.0
    %339 = vmatprep.subr.mxu0 0.0
    %340 = vmatpush1.msra.mxu0 0.0
    %341 = vmatprep.subr.mxu0 0.0
    %342 = vmatpush1.msra.mxu0 0.0
    %343 = vmatprep.subr.mxu0 0.0
    %344 = vmatpush1.msra.mxu0 0.0
    %345 = vmatprep.subr.mxu0 0.0
    %346 = vmatpush1.msra.mxu0 0.0
    %347 = vmatprep.subr.mxu0 0.0
    %348 = vmatpush1.msra.mxu0 0.0
    %349 = vmatprep.subr.mxu0 0.0
    %350 = vmatpush1.msra.mxu0 0.0
    %351 = vmatprep.subr.mxu0 0.0
    %352 = vmatpush1.msra.mxu0 0.0
    %353 = vmatprep.subr.mxu0 0.0
    %354 = vmatpush1.msra.mxu0 0.0
    %355 = vmatprep.subr.mxu0 0.0
    %356 = vmatpush1.msra.mxu0 0.0
    %357 = vmatprep.subr.mxu0 0.0
    %358 = vmatpush1.msra.mxu0 0.0
    %359 = vmatprep.subr.mxu0 0.0
    %360 = vmatpush1.msra.mxu0 0.0
    %361 = vmatprep.subr.mxu0 0.0
    %362 = vmatpush1.msra.mxu0 0.0
    %363 = vmatprep.subr.mxu0 0.0
    %364 = vmatpush1.msra.mxu0 0.0
    %365 = vmatprep.subr.mxu0 0.0
    %366 = vmatpush1.msra.mxu0 0.0
    %367 = vmatprep.subr.mxu0 0.0
    %368 = vmatpush1.msra.mxu0 0.0
    %369 = vmatprep.mubr.f32.mxu0 0.0
    %v370 = vand.u32 %v48, 4294901760
    %v371 = vsub.f32 %v48, %v370
    %372 = vmatmul.mubr.f32.gmra.mrb[0].mxu0 %v371
    %v373 = vpop.f32.mrb[0].mxu0
    %v374 = vadd.f32 %v269, %v373
    %v375 = vpop.f32.mrb[0].mxu0
    %v376 = vadd.f32 %v271, %v375
    %377 = vmatprep.mubr.f32.mxu0 0.0
    %v378 = vand.u32 %v51, 4294901760
    %v379 = vsub.f32 %v51, %v378
    %380 = vmatmul.mubr.f32.gmra.mrb[0].mxu0 %v379
    %v381 = vpop.f32.mrb[0].mxu0
    %v382 = vadd.f32 %v276, %v381
    %v383 = vpop.f32.mrb[0].mxu0
    %v384 = vadd.f32 %v278, %v383
    %385 = vmatprep.mubr.f32.mxu0 0.0
    %v386 = vand.u32 %v54, 4294901760
    %v387 = vsub.f32 %v54, %v386
    %388 = vmatmul.mubr.f32.gmra.mrb[0].mxu0 %v387
    %v389 = vpop.f32.mrb[0].mxu0
    %v390 = vadd.f32 %v283, %v389
    %v391 = vpop.f32.mrb[0].mxu0
    %v392 = vadd.f32 %v285, %v391
    %393 = vmatprep.mubr.f32.mxu0 0.0
    %v394 = vand.u32 %v57, 4294901760
    %v395 = vsub.f32 %v57, %v394
    %396 = vmatmul.mubr.f32.gmra.mrb[0].mxu0 %v395
    %v397 = vpop.f32.mrb[0].mxu0
    %v398 = vadd.f32 %v290, %v397
    %v399 = vpop.f32.mrb[0].mxu0
    %v400 = vadd.f32 %v292, %v399
    %401 = vmatprep.mubr.f32.mxu0 0.0
    %v402 = vand.u32 %v60, 4294901760
    %v403 = vsub.f32 %v60, %v402
    %404 = vmatmul.mubr.f32.gmra.mrb[0].mxu0 %v403
    %v405 = vpop.f32.mrb[0].mxu0
    %v406 = vadd.f32 %v297, %v405
    %v407 = vpop.f32.mrb[0].mxu0
    %v408 = vadd.f32 %v299, %v407
    %409 = vdwg.mxu0
    %v410 = vand.u32 %v67, 4294901760
    %411 = vmatprep.subr.mxu0 %v410
    %v412 = vand.u32 %v64, 4294901760
    %413 = vmatpush1.msra.mxu0 %v412
    %414 = vmatprep.subr.mxu0 0.0
    %415 = vmatpush1.msra.mxu0 0.0
    %416 = vmatprep.subr.mxu0 0.0
    %417 = vmatpush1.msra.mxu0 0.0
    %418 = vmatprep.subr.mxu0 0.0
    %419 = vmatpush1.msra.mxu0 0.0
    %420 = vmatprep.subr.mxu0 0.0
    %421 = vmatpush1.msra.mxu0 0.0
    %422 = vmatprep.subr.mxu0 0.0
    %423 = vmatpush1.msra.mxu0 0.0
    %424 = vmatprep.subr.mxu0 0.0
    %425 = vmatpush1.msra.mxu0 0.0
    %426 = vmatprep.subr.mxu0 0.0
    %427 = vmatpush1.msra.mxu0 0.0
    %428 = vmatprep.subr.mxu0 0.0
    %429 = vmatpush1.msra.mxu0 0.0
    %430 = vmatprep.subr.mxu0 0.0
    %431 = vmatpush1.msra.mxu0 0.0
    %432 = vmatprep.subr.mxu0 0.0
    %433 = vmatpush1.msra.mxu0 0.0
    %434 = vmatprep.subr.mxu0 0.0
    %435 = vmatpush1.msra.mxu0 0.0
    %436 = vmatprep.subr.mxu0 0.0
    %437 = vmatpush1.msra.mxu0 0.0
    %438 = vmatprep.subr.mxu0 0.0
    %439 = vmatpush1.msra.mxu0 0.0
    %440 = vmatprep.subr.mxu0 0.0
    %441 = vmatpush1.msra.mxu0 0.0
    %442 = vmatprep.subr.mxu0 0.0
    %443 = vmatpush1.msra.mxu0 0.0
    %444 = vmatprep.subr.mxu0 0.0
    %445 = vmatpush1.msra.mxu0 0.0
    %446 = vmatprep.subr.mxu0 0.0
    %447 = vmatpush1.msra.mxu0 0.0
    %448 = vmatprep.subr.mxu0 0.0
    %449 = vmatpush1.msra.mxu0 0.0
    %450 = vmatprep.subr.mxu0 0.0
    %451 = vmatpush1.msra.mxu0 0.0
    %452 = vmatprep.subr.mxu0 0.0
    %453 = vmatpush1.msra.mxu0 0.0
    %454 = vmatprep.subr.mxu0 0.0
    %455 = vmatpush1.msra.mxu0 0.0
    %456 = vmatprep.subr.mxu0 0.0
    %457 = vmatpush1.msra.mxu0 0.0
    %458 = vmatprep.subr.mxu0 0.0
    %459 = vmatpush1.msra.mxu0 0.0
    %460 = vmatprep.subr.mxu0 0.0
    %461 = vmatpush1.msra.mxu0 0.0
    %462 = vmatprep.subr.mxu0 0.0
    %463 = vmatpush1.msra.mxu0 0.0
    %464 = vmatprep.subr.mxu0 0.0
    %465 = vmatpush1.msra.mxu0 0.0
    %466 = vmatprep.subr.mxu0 0.0
    %467 = vmatpush1.msra.mxu0 0.0
    %468 = vmatprep.subr.mxu0 0.0
    %469 = vmatpush1.msra.mxu0 0.0
    %470 = vmatprep.subr.mxu0 0.0
    %471 = vmatpush1.msra.mxu0 0.0
    %472 = vmatprep.subr.mxu0 0.0
    %473 = vmatpush1.msra.mxu0 0.0
    %474 = vmatprep.subr.mxu0 0.0
    %475 = vmatpush1.msra.mxu0 0.0
    %476 = vmatprep.mubr.f32.mxu0 0.0
    %v477 = vand.u32 %v48, 4294901760
    %v478 = vsub.f32 %v48, %v477
    %v479 = vand.u32 %v478, 4294901760
    %480 = vmatmul.mubr.f32.gmra.mrb[0].mxu0 %v479
    %v481 = vpop.f32.mrb[0].mxu0
    %v482 = vadd.f32 %v374, %v481
    %v483 = vpop.f32.mrb[0].mxu0
    %v484 = vadd.f32 %v376, %v483
    %485 = vmatprep.mubr.f32.mxu0 0.0
    %v486 = vand.u32 %v51, 4294901760
    %v487 = vsub.f32 %v51, %v486
    %v488 = vand.u32 %v487, 4294901760
    %489 = vmatmul.mubr.f32.gmra.mrb[0].mxu0 %v488
    %v490 = vpop.f32.mrb[0].mxu0
    %v491 = vadd.f32 %v382, %v490
    %v492 = vpop.f32.mrb[0].mxu0
    %v493 = vadd.f32 %v384, %v492
    %494 = vmatprep.mubr.f32.mxu0 0.0
    %v495 = vand.u32 %v54, 4294901760
    %v496 = vsub.f32 %v54, %v495
    %v497 = vand.u32 %v496, 4294901760
    %498 = vmatmul.mubr.f32.gmra.mrb[0].mxu0 %v497
    %v499 = vpop.f32.mrb[0].mxu0
    %v500 = vadd.f32 %v390, %v499
    %v501 = vpop.f32.mrb[0].mxu0
    %v502 = vadd.f32 %v392, %v501
    %503 = vmatprep.mubr.f32.mxu0 0.0
    %v504 = vand.u32 %v57, 4294901760
    %v505 = vsub.f32 %v57, %v504
    %v506 = vand.u32 %v505, 4294901760
    %507 = vmatmul.mubr.f32.gmra.mrb[0].mxu0 %v506
    %v508 = vpop.f32.mrb[0].mxu0
    %v509 = vadd.f32 %v398, %v508
    %v510 = vpop.f32.mrb[0].mxu0
    %v511 = vadd.f32 %v400, %v510
    %512 = vmatprep.mubr.f32.mxu0 0.0
    %v513 = vand.u32 %v60, 4294901760
    %v514 = vsub.f32 %v60, %v513
    %v515 = vand.u32 %v514, 4294901760
    %516 = vmatmul.mubr.f32.gmra.mrb[0].mxu0 %v515
    %v517 = vpop.f32.mrb[0].mxu0
    %v518 = vadd.f32 %v406, %v517
    %v519 = vpop.f32.mrb[0].mxu0
    %v520 = vadd.f32 %v408, %v519
    %521 = vdwg.mxu0
    %v522 = vand.u32 %v67, 4294901760
    %v523 = vsub.f32 %v67, %v522
    %v524 = vand.u32 %v523, 4294901760
    %525 = vmatprep.subr.mxu0 %v524
    %v526 = vand.u32 %v64, 4294901760
    %v527 = vsub.f32 %v64, %v526
    %v528 = vand.u32 %v527, 4294901760
    %529 = vmatpush1.msra.mxu0 %v528
    %530 = vmatprep.subr.mxu0 0.0
    %531 = vmatpush1.msra.mxu0 0.0
    %532 = vmatprep.subr.mxu0 0.0
    %533 = vmatpush1.msra.mxu0 0.0
    %534 = vmatprep.subr.mxu0 0.0
    %535 = vmatpush1.msra.mxu0 0.0
    %536 = vmatprep.subr.mxu0 0.0
    %537 = vmatpush1.msra.mxu0 0.0
    %538 = vmatprep.subr.mxu0 0.0
    %539 = vmatpush1.msra.mxu0 0.0
    %540 = vmatprep.subr.mxu0 0.0
    %541 = vmatpush1.msra.mxu0 0.0
    %542 = vmatprep.subr.mxu0 0.0
    %543 = vmatpush1.msra.mxu0 0.0
    %544 = vmatprep.subr.mxu0 0.0
    %545 = vmatpush1.msra.mxu0 0.0
    %546 = vmatprep.subr.mxu0 0.0
    %547 = vmatpush1.msra.mxu0 0.0
    %548 = vmatprep.subr.mxu0 0.0
    %549 = vmatpush1.msra.mxu0 0.0
    %550 = vmatprep.subr.mxu0 0.0
    %551 = vmatpush1.msra.mxu0 0.0
    %552 = vmatprep.subr.mxu0 0.0
    %553 = vmatpush1.msra.mxu0 0.0
    %554 = vmatprep.subr.mxu0 0.0
    %555 = vmatpush1.msra.mxu0 0.0
    %556 = vmatprep.subr.mxu0 0.0
    %557 = vmatpush1.msra.mxu0 0.0
    %558 = vmatprep.subr.mxu0 0.0
    %559 = vmatpush1.msra.mxu0 0.0
    %560 = vmatprep.subr.mxu0 0.0
    %561 = vmatpush1.msra.mxu0 0.0
    %562 = vmatprep.subr.mxu0 0.0
    %563 = vmatpush1.msra.mxu0 0.0
    %564 = vmatprep.subr.mxu0 0.0
    %565 = vmatpush1.msra.mxu0 0.0
    %566 = vmatprep.subr.mxu0 0.0
    %567 = vmatpush1.msra.mxu0 0.0
    %568 = vmatprep.subr.mxu0 0.0
    %569 = vmatpush1.msra.mxu0 0.0
    %570 = vmatprep.subr.mxu0 0.0
    %571 = vmatpush1.msra.mxu0 0.0
    %572 = vmatprep.subr.mxu0 0.0
    %573 = vmatpush1.msra.mxu0 0.0
    %574 = vmatprep.subr.mxu0 0.0
    %575 = vmatpush1.msra.mxu0 0.0
    %576 = vmatprep.subr.mxu0 0.0
    %577 = vmatpush1.msra.mxu0 0.0
    %578 = vmatprep.subr.mxu0 0.0
    %579 = vmatpush1.msra.mxu0 0.0
    %580 = vmatprep.subr.mxu0 0.0
    %581 = vmatpush1.msra.mxu0 0.0
    %582 = vmatprep.subr.mxu0 0.0
    %583 = vmatpush1.msra.mxu0 0.0
    %584 = vmatprep.subr.mxu0 0.0
    %585 = vmatpush1.msra.mxu0 0.0
    %586 = vmatprep.subr.mxu0 0.0
    %587 = vmatpush1.msra.mxu0 0.0
    %588 = vmatprep.subr.mxu0 0.0
    %589 = vmatpush1.msra.mxu0 0.0
    %590 = vmatprep.subr.mxu0 0.0
    %591 = vmatpush1.msra.mxu0 0.0
    %592 = vmatprep.mubr.f32.mxu0 0.0
    %v593 = vand.u32 %v48, 4294901760
    %594 = vmatmul.mubr.f32.gmra.mrb[0].mxu0 %v593
    %v595 = vpop.f32.mrb[0].mxu0
    %v596 = vadd.f32 %v482, %v595
    %v597 = vpop.f32.mrb[0].mxu0
    %v598 = vadd.f32 %v484, %v597
    %599 = vmatprep.mubr.f32.mxu0 0.0
    %v600 = vand.u32 %v51, 4294901760
    %601 = vmatmul.mubr.f32.gmra.mrb[0].mxu0 %v600
    %v602 = vpop.f32.mrb[0].mxu0
    %v603 = vadd.f32 %v491, %v602
    %v604 = vpop.f32.mrb[0].mxu0
    %v605 = vadd.f32 %v493, %v604
    %606 = vmatprep.mubr.f32.mxu0 0.0
    %v607 = vand.u32 %v54, 4294901760
    %608 = vmatmul.mubr.f32.gmra.mrb[0].mxu0 %v607
    %v609 = vpop.f32.mrb[0].mxu0
    %v610 = vadd.f32 %v500, %v609
    %v611 = vpop.f32.mrb[0].mxu0
    %v612 = vadd.f32 %v502, %v611
    %613 = vmatprep.mubr.f32.mxu0 0.0
    %v614 = vand.u32 %v57, 4294901760
    %615 = vmatmul.mubr.f32.gmra.mrb[0].mxu0 %v614
    %v616 = vpop.f32.mrb[0].mxu0
    %v617 = vadd.f32 %v509, %v616
    %v618 = vpop.f32.mrb[0].mxu0
    %v619 = vadd.f32 %v511, %v618
    %620 = vmatprep.mubr.f32.mxu0 0.0
    %v621 = vand.u32 %v60, 4294901760
    %622 = vmatmul.mubr.f32.gmra.mrb[0].mxu0 %v621
    %v623 = vpop.f32.mrb[0].mxu0
    %v624 = vadd.f32 %v518, %v623
    %v625 = vpop.f32.mrb[0].mxu0
    %v626 = vadd.f32 %v520, %v625
    %627 = vdwg.mxu0
    %v628 = vand.u32 %v67, 4294901760
    %629 = vmatprep.subr.mxu0 %v628
    %v630 = vand.u32 %v64, 4294901760
    %631 = vmatpush1.msra.mxu0 %v630
    %632 = vmatprep.subr.mxu0 0.0
    %633 = vmatpush1.msra.mxu0 0.0
    %634 = vmatprep.subr.mxu0 0.0
    %635 = vmatpush1.msra.mxu0 0.0
    %636 = vmatprep.subr.mxu0 0.0
    %637 = vmatpush1.msra.mxu0 0.0
    %638 = vmatprep.subr.mxu0 0.0
    %639 = vmatpush1.msra.mxu0 0.0
    %640 = vmatprep.subr.mxu0 0.0
    %641 = vmatpush1.msra.mxu0 0.0
    %642 = vmatprep.subr.mxu0 0.0
    %643 = vmatpush1.msra.mxu0 0.0
    %644 = vmatprep.subr.mxu0 0.0
    %645 = vmatpush1.msra.mxu0 0.0
    %646 = vmatprep.subr.mxu0 0.0
    %647 = vmatpush1.msra.mxu0 0.0
    %648 = vmatprep.subr.mxu0 0.0
    %649 = vmatpush1.msra.mxu0 0.0
    %650 = vmatprep.subr.mxu0 0.0
    %651 = vmatpush1.msra.mxu0 0.0
    %652 = vmatprep.subr.mxu0 0.0
    %653 = vmatpush1.msra.mxu0 0.0
    %654 = vmatprep.subr.mxu0 0.0
    %655 = vmatpush1.msra.mxu0 0.0
    %656 = vmatprep.subr.mxu0 0.0
    %657 = vmatpush1.msra.mxu0 0.0
    %658 = vmatprep.subr.mxu0 0.0
    %659 = vmatpush1.msra.mxu0 0.0
    %660 = vmatprep.subr.mxu0 0.0
    %661 = vmatpush1.msra.mxu0 0.0
    %662 = vmatprep.subr.mxu0 0.0
    %663 = vmatpush1.msra.mxu0 0.0
    %664 = vmatprep.subr.mxu0 0.0
    %665 = vmatpush1.msra.mxu0 0.0
    %666 = vmatprep.subr.mxu0 0.0
    %667 = vmatpush1.msra.mxu0 0.0
    %668 = vmatprep.subr.mxu0 0.0
    %669 = vmatpush1.msra.mxu0 0.0
    %670 = vmatprep.subr.mxu0 0.0
    %671 = vmatpush1.msra.mxu0 0.0
    %672 = vmatprep.subr.mxu0 0.0
    %673 = vmatpush1.msra.mxu0 0.0
    %674 = vmatprep.subr.mxu0 0.0
    %675 = vmatpush1.msra.mxu0 0.0
    %676 = vmatprep.subr.mxu0 0.0
    %677 = vmatpush1.msra.mxu0 0.0
    %678 = vmatprep.subr.mxu0 0.0
    %679 = vmatpush1.msra.mxu0 0.0
    %680 = vmatprep.subr.mxu0 0.0
    %681 = vmatpush1.msra.mxu0 0.0
    %682 = vmatprep.subr.mxu0 0.0
    %683 = vmatpush1.msra.mxu0 0.0
    %684 = vmatprep.subr.mxu0 0.0
    %685 = vmatpush1.msra.mxu0 0.0
    %686 = vmatprep.subr.mxu0 0.0
    %687 = vmatpush1.msra.mxu0 0.0
    %688 = vmatprep.subr.mxu0 0.0
    %689 = vmatpush1.msra.mxu0 0.0
    %690 = vmatprep.subr.mxu0 0.0
    %691 = vmatpush1.msra.mxu0 0.0
    %692 = vmatprep.subr.mxu0 0.0
    %693 = vmatpush1.msra.mxu0 0.0
    %694 = vmatprep.mubr.f32.mxu0 0.0
    %v695 = vand.u32 %v48, 4294901760
    %696 = vmatmul.mubr.f32.gmra.mrb[0].mxu0 %v695
    %v697 = vpop.f32.mrb[0].mxu0
    %v698 = vadd.f32 %v596, %v697
    %v699 = vpop.f32.mrb[0].mxu0
    %v700 = vadd.f32 %v598, %v699
    %701 = vmatprep.mubr.f32.mxu0 0.0
    %v702 = vand.u32 %v51, 4294901760
    %703 = vmatmul.mubr.f32.gmra.mrb[0].mxu0 %v702
    %v704 = vpop.f32.mrb[0].mxu0
    %v705 = vadd.f32 %v603, %v704
    %v706 = vpop.f32.mrb[0].mxu0
    %v707 = vadd.f32 %v605, %v706
    %708 = vmatprep.mubr.f32.mxu0 0.0
    %v709 = vand.u32 %v54, 4294901760
    %710 = vmatmul.mubr.f32.gmra.mrb[0].mxu0 %v709
    %v711 = vpop.f32.mrb[0].mxu0
    %v712 = vadd.f32 %v610, %v711
    %v713 = vpop.f32.mrb[0].mxu0
    %v714 = vadd.f32 %v612, %v713
    %715 = vmatprep.mubr.f32.mxu0 0.0
    %v716 = vand.u32 %v57, 4294901760
    %717 = vmatmul.mubr.f32.gmra.mrb[0].mxu0 %v716
    %v718 = vpop.f32.mrb[0].mxu0
    %v719 = vadd.f32 %v617, %v718
    %v720 = vpop.f32.mrb[0].mxu0
    %v721 = vadd.f32 %v619, %v720
    %722 = vmatprep.mubr.f32.mxu0 0.0
    %v723 = vand.u32 %v60, 4294901760
    %724 = vmatmul.mubr.f32.gmra.mrb[0].mxu0 %v723
    %v725 = vpop.f32.mrb[0].mxu0
    %v726 = vadd.f32 %v624, %v725
    %v727 = vpop.f32.mrb[0].mxu0
    %v728 = vadd.f32 %v626, %v727
    %729 = vdwg.mxu0
    %v730 = vld [vmem:[%s2] sm:$0xff]
    %v731 = vld [vmem:[%s2 + $0x8] sm:$0xff]
    %v732 = vld [vmem:[%s2 + $0x10] sm:$0xff]
    %v733 = vld [vmem:[%s2 + $0x18] sm:$0xff]
    %v734 = vld [vmem:[%s2 + $0x20] sm:$0x7]
    %v736 = vsel %vm46, %v730, 0
    %v739 = vsel %vm46, %v731, 0
    %v742 = vsel %vm46, %v732, 0
    %v745 = vsel %vm46, %v733, 0
    %v748 = vsel %vm46, %v734, 0
    %v750 = vand.u32 %v67, 4294901760
    %751 = vmatprep.subr.mxu0 %v750
    %v752 = vand.u32 %v64, 4294901760
    %753 = vmatpush1.msra.mxu0 %v752
    %754 = vmatprep.subr.mxu0 0.0
    %755 = vmatpush1.msra.mxu0 0.0
    %756 = vmatprep.subr.mxu0 0.0
    %757 = vmatpush1.msra.mxu0 0.0
    %758 = vmatprep.subr.mxu0 0.0
    %759 = vmatpush1.msra.mxu0 0.0
    %760 = vmatprep.subr.mxu0 0.0
    %761 = vmatpush1.msra.mxu0 0.0
    %762 = vmatprep.subr.mxu0 0.0
    %763 = vmatpush1.msra.mxu0 0.0
    %764 = vmatprep.subr.mxu0 0.0
    %765 = vmatpush1.msra.mxu0 0.0
    %766 = vmatprep.subr.mxu0 0.0
    %767 = vmatpush1.msra.mxu0 0.0
    %768 = vmatprep.subr.mxu0 0.0
    %769 = vmatpush1.msra.mxu0 0.0
    %770 = vmatprep.subr.mxu0 0.0
    %771 = vmatpush1.msra.mxu0 0.0
    %772 = vmatprep.subr.mxu0 0.0
    %773 = vmatpush1.msra.mxu0 0.0
    %774 = vmatprep.subr.mxu0 0.0
    %775 = vmatpush1.msra.mxu0 0.0
    %776 = vmatprep.subr.mxu0 0.0
    %777 = vmatpush1.msra.mxu0 0.0
    %778 = vmatprep.subr.mxu0 0.0
    %779 = vmatpush1.msra.mxu0 0.0
    %780 = vmatprep.subr.mxu0 0.0
    %781 = vmatpush1.msra.mxu0 0.0
    %782 = vmatprep.subr.mxu0 0.0
    %783 = vmatpush1.msra.mxu0 0.0
    %784 = vmatprep.subr.mxu0 0.0
    %785 = vmatpush1.msra.mxu0 0.0
    %786 = vmatprep.subr.mxu0 0.0
    %787 = vmatpush1.msra.mxu0 0.0
    %788 = vmatprep.subr.mxu0 0.0
    %789 = vmatpush1.msra.mxu0 0.0
    %790 = vmatprep.subr.mxu0 0.0
    %791 = vmatpush1.msra.mxu0 0.0
    %792 = vmatprep.subr.mxu0 0.0
    %793 = vmatpush1.msra.mxu0 0.0
    %794 = vmatprep.subr.mxu0 0.0
    %795 = vmatpush1.msra.mxu0 0.0
    %796 = vmatprep.subr.mxu0 0.0
    %797 = vmatpush1.msra.mxu0 0.0
    %798 = vmatprep.subr.mxu0 0.0
    %799 = vmatpush1.msra.mxu0 0.0
    %800 = vmatprep.subr.mxu0 0.0
    %801 = vmatpush1.msra.mxu0 0.0
    %802 = vmatprep.subr.mxu0 0.0
    %803 = vmatpush1.msra.mxu0 0.0
    %804 = vmatprep.subr.mxu0 0.0
    %805 = vmatpush1.msra.mxu0 0.0
    %806 = vmatprep.subr.mxu0 0.0
    %807 = vmatpush1.msra.mxu0 0.0
    %808 = vmatprep.subr.mxu0 0.0
    %809 = vmatpush1.msra.mxu0 0.0
    %810 = vmatprep.subr.mxu0 0.0
    %811 = vmatpush1.msra.mxu0 0.0
    %812 = vmatprep.subr.mxu0 0.0
    %813 = vmatpush1.msra.mxu0 0.0
    %814 = vmatprep.subr.mxu0 0.0
    %815 = vmatpush1.msra.mxu0 0.0
    %816 = vmatprep.mubr.f32.mxu0 0.0
    %v817 = vand.u32 %v736, 4294901760
    %v818 = vsub.f32 %v736, %v817
    %v819 = vand.u32 %v818, 4294901760
    %v820 = vsub.f32 %v818, %v819
    %v821 = vand.u32 %v820, 4294901760
    %822 = vmatmul.mubr.f32.gmra.mrb[0].mxu0 %v821
    %v823 = vpop.f32.mrb[0].mxu0
    %v824 = vadd.f32 0.0, %v823
    %v825 = vpop.f32.mrb[0].mxu0
    %v826 = vadd.f32 0.0, %v825
    %827 = vmatprep.mubr.f32.mxu0 0.0
    %v828 = vand.u32 %v739, 4294901760
    %v829 = vsub.f32 %v739, %v828
    %v830 = vand.u32 %v829, 4294901760
    %v831 = vsub.f32 %v829, %v830
    %v832 = vand.u32 %v831, 4294901760
    %833 = vmatmul.mubr.f32.gmra.mrb[0].mxu0 %v832
    %v834 = vpop.f32.mrb[0].mxu0
    %v835 = vadd.f32 0.0, %v834
    %v836 = vpop.f32.mrb[0].mxu0
    %v837 = vadd.f32 0.0, %v836
    %838 = vmatprep.mubr.f32.mxu0 0.0
    %v839 = vand.u32 %v742, 4294901760
    %v840 = vsub.f32 %v742, %v839
    %v841 = vand.u32 %v840, 4294901760
    %v842 = vsub.f32 %v840, %v841
    %v843 = vand.u32 %v842, 4294901760
    %844 = vmatmul.mubr.f32.gmra.mrb[0].mxu0 %v843
    %v845 = vpop.f32.mrb[0].mxu0
    %v846 = vadd.f32 0.0, %v845
    %v847 = vpop.f32.mrb[0].mxu0
    %v848 = vadd.f32 0.0, %v847
    %849 = vmatprep.mubr.f32.mxu0 0.0
    %v850 = vand.u32 %v745, 4294901760
    %v851 = vsub.f32 %v745, %v850
    %v852 = vand.u32 %v851, 4294901760
    %v853 = vsub.f32 %v851, %v852
    %v854 = vand.u32 %v853, 4294901760
    %855 = vmatmul.mubr.f32.gmra.mrb[0].mxu0 %v854
    %v856 = vpop.f32.mrb[0].mxu0
    %v857 = vadd.f32 0.0, %v856
    %v858 = vpop.f32.mrb[0].mxu0
    %v859 = vadd.f32 0.0, %v858
    %860 = vmatprep.mubr.f32.mxu0 0.0
    %v861 = vand.u32 %v748, 4294901760
    %v862 = vsub.f32 %v748, %v861
    %v863 = vand.u32 %v862, 4294901760
    %v864 = vsub.f32 %v862, %v863
    %v865 = vand.u32 %v864, 4294901760
    %866 = vmatmul.mubr.f32.gmra.mrb[0].mxu0 %v865
    %v867 = vpop.f32.mrb[0].mxu0
    %v868 = vadd.f32 0.0, %v867
    %v869 = vpop.f32.mrb[0].mxu0
    %v870 = vadd.f32 0.0, %v869
    %871 = vdwg.mxu0
    %v872 = vand.u32 %v67, 4294901760
    %v873 = vsub.f32 %v67, %v872
    %v874 = vand.u32 %v873, 4294901760
    %v875 = vsub.f32 %v873, %v874
    %v876 = vand.u32 %v875, 4294901760
    %877 = vmatprep.subr.mxu0 %v876
    %v878 = vand.u32 %v64, 4294901760
    %v879 = vsub.f32 %v64, %v878
    %v880 = vand.u32 %v879, 4294901760
    %v881 = vsub.f32 %v879, %v880
    %v882 = vand.u32 %v881, 4294901760
    %883 = vmatpush1.msra.mxu0 %v882
    %884 = vmatprep.subr.mxu0 0.0
    %885 = vmatpush1.msra.mxu0 0.0
    %886 = vmatprep.subr.mxu0 0.0
    %887 = vmatpush1.msra.mxu0 0.0
    %888 = vmatprep.subr.mxu0 0.0
    %889 = vmatpush1.msra.mxu0 0.0
    %890 = vmatprep.subr.mxu0 0.0
    %891 = vmatpush1.msra.mxu0 0.0
    %892 = vmatprep.subr.mxu0 0.0
    %893 = vmatpush1.msra.mxu0 0.0
    %894 = vmatprep.subr.mxu0 0.0
    %895 = vmatpush1.msra.mxu0 0.0
    %896 = vmatprep.subr.mxu0 0.0
    %897 = vmatpush1.msra.mxu0 0.0
    %898 = vmatprep.subr.mxu0 0.0
    %899 = vmatpush1.msra.mxu0 0.0
    %900 = vmatprep.subr.mxu0 0.0
    %901 = vmatpush1.msra.mxu0 0.0
    %902 = vmatprep.subr.mxu0 0.0
    %903 = vmatpush1.msra.mxu0 0.0
    %904 = vmatprep.subr.mxu0 0.0
    %905 = vmatpush1.msra.mxu0 0.0
    %906 = vmatprep.subr.mxu0 0.0
    %907 = vmatpush1.msra.mxu0 0.0
    %908 = vmatprep.subr.mxu0 0.0
    %909 = vmatpush1.msra.mxu0 0.0
    %910 = vmatprep.subr.mxu0 0.0
    %911 = vmatpush1.msra.mxu0 0.0
    %912 = vmatprep.subr.mxu0 0.0
    %913 = vmatpush1.msra.mxu0 0.0
    %914 = vmatprep.subr.mxu0 0.0
    %915 = vmatpush1.msra.mxu0 0.0
    %916 = vmatprep.subr.mxu0 0.0
    %917 = vmatpush1.msra.mxu0 0.0
    %918 = vmatprep.subr.mxu0 0.0
    %919 = vmatpush1.msra.mxu0 0.0
    %920 = vmatprep.subr.mxu0 0.0
    %921 = vmatpush1.msra.mxu0 0.0
    %922 = vmatprep.subr.mxu0 0.0
    %923 = vmatpush1.msra.mxu0 0.0
    %924 = vmatprep.subr.mxu0 0.0
    %925 = vmatpush1.msra.mxu0 0.0
    %926 = vmatprep.subr.mxu0 0.0
    %927 = vmatpush1.msra.mxu0 0.0
    %928 = vmatprep.subr.mxu0 0.0
    %929 = vmatpush1.msra.mxu0 0.0
    %930 = vmatprep.subr.mxu0 0.0
    %931 = vmatpush1.msra.mxu0 0.0
    %932 = vmatprep.subr.mxu0 0.0
    %933 = vmatpush1.msra.mxu0 0.0
    %934 = vmatprep.subr.mxu0 0.0
    %935 = vmatpush1.msra.mxu0 0.0
    %936 = vmatprep.subr.mxu0 0.0
    %937 = vmatpush1.msra.mxu0 0.0
    %938 = vmatprep.subr.mxu0 0.0
    %939 = vmatpush1.msra.mxu0 0.0
    %940 = vmatprep.subr.mxu0 0.0
    %941 = vmatpush1.msra.mxu0 0.0
    %942 = vmatprep.subr.mxu0 0.0
    %943 = vmatpush1.msra.mxu0 0.0
    %944 = vmatprep.subr.mxu0 0.0
    %945 = vmatpush1.msra.mxu0 0.0
    %946 = vmatprep.mubr.f32.mxu0 0.0
    %v947 = vand.u32 %v736, 4294901760
    %948 = vmatmul.mubr.f32.gmra.mrb[0].mxu0 %v947
    %v949 = vpop.f32.mrb[0].mxu0
    %v950 = vadd.f32 %v824, %v949
    %v951 = vpop.f32.mrb[0].mxu0
    %v952 = vadd.f32 %v826, %v951
    %953 = vmatprep.mubr.f32.mxu0 0.0
    %v954 = vand.u32 %v739, 4294901760
    %955 = vmatmul.mubr.f32.gmra.mrb[0].mxu0 %v954
    %v956 = vpop.f32.mrb[0].mxu0
    %v957 = vadd.f32 %v835, %v956
    %v958 = vpop.f32.mrb[0].mxu0
    %v959 = vadd.f32 %v837, %v958
    %960 = vmatprep.mubr.f32.mxu0 0.0
    %v961 = vand.u32 %v742, 4294901760
    %962 = vmatmul.mubr.f32.gmra.mrb[0].mxu0 %v961
    %v963 = vpop.f32.mrb[0].mxu0
    %v964 = vadd.f32 %v846, %v963
    %v965 = vpop.f32.mrb[0].mxu0
    %v966 = vadd.f32 %v848, %v965
    %967 = vmatprep.mubr.f32.mxu0 0.0
    %v968 = vand.u32 %v745, 4294901760
    %969 = vmatmul.mubr.f32.gmra.mrb[0].mxu0 %v968
    %v970 = vpop.f32.mrb[0].mxu0
    %v971 = vadd.f32 %v857, %v970
    %v972 = vpop.f32.mrb[0].mxu0
    %v973 = vadd.f32 %v859, %v972
    %974 = vmatprep.mubr.f32.mxu0 0.0
    %v975 = vand.u32 %v748, 4294901760
    %976 = vmatmul.mubr.f32.gmra.mrb[0].mxu0 %v975
    %v977 = vpop.f32.mrb[0].mxu0
    %v978 = vadd.f32 %v868, %v977
    %v979 = vpop.f32.mrb[0].mxu0
    %v980 = vadd.f32 %v870, %v979
    %981 = vdwg.mxu0
    %v982 = vand.u32 %v67, 4294901760
    %v983 = vsub.f32 %v67, %v982
    %984 = vmatprep.subr.mxu0 %v983
    %v985 = vand.u32 %v64, 4294901760
    %v986 = vsub.f32 %v64, %v985
    %987 = vmatpush1.msra.mxu0 %v986
    %988 = vmatprep.subr.mxu0 0.0
    %989 = vmatpush1.msra.mxu0 0.0
    %990 = vmatprep.subr.mxu0 0.0
    %991 = vmatpush1.msra.mxu0 0.0
    %992 = vmatprep.subr.mxu0 0.0
    %993 = vmatpush1.msra.mxu0 0.0
    %994 = vmatprep.subr.mxu0 0.0
    %995 = vmatpush1.msra.mxu0 0.0
    %996 = vmatprep.subr.mxu0 0.0
    %997 = vmatpush1.msra.mxu0 0.0
    %998 = vmatprep.subr.mxu0 0.0
    %999 = vmatpush1.msra.mxu0 0.0
    %1000 = vmatprep.subr.mxu0 0.0
    %1001 = vmatpush1.msra.mxu0 0.0
    %1002 = vmatprep.subr.mxu0 0.0
    %1003 = vmatpush1.msra.mxu0 0.0
    %1004 = vmatprep.subr.mxu0 0.0
    %1005 = vmatpush1.msra.mxu0 0.0
    %1006 = vmatprep.subr.mxu0 0.0
    %1007 = vmatpush1.msra.mxu0 0.0
    %1008 = vmatprep.subr.mxu0 0.0
    %1009 = vmatpush1.msra.mxu0 0.0
    %1010 = vmatprep.subr.mxu0 0.0
    %1011 = vmatpush1.msra.mxu0 0.0
    %1012 = vmatprep.subr.mxu0 0.0
    %1013 = vmatpush1.msra.mxu0 0.0
    %1014 = vmatprep.subr.mxu0 0.0
    %1015 = vmatpush1.msra.mxu0 0.0
    %1016 = vmatprep.subr.mxu0 0.0
    %1017 = vmatpush1.msra.mxu0 0.0
    %1018 = vmatprep.subr.mxu0 0.0
    %1019 = vmatpush1.msra.mxu0 0.0
    %1020 = vmatprep.subr.mxu0 0.0
    %1021 = vmatpush1.msra.mxu0 0.0
    %1022 = vmatprep.subr.mxu0 0.0
    %1023 = vmatpush1.msra.mxu0 0.0
    %1024 = vmatprep.subr.mxu0 0.0
    %1025 = vmatpush1.msra.mxu0 0.0
    %1026 = vmatprep.subr.mxu0 0.0
    %1027 = vmatpush1.msra.mxu0 0.0
    %1028 = vmatprep.subr.mxu0 0.0
    %1029 = vmatpush1.msra.mxu0 0.0
    %1030 = vmatprep.subr.mxu0 0.0
    %1031 = vmatpush1.msra.mxu0 0.0
    %1032 = vmatprep.subr.mxu0 0.0
    %1033 = vmatpush1.msra.mxu0 0.0
    %1034 = vmatprep.subr.mxu0 0.0
    %1035 = vmatpush1.msra.mxu0 0.0
    %1036 = vmatprep.subr.mxu0 0.0
    %1037 = vmatpush1.msra.mxu0 0.0
    %1038 = vmatprep.subr.mxu0 0.0
    %1039 = vmatpush1.msra.mxu0 0.0
    %1040 = vmatprep.subr.mxu0 0.0
    %1041 = vmatpush1.msra.mxu0 0.0
    %1042 = vmatprep.subr.mxu0 0.0
    %1043 = vmatpush1.msra.mxu0 0.0
    %1044 = vmatprep.subr.mxu0 0.0
    %1045 = vmatpush1.msra.mxu0 0.0
    %1046 = vmatprep.subr.mxu0 0.0
    %1047 = vmatpush1.msra.mxu0 0.0
    %1048 = vmatprep.subr.mxu0 0.0
    %1049 = vmatpush1.msra.mxu0 0.0
    %1050 = vmatprep.mubr.f32.mxu0 0.0
    %v1051 = vand.u32 %v736, 4294901760
    %v1052 = vsub.f32 %v736, %v1051
    %1053 = vmatmul.mubr.f32.gmra.mrb[0].mxu0 %v1052
    %v1054 = vpop.f32.mrb[0].mxu0
    %v1055 = vadd.f32 %v950, %v1054
    %v1056 = vpop.f32.mrb[0].mxu0
    %v1057 = vadd.f32 %v952, %v1056
    %1058 = vmatprep.mubr.f32.mxu0 0.0
    %v1059 = vand.u32 %v739, 4294901760
    %v1060 = vsub.f32 %v739, %v1059
    %1061 = vmatmul.mubr.f32.gmra.mrb[0].mxu0 %v1060
    %v1062 = vpop.f32.mrb[0].mxu0
    %v1063 = vadd.f32 %v957, %v1062
    %v1064 = vpop.f32.mrb[0].mxu0
    %v1065 = vadd.f32 %v959, %v1064
    %1066 = vmatprep.mubr.f32.mxu0 0.0
    %v1067 = vand.u32 %v742, 4294901760
    %v1068 = vsub.f32 %v742, %v1067
    %1069 = vmatmul.mubr.f32.gmra.mrb[0].mxu0 %v1068
    %v1070 = vpop.f32.mrb[0].mxu0
    %v1071 = vadd.f32 %v964, %v1070
    %v1072 = vpop.f32.mrb[0].mxu0
    %v1073 = vadd.f32 %v966, %v1072
    %1074 = vmatprep.mubr.f32.mxu0 0.0
    %v1075 = vand.u32 %v745, 4294901760
    %v1076 = vsub.f32 %v745, %v1075
    %1077 = vmatmul.mubr.f32.gmra.mrb[0].mxu0 %v1076
    %v1078 = vpop.f32.mrb[0].mxu0
    %v1079 = vadd.f32 %v971, %v1078
    %v1080 = vpop.f32.mrb[0].mxu0
    %v1081 = vadd.f32 %v973, %v1080
    %1082 = vmatprep.mubr.f32.mxu0 0.0
    %v1083 = vand.u32 %v748, 4294901760
    %v1084 = vsub.f32 %v748, %v1083
    %1085 = vmatmul.mubr.f32.gmra.mrb[0].mxu0 %v1084
    %v1086 = vpop.f32.mrb[0].mxu0
    %v1087 = vadd.f32 %v978, %v1086
    %v1088 = vpop.f32.mrb[0].mxu0
    %v1089 = vadd.f32 %v980, %v1088
    %1090 = vdwg.mxu0
    %v1091 = vand.u32 %v67, 4294901760
    %1092 = vmatprep.subr.mxu0 %v1091
    %v1093 = vand.u32 %v64, 4294901760
    %1094 = vmatpush1.msra.mxu0 %v1093
    %1095 = vmatprep.subr.mxu0 0.0
    %1096 = vmatpush1.msra.mxu0 0.0
    %1097 = vmatprep.subr.mxu0 0.0
    %1098 = vmatpush1.msra.mxu0 0.0
    %1099 = vmatprep.subr.mxu0 0.0
    %1100 = vmatpush1.msra.mxu0 0.0
    %1101 = vmatprep.subr.mxu0 0.0
    %1102 = vmatpush1.msra.mxu0 0.0
    %1103 = vmatprep.subr.mxu0 0.0
    %1104 = vmatpush1.msra.mxu0 0.0
    %1105 = vmatprep.subr.mxu0 0.0
    %1106 = vmatpush1.msra.mxu0 0.0
    %1107 = vmatprep.subr.mxu0 0.0
    %1108 = vmatpush1.msra.mxu0 0.0
    %1109 = vmatprep.subr.mxu0 0.0
    %1110 = vmatpush1.msra.mxu0 0.0
    %1111 = vmatprep.subr.mxu0 0.0
    %1112 = vmatpush1.msra.mxu0 0.0
    %1113 = vmatprep.subr.mxu0 0.0
    %1114 = vmatpush1.msra.mxu0 0.0
    %1115 = vmatprep.subr.mxu0 0.0
    %1116 = vmatpush1.msra.mxu0 0.0
    %1117 = vmatprep.subr.mxu0 0.0
    %1118 = vmatpush1.msra.mxu0 0.0
    %1119 = vmatprep.subr.mxu0 0.0
    %1120 = vmatpush1.msra.mxu0 0.0
    %1121 = vmatprep.subr.mxu0 0.0
    %1122 = vmatpush1.msra.mxu0 0.0
    %1123 = vmatprep.subr.mxu0 0.0
    %1124 = vmatpush1.msra.mxu0 0.0
    %1125 = vmatprep.subr.mxu0 0.0
    %1126 = vmatpush1.msra.mxu0 0.0
    %1127 = vmatprep.subr.mxu0 0.0
    %1128 = vmatpush1.msra.mxu0 0.0
    %1129 = vmatprep.subr.mxu0 0.0
    %1130 = vmatpush1.msra.mxu0 0.0
    %1131 = vmatprep.subr.mxu0 0.0
    %1132 = vmatpush1.msra.mxu0 0.0
    %1133 = vmatprep.subr.mxu0 0.0
    %1134 = vmatpush1.msra.mxu0 0.0
    %1135 = vmatprep.subr.mxu0 0.0
    %1136 = vmatpush1.msra.mxu0 0.0
    %1137 = vmatprep.subr.mxu0 0.0
    %1138 = vmatpush1.msra.mxu0 0.0
    %1139 = vmatprep.subr.mxu0 0.0
    %1140 = vmatpush1.msra.mxu0 0.0
    %1141 = vmatprep.subr.mxu0 0.0
    %1142 = vmatpush1.msra.mxu0 0.0
    %1143 = vmatprep.subr.mxu0 0.0
    %1144 = vmatpush1.msra.mxu0 0.0
    %1145 = vmatprep.subr.mxu0 0.0
    %1146 = vmatpush1.msra.mxu0 0.0
    %1147 = vmatprep.subr.mxu0 0.0
    %1148 = vmatpush1.msra.mxu0 0.0
    %1149 = vmatprep.subr.mxu0 0.0
    %1150 = vmatpush1.msra.mxu0 0.0
    %1151 = vmatprep.subr.mxu0 0.0
    %1152 = vmatpush1.msra.mxu0 0.0
    %1153 = vmatprep.subr.mxu0 0.0
    %1154 = vmatpush1.msra.mxu0 0.0
    %1155 = vmatprep.subr.mxu0 0.0
    %1156 = vmatpush1.msra.mxu0 0.0
    %1157 = vmatprep.mubr.f32.mxu0 0.0
    %v1158 = vand.u32 %v736, 4294901760
    %v1159 = vsub.f32 %v736, %v1158
    %v1160 = vand.u32 %v1159, 4294901760
    %1161 = vmatmul.mubr.f32.gmra.mrb[0].mxu0 %v1160
    %v1162 = vpop.f32.mrb[0].mxu0
    %v1163 = vadd.f32 %v1055, %v1162
    %v1164 = vpop.f32.mrb[0].mxu0
    %v1165 = vadd.f32 %v1057, %v1164
    %1166 = vmatprep.mubr.f32.mxu0 0.0
    %v1167 = vand.u32 %v739, 4294901760
    %v1168 = vsub.f32 %v739, %v1167
    %v1169 = vand.u32 %v1168, 4294901760
    %1170 = vmatmul.mubr.f32.gmra.mrb[0].mxu0 %v1169
    %v1171 = vpop.f32.mrb[0].mxu0
    %v1172 = vadd.f32 %v1063, %v1171
    %v1173 = vpop.f32.mrb[0].mxu0
    %v1174 = vadd.f32 %v1065, %v1173
    %1175 = vmatprep.mubr.f32.mxu0 0.0
    %v1176 = vand.u32 %v742, 4294901760
    %v1177 = vsub.f32 %v742, %v1176
    %v1178 = vand.u32 %v1177, 4294901760
    %1179 = vmatmul.mubr.f32.gmra.mrb[0].mxu0 %v1178
    %v1180 = vpop.f32.mrb[0].mxu0
    %v1181 = vadd.f32 %v1071, %v1180
    %v1182 = vpop.f32.mrb[0].mxu0
    %v1183 = vadd.f32 %v1073, %v1182
    %1184 = vmatprep.mubr.f32.mxu0 0.0
    %v1185 = vand.u32 %v745, 4294901760
    %v1186 = vsub.f32 %v745, %v1185
    %v1187 = vand.u32 %v1186, 4294901760
    %1188 = vmatmul.mubr.f32.gmra.mrb[0].mxu0 %v1187
    %v1189 = vpop.f32.mrb[0].mxu0
    %v1190 = vadd.f32 %v1079, %v1189
    %v1191 = vpop.f32.mrb[0].mxu0
    %v1192 = vadd.f32 %v1081, %v1191
    %1193 = vmatprep.mubr.f32.mxu0 0.0
    %v1194 = vand.u32 %v748, 4294901760
    %v1195 = vsub.f32 %v748, %v1194
    %v1196 = vand.u32 %v1195, 4294901760
    %1197 = vmatmul.mubr.f32.gmra.mrb[0].mxu0 %v1196
    %v1198 = vpop.f32.mrb[0].mxu0
    %v1199 = vadd.f32 %v1087, %v1198
    %v1200 = vpop.f32.mrb[0].mxu0
    %v1201 = vadd.f32 %v1089, %v1200
    %1202 = vdwg.mxu0
    %v1203 = vand.u32 %v67, 4294901760
    %v1204 = vsub.f32 %v67, %v1203
    %v1205 = vand.u32 %v1204, 4294901760
    %1206 = vmatprep.subr.mxu0 %v1205
    %v1207 = vand.u32 %v64, 4294901760
    %v1208 = vsub.f32 %v64, %v1207
    %v1209 = vand.u32 %v1208, 4294901760
    %1210 = vmatpush1.msra.mxu0 %v1209
    %1211 = vmatprep.subr.mxu0 0.0
    %1212 = vmatpush1.msra.mxu0 0.0
    %1213 = vmatprep.subr.mxu0 0.0
    %1214 = vmatpush1.msra.mxu0 0.0
    %1215 = vmatprep.subr.mxu0 0.0
    %1216 = vmatpush1.msra.mxu0 0.0
    %1217 = vmatprep.subr.mxu0 0.0
    %1218 = vmatpush1.msra.mxu0 0.0
    %1219 = vmatprep.subr.mxu0 0.0
    %1220 = vmatpush1.msra.mxu0 0.0
    %1221 = vmatprep.subr.mxu0 0.0
    %1222 = vmatpush1.msra.mxu0 0.0
    %1223 = vmatprep.subr.mxu0 0.0
    %1224 = vmatpush1.msra.mxu0 0.0
    %1225 = vmatprep.subr.mxu0 0.0
    %1226 = vmatpush1.msra.mxu0 0.0
    %1227 = vmatprep.subr.mxu0 0.0
    %1228 = vmatpush1.msra.mxu0 0.0
    %1229 = vmatprep.subr.mxu0 0.0
    %1230 = vmatpush1.msra.mxu0 0.0
    %1231 = vmatprep.subr.mxu0 0.0
    %1232 = vmatpush1.msra.mxu0 0.0
    %1233 = vmatprep.subr.mxu0 0.0
    %1234 = vmatpush1.msra.mxu0 0.0
    %1235 = vmatprep.subr.mxu0 0.0
    %1236 = vmatpush1.msra.mxu0 0.0
    %1237 = vmatprep.subr.mxu0 0.0
    %1238 = vmatpush1.msra.mxu0 0.0
    %1239 = vmatprep.subr.mxu0 0.0
    %1240 = vmatpush1.msra.mxu0 0.0
    %1241 = vmatprep.subr.mxu0 0.0
    %1242 = vmatpush1.msra.mxu0 0.0
    %1243 = vmatprep.subr.mxu0 0.0
    %1244 = vmatpush1.msra.mxu0 0.0
    %1245 = vmatprep.subr.mxu0 0.0
    %1246 = vmatpush1.msra.mxu0 0.0
    %1247 = vmatprep.subr.mxu0 0.0
    %1248 = vmatpush1.msra.mxu0 0.0
    %1249 = vmatprep.subr.mxu0 0.0
    %1250 = vmatpush1.msra.mxu0 0.0
    %1251 = vmatprep.subr.mxu0 0.0
    %1252 = vmatpush1.msra.mxu0 0.0
    %1253 = vmatprep.subr.mxu0 0.0
    %1254 = vmatpush1.msra.mxu0 0.0
    %1255 = vmatprep.subr.mxu0 0.0
    %1256 = vmatpush1.msra.mxu0 0.0
    %1257 = vmatprep.subr.mxu0 0.0
    %1258 = vmatpush1.msra.mxu0 0.0
    %1259 = vmatprep.subr.mxu0 0.0
    %1260 = vmatpush1.msra.mxu0 0.0
    %1261 = vmatprep.subr.mxu0 0.0
    %1262 = vmatpush1.msra.mxu0 0.0
    %1263 = vmatprep.subr.mxu0 0.0
    %1264 = vmatpush1.msra.mxu0 0.0
    %1265 = vmatprep.subr.mxu0 0.0
    %1266 = vmatpush1.msra.mxu0 0.0
    %1267 = vmatprep.subr.mxu0 0.0
    %1268 = vmatpush1.msra.mxu0 0.0
    %1269 = vmatprep.subr.mxu0 0.0
    %1270 = vmatpush1.msra.mxu0 0.0
    %1271 = vmatprep.subr.mxu0 0.0
    %1272 = vmatpush1.msra.mxu0 0.0
    %1273 = vmatprep.mubr.f32.mxu0 0.0
    %v1274 = vand.u32 %v736, 4294901760
    %1275 = vmatmul.mubr.f32.gmra.mrb[0].mxu0 %v1274
    %v1276 = vpop.f32.mrb[0].mxu0
    %v1277 = vadd.f32 %v1163, %v1276
    %v1278 = vpop.f32.mrb[0].mxu0
    %v1279 = vadd.f32 %v1165, %v1278
    %1280 = vmatprep.mubr.f32.mxu0 0.0
    %v1281 = vand.u32 %v739, 4294901760
    %1282 = vmatmul.mubr.f32.gmra.mrb[0].mxu0 %v1281
    %v1283 = vpop.f32.mrb[0].mxu0
    %v1284 = vadd.f32 %v1172, %v1283
    %v1285 = vpop.f32.mrb[0].mxu0
    %v1286 = vadd.f32 %v1174, %v1285
    %1287 = vmatprep.mubr.f32.mxu0 0.0
    %v1288 = vand.u32 %v742, 4294901760
    %1289 = vmatmul.mubr.f32.gmra.mrb[0].mxu0 %v1288
    %v1290 = vpop.f32.mrb[0].mxu0
    %v1291 = vadd.f32 %v1181, %v1290
    %v1292 = vpop.f32.mrb[0].mxu0
    %v1293 = vadd.f32 %v1183, %v1292
    %1294 = vmatprep.mubr.f32.mxu0 0.0
    %v1295 = vand.u32 %v745, 4294901760
    %1296 = vmatmul.mubr.f32.gmra.mrb[0].mxu0 %v1295
    %v1297 = vpop.f32.mrb[0].mxu0
    %v1298 = vadd.f32 %v1190, %v1297
    %v1299 = vpop.f32.mrb[0].mxu0
    %v1300 = vadd.f32 %v1192, %v1299
    %1301 = vmatprep.mubr.f32.mxu0 0.0
    %v1302 = vand.u32 %v748, 4294901760
    %1303 = vmatmul.mubr.f32.gmra.mrb[0].mxu0 %v1302
    %v1304 = vpop.f32.mrb[0].mxu0
    %v1305 = vadd.f32 %v1199, %v1304
    %v1306 = vpop.f32.mrb[0].mxu0
    %v1307 = vadd.f32 %v1201, %v1306
    %1308 = vdwg.mxu0
    %v1309 = vand.u32 %v67, 4294901760
    %1310 = vmatprep.subr.mxu0 %v1309
    %v1311 = vand.u32 %v64, 4294901760
    %1312 = vmatpush1.msra.mxu0 %v1311
    %1313 = vmatprep.subr.mxu0 0.0
    %1314 = vmatpush1.msra.mxu0 0.0
    %1315 = vmatprep.subr.mxu0 0.0
    %1316 = vmatpush1.msra.mxu0 0.0
    %1317 = vmatprep.subr.mxu0 0.0
    %1318 = vmatpush1.msra.mxu0 0.0
    %1319 = vmatprep.subr.mxu0 0.0
    %1320 = vmatpush1.msra.mxu0 0.0
    %1321 = vmatprep.subr.mxu0 0.0
    %1322 = vmatpush1.msra.mxu0 0.0
    %1323 = vmatprep.subr.mxu0 0.0
    %1324 = vmatpush1.msra.mxu0 0.0
    %1325 = vmatprep.subr.mxu0 0.0
    %1326 = vmatpush1.msra.mxu0 0.0
    %1327 = vmatprep.subr.mxu0 0.0
    %1328 = vmatpush1.msra.mxu0 0.0
    %1329 = vmatprep.subr.mxu0 0.0
    %1330 = vmatpush1.msra.mxu0 0.0
    %1331 = vmatprep.subr.mxu0 0.0
    %1332 = vmatpush1.msra.mxu0 0.0
    %1333 = vmatprep.subr.mxu0 0.0
    %1334 = vmatpush1.msra.mxu0 0.0
    %1335 = vmatprep.subr.mxu0 0.0
    %1336 = vmatpush1.msra.mxu0 0.0
    %1337 = vmatprep.subr.mxu0 0.0
    %1338 = vmatpush1.msra.mxu0 0.0
    %1339 = vmatprep.subr.mxu0 0.0
    %1340 = vmatpush1.msra.mxu0 0.0
    %1341 = vmatprep.subr.mxu0 0.0
    %1342 = vmatpush1.msra.mxu0 0.0
    %1343 = vmatprep.subr.mxu0 0.0
    %1344 = vmatpush1.msra.mxu0 0.0
    %1345 = vmatprep.subr.mxu0 0.0
    %1346 = vmatpush1.msra.mxu0 0.0
    %1347 = vmatprep.subr.mxu0 0.0
    %1348 = vmatpush1.msra.mxu0 0.0
    %1349 = vmatprep.subr.mxu0 0.0
    %1350 = vmatpush1.msra.mxu0 0.0
    %1351 = vmatprep.subr.mxu0 0.0
    %1352 = vmatpush1.msra.mxu0 0.0
    %1353 = vmatprep.subr.mxu0 0.0
    %1354 = vmatpush1.msra.mxu0 0.0
    %1355 = vmatprep.subr.mxu0 0.0
    %1356 = vmatpush1.msra.mxu0 0.0
    %1357 = vmatprep.subr.mxu0 0.0
    %1358 = vmatpush1.msra.mxu0 0.0
    %1359 = vmatprep.subr.mxu0 0.0
    %1360 = vmatpush1.msra.mxu0 0.0
    %1361 = vmatprep.subr.mxu0 0.0
    %1362 = vmatpush1.msra.mxu0 0.0
    %1363 = vmatprep.subr.mxu0 0.0
    %1364 = vmatpush1.msra.mxu0 0.0
    %1365 = vmatprep.subr.mxu0 0.0
    %1366 = vmatpush1.msra.mxu0 0.0
    %1367 = vmatprep.subr.mxu0 0.0
    %1368 = vmatpush1.msra.mxu0 0.0
    %1369 = vmatprep.subr.mxu0 0.0
    %1370 = vmatpush1.msra.mxu0 0.0
    %1371 = vmatprep.subr.mxu0 0.0
    %1372 = vmatpush1.msra.mxu0 0.0
    %1373 = vmatprep.subr.mxu0 0.0
    %1374 = vmatpush1.msra.mxu0 0.0
    %1375 = vmatprep.mubr.f32.mxu0 0.0
    %v1376 = vand.u32 %v736, 4294901760
    %1377 = vmatmul.mubr.f32.gmra.mrb[0].mxu0 %v1376
    %v1378 = vpop.f32.mrb[0].mxu0
    %v1379 = vadd.f32 %v1277, %v1378
    %v1380 = vpop.f32.mrb[0].mxu0
    %v1381 = vadd.f32 %v1279, %v1380
    %1382 = vmatprep.mubr.f32.mxu0 0.0
    %v1383 = vand.u32 %v739, 4294901760
    %1384 = vmatmul.mubr.f32.gmra.mrb[0].mxu0 %v1383
    %v1385 = vpop.f32.mrb[0].mxu0
    %v1386 = vadd.f32 %v1284, %v1385
    %v1387 = vpop.f32.mrb[0].mxu0
    %v1388 = vadd.f32 %v1286, %v1387
    %1389 = vmatprep.mubr.f32.mxu0 0.0
    %v1390 = vand.u32 %v742, 4294901760
    %1391 = vmatmul.mubr.f32.gmra.mrb[0].mxu0 %v1390
    %v1392 = vpop.f32.mrb[0].mxu0
    %v1393 = vadd.f32 %v1291, %v1392
    %v1394 = vpop.f32.mrb[0].mxu0
    %v1395 = vadd.f32 %v1293, %v1394
    %1396 = vmatprep.mubr.f32.mxu0 0.0
    %v1397 = vand.u32 %v745, 4294901760
    %1398 = vmatmul.mubr.f32.gmra.mrb[0].mxu0 %v1397
    %v1399 = vpop.f32.mrb[0].mxu0
    %v1400 = vadd.f32 %v1298, %v1399
    %v1401 = vpop.f32.mrb[0].mxu0
    %v1402 = vadd.f32 %v1300, %v1401
    %1403 = vmatprep.mubr.f32.mxu0 0.0
    %v1404 = vand.u32 %v748, 4294901760
    %1405 = vmatmul.mubr.f32.gmra.mrb[0].mxu0 %v1404
    %v1406 = vpop.f32.mrb[0].mxu0
    %v1407 = vadd.f32 %v1305, %v1406
    %v1408 = vpop.f32.mrb[0].mxu0
    %v1409 = vadd.f32 %v1307, %v1408
    %1410 = vdwg.mxu0
    %v1411 = vld [vmem:[%s3] sm:$0xff]
    %v1412 = vld [vmem:[%s3 + $0x8] sm:$0xff]
    %v1413 = vld [vmem:[%s3 + $0x10] sm:$0xff]
    %v1414 = vld [vmem:[%s3 + $0x18] sm:$0xff]
    %v1415 = vld [vmem:[%s3 + $0x20] sm:$0x7]
    %v1417 = vsel %vm46, %v1411, 0
    %v1420 = vsel %vm46, %v1412, 0
    %v1423 = vsel %vm46, %v1413, 0
    %v1426 = vsel %vm46, %v1414, 0
    %v1429 = vsel %vm46, %v1415, 0
    %v1431 = vand.u32 %v67, 4294901760
    %1432 = vmatprep.subr.mxu0 %v1431
    %v1433 = vand.u32 %v64, 4294901760
    %1434 = vmatpush1.msra.mxu0 %v1433
    %1435 = vmatprep.subr.mxu0 0.0
    %1436 = vmatpush1.msra.mxu0 0.0
    %1437 = vmatprep.subr.mxu0 0.0
    %1438 = vmatpush1.msra.mxu0 0.0
    %1439 = vmatprep.subr.mxu0 0.0
    %1440 = vmatpush1.msra.mxu0 0.0
    %1441 = vmatprep.subr.mxu0 0.0
    %1442 = vmatpush1.msra.mxu0 0.0
    %1443 = vmatprep.subr.mxu0 0.0
    %1444 = vmatpush1.msra.mxu0 0.0
    %1445 = vmatprep.subr.mxu0 0.0
    %1446 = vmatpush1.msra.mxu0 0.0
    %1447 = vmatprep.subr.mxu0 0.0
    %1448 = vmatpush1.msra.mxu0 0.0
    %1449 = vmatprep.subr.mxu0 0.0
    %1450 = vmatpush1.msra.mxu0 0.0
    %1451 = vmatprep.subr.mxu0 0.0
    %1452 = vmatpush1.msra.mxu0 0.0
    %1453 = vmatprep.subr.mxu0 0.0
    %1454 = vmatpush1.msra.mxu0 0.0
    %1455 = vmatprep.subr.mxu0 0.0
    %1456 = vmatpush1.msra.mxu0 0.0
    %1457 = vmatprep.subr.mxu0 0.0
    %1458 = vmatpush1.msra.mxu0 0.0
    %1459 = vmatprep.subr.mxu0 0.0
    %1460 = vmatpush1.msra.mxu0 0.0
    %1461 = vmatprep.subr.mxu0 0.0
    %1462 = vmatpush1.msra.mxu0 0.0
    %1463 = vmatprep.subr.mxu0 0.0
    %1464 = vmatpush1.msra.mxu0 0.0
    %1465 = vmatprep.subr.mxu0 0.0
    %1466 = vmatpush1.msra.mxu0 0.0
    %1467 = vmatprep.subr.mxu0 0.0
    %1468 = vmatpush1.msra.mxu0 0.0
    %1469 = vmatprep.subr.mxu0 0.0
    %1470 = vmatpush1.msra.mxu0 0.0
    %1471 = vmatprep.subr.mxu0 0.0
    %1472 = vmatpush1.msra.mxu0 0.0
    %1473 = vmatprep.subr.mxu0 0.0
    %1474 = vmatpush1.msra.mxu0 0.0
    %1475 = vmatprep.subr.mxu0 0.0
    %1476 = vmatpush1.msra.mxu0 0.0
    %1477 = vmatprep.subr.mxu0 0.0
    %1478 = vmatpush1.msra.mxu0 0.0
    %1479 = vmatprep.subr.mxu0 0.0
    %1480 = vmatpush1.msra.mxu0 0.0
    %1481 = vmatprep.subr.mxu0 0.0
    %1482 = vmatpush1.msra.mxu0 0.0
    %1483 = vmatprep.subr.mxu0 0.0
    %1484 = vmatpush1.msra.mxu0 0.0
    %1485 = vmatprep.subr.mxu0 0.0
    %1486 = vmatpush1.msra.mxu0 0.0
    %1487 = vmatprep.subr.mxu0 0.0
    %1488 = vmatpush1.msra.mxu0 0.0
    %1489 = vmatprep.subr.mxu0 0.0
    %1490 = vmatpush1.msra.mxu0 0.0
    %1491 = vmatprep.subr.mxu0 0.0
    %1492 = vmatpush1.msra.mxu0 0.0
    %1493 = vmatprep.subr.mxu0 0.0
    %1494 = vmatpush1.msra.mxu0 0.0
    %1495 = vmatprep.subr.mxu0 0.0
    %1496 = vmatpush1.msra.mxu0 0.0
    %1497 = vmatprep.mubr.f32.mxu0 0.0
    %v1498 = vand.u32 %v1417, 4294901760
    %v1499 = vsub.f32 %v1417, %v1498
    %v1500 = vand.u32 %v1499, 4294901760
    %v1501 = vsub.f32 %v1499, %v1500
    %v1502 = vand.u32 %v1501, 4294901760
    %1503 = vmatmul.mubr.f32.gmra.mrb[0].mxu0 %v1502
    %v1504 = vpop.f32.mrb[0].mxu0
    %v1505 = vadd.f32 0.0, %v1504
    %v1506 = vpop.f32.mrb[0].mxu0
    %v1507 = vadd.f32 0.0, %v1506
    %1508 = vmatprep.mubr.f32.mxu0 0.0
    %v1509 = vand.u32 %v1420, 4294901760
    %v1510 = vsub.f32 %v1420, %v1509
    %v1511 = vand.u32 %v1510, 4294901760
    %v1512 = vsub.f32 %v1510, %v1511
    %v1513 = vand.u32 %v1512, 4294901760
    %1514 = vmatmul.mubr.f32.gmra.mrb[0].mxu0 %v1513
    %v1515 = vpop.f32.mrb[0].mxu0
    %v1516 = vadd.f32 0.0, %v1515
    %v1517 = vpop.f32.mrb[0].mxu0
    %v1518 = vadd.f32 0.0, %v1517
    %1519 = vmatprep.mubr.f32.mxu0 0.0
    %v1520 = vand.u32 %v1423, 4294901760
    %v1521 = vsub.f32 %v1423, %v1520
    %v1522 = vand.u32 %v1521, 4294901760
    %v1523 = vsub.f32 %v1521, %v1522
    %v1524 = vand.u32 %v1523, 4294901760
    %1525 = vmatmul.mubr.f32.gmra.mrb[0].mxu0 %v1524
    %v1526 = vpop.f32.mrb[0].mxu0
    %v1527 = vadd.f32 0.0, %v1526
    %v1528 = vpop.f32.mrb[0].mxu0
    %v1529 = vadd.f32 0.0, %v1528
    %1530 = vmatprep.mubr.f32.mxu0 0.0
    %v1531 = vand.u32 %v1426, 4294901760
    %v1532 = vsub.f32 %v1426, %v1531
    %v1533 = vand.u32 %v1532, 4294901760
    %v1534 = vsub.f32 %v1532, %v1533
    %v1535 = vand.u32 %v1534, 4294901760
    %1536 = vmatmul.mubr.f32.gmra.mrb[0].mxu0 %v1535
    %v1537 = vpop.f32.mrb[0].mxu0
    %v1538 = vadd.f32 0.0, %v1537
    %v1539 = vpop.f32.mrb[0].mxu0
    %v1540 = vadd.f32 0.0, %v1539
    %1541 = vmatprep.mubr.f32.mxu0 0.0
    %v1542 = vand.u32 %v1429, 4294901760
    %v1543 = vsub.f32 %v1429, %v1542
    %v1544 = vand.u32 %v1543, 4294901760
    %v1545 = vsub.f32 %v1543, %v1544
    %v1546 = vand.u32 %v1545, 4294901760
    %1547 = vmatmul.mubr.f32.gmra.mrb[0].mxu0 %v1546
    %v1548 = vpop.f32.mrb[0].mxu0
    %v1549 = vadd.f32 0.0, %v1548
    %v1550 = vpop.f32.mrb[0].mxu0
    %v1551 = vadd.f32 0.0, %v1550
    %1552 = vdwg.mxu0
    %v1553 = vand.u32 %v67, 4294901760
    %v1554 = vsub.f32 %v67, %v1553
    %v1555 = vand.u32 %v1554, 4294901760
    %v1556 = vsub.f32 %v1554, %v1555
    %v1557 = vand.u32 %v1556, 4294901760
    %1558 = vmatprep.subr.mxu0 %v1557
    %v1559 = vand.u32 %v64, 4294901760
    %v1560 = vsub.f32 %v64, %v1559
    %v1561 = vand.u32 %v1560, 4294901760
    %v1562 = vsub.f32 %v1560, %v1561
    %v1563 = vand.u32 %v1562, 4294901760
    %1564 = vmatpush1.msra.mxu0 %v1563
    %1565 = vmatprep.subr.mxu0 0.0
    %1566 = vmatpush1.msra.mxu0 0.0
    %1567 = vmatprep.subr.mxu0 0.0
    %1568 = vmatpush1.msra.mxu0 0.0
    %1569 = vmatprep.subr.mxu0 0.0
    %1570 = vmatpush1.msra.mxu0 0.0
    %1571 = vmatprep.subr.mxu0 0.0
    %1572 = vmatpush1.msra.mxu0 0.0
    %1573 = vmatprep.subr.mxu0 0.0
    %1574 = vmatpush1.msra.mxu0 0.0
    %1575 = vmatprep.subr.mxu0 0.0
    %1576 = vmatpush1.msra.mxu0 0.0
    %1577 = vmatprep.subr.mxu0 0.0
    %1578 = vmatpush1.msra.mxu0 0.0
    %1579 = vmatprep.subr.mxu0 0.0
    %1580 = vmatpush1.msra.mxu0 0.0
    %1581 = vmatprep.subr.mxu0 0.0
    %1582 = vmatpush1.msra.mxu0 0.0
    %1583 = vmatprep.subr.mxu0 0.0
    %1584 = vmatpush1.msra.mxu0 0.0
    %1585 = vmatprep.subr.mxu0 0.0
    %1586 = vmatpush1.msra.mxu0 0.0
    %1587 = vmatprep.subr.mxu0 0.0
    %1588 = vmatpush1.msra.mxu0 0.0
    %1589 = vmatprep.subr.mxu0 0.0
    %1590 = vmatpush1.msra.mxu0 0.0
    %1591 = vmatprep.subr.mxu0 0.0
    %1592 = vmatpush1.msra.mxu0 0.0
    %1593 = vmatprep.subr.mxu0 0.0
    %1594 = vmatpush1.msra.mxu0 0.0
    %1595 = vmatprep.subr.mxu0 0.0
    %1596 = vmatpush1.msra.mxu0 0.0
    %1597 = vmatprep.subr.mxu0 0.0
    %1598 = vmatpush1.msra.mxu0 0.0
    %1599 = vmatprep.subr.mxu0 0.0
    %1600 = vmatpush1.msra.mxu0 0.0
    %1601 = vmatprep.subr.mxu0 0.0
    %1602 = vmatpush1.msra.mxu0 0.0
    %1603 = vmatprep.subr.mxu0 0.0
    %1604 = vmatpush1.msra.mxu0 0.0
    %1605 = vmatprep.subr.mxu0 0.0
    %1606 = vmatpush1.msra.mxu0 0.0
    %1607 = vmatprep.subr.mxu0 0.0
    %1608 = vmatpush1.msra.mxu0 0.0
    %1609 = vmatprep.subr.mxu0 0.0
    %1610 = vmatpush1.msra.mxu0 0.0
    %1611 = vmatprep.subr.mxu0 0.0
    %1612 = vmatpush1.msra.mxu0 0.0
    %1613 = vmatprep.subr.mxu0 0.0
    %1614 = vmatpush1.msra.mxu0 0.0
    %1615 = vmatprep.subr.mxu0 0.0
    %1616 = vmatpush1.msra.mxu0 0.0
    %1617 = vmatprep.subr.mxu0 0.0
    %1618 = vmatpush1.msra.mxu0 0.0
    %1619 = vmatprep.subr.mxu0 0.0
    %1620 = vmatpush1.msra.mxu0 0.0
    %1621 = vmatprep.subr.mxu0 0.0
    %1622 = vmatpush1.msra.mxu0 0.0
    %1623 = vmatprep.subr.mxu0 0.0
    %1624 = vmatpush1.msra.mxu0 0.0
    %1625 = vmatprep.subr.mxu0 0.0
    %1626 = vmatpush1.msra.mxu0 0.0
    %1627 = vmatprep.mubr.f32.mxu0 0.0
    %v1628 = vand.u32 %v1417, 4294901760
    %1629 = vmatmul.mubr.f32.gmra.mrb[0].mxu0 %v1628
    %v1630 = vpop.f32.mrb[0].mxu0
    %v1631 = vadd.f32 %v1505, %v1630
    %v1632 = vpop.f32.mrb[0].mxu0
    %v1633 = vadd.f32 %v1507, %v1632
    %1634 = vmatprep.mubr.f32.mxu0 0.0
    %v1635 = vand.u32 %v1420, 4294901760
    %1636 = vmatmul.mubr.f32.gmra.mrb[0].mxu0 %v1635
    %v1637 = vpop.f32.mrb[0].mxu0
    %v1638 = vadd.f32 %v1516, %v1637
    %v1639 = vpop.f32.mrb[0].mxu0
    %v1640 = vadd.f32 %v1518, %v1639
    %1641 = vmatprep.mubr.f32.mxu0 0.0
    %v1642 = vand.u32 %v1423, 4294901760
    %1643 = vmatmul.mubr.f32.gmra.mrb[0].mxu0 %v1642
    %v1644 = vpop.f32.mrb[0].mxu0
    %v1645 = vadd.f32 %v1527, %v1644
    %v1646 = vpop.f32.mrb[0].mxu0
    %v1647 = vadd.f32 %v1529, %v1646
    %1648 = vmatprep.mubr.f32.mxu0 0.0
    %v1649 = vand.u32 %v1426, 4294901760
    %1650 = vmatmul.mubr.f32.gmra.mrb[0].mxu0 %v1649
    %v1651 = vpop.f32.mrb[0].mxu0
    %v1652 = vadd.f32 %v1538, %v1651
    %v1653 = vpop.f32.mrb[0].mxu0
    %v1654 = vadd.f32 %v1540, %v1653
    %1655 = vmatprep.mubr.f32.mxu0 0.0
    %v1656 = vand.u32 %v1429, 4294901760
    %1657 = vmatmul.mubr.f32.gmra.mrb[0].mxu0 %v1656
    %v1658 = vpop.f32.mrb[0].mxu0
    %v1659 = vadd.f32 %v1549, %v1658
    %v1660 = vpop.f32.mrb[0].mxu0
    %v1661 = vadd.f32 %v1551, %v1660
    %1662 = vdwg.mxu0
    %v1663 = vand.u32 %v67, 4294901760
    %v1664 = vsub.f32 %v67, %v1663
    %1665 = vmatprep.subr.mxu0 %v1664
    %v1666 = vand.u32 %v64, 4294901760
    %v1667 = vsub.f32 %v64, %v1666
    %1668 = vmatpush1.msra.mxu0 %v1667
    %1669 = vmatprep.subr.mxu0 0.0
    %1670 = vmatpush1.msra.mxu0 0.0
    %1671 = vmatprep.subr.mxu0 0.0
    %1672 = vmatpush1.msra.mxu0 0.0
    %1673 = vmatprep.subr.mxu0 0.0
    %1674 = vmatpush1.msra.mxu0 0.0
    %1675 = vmatprep.subr.mxu0 0.0
    %1676 = vmatpush1.msra.mxu0 0.0
    %1677 = vmatprep.subr.mxu0 0.0
    %1678 = vmatpush1.msra.mxu0 0.0
    %1679 = vmatprep.subr.mxu0 0.0
    %1680 = vmatpush1.msra.mxu0 0.0
    %1681 = vmatprep.subr.mxu0 0.0
    %1682 = vmatpush1.msra.mxu0 0.0
    %1683 = vmatprep.subr.mxu0 0.0
    %1684 = vmatpush1.msra.mxu0 0.0
    %1685 = vmatprep.subr.mxu0 0.0
    %1686 = vmatpush1.msra.mxu0 0.0
    %1687 = vmatprep.subr.mxu0 0.0
    %1688 = vmatpush1.msra.mxu0 0.0
    %1689 = vmatprep.subr.mxu0 0.0
    %1690 = vmatpush1.msra.mxu0 0.0
    %1691 = vmatprep.subr.mxu0 0.0
    %1692 = vmatpush1.msra.mxu0 0.0
    %1693 = vmatprep.subr.mxu0 0.0
    %1694 = vmatpush1.msra.mxu0 0.0
    %1695 = vmatprep.subr.mxu0 0.0
    %1696 = vmatpush1.msra.mxu0 0.0
    %1697 = vmatprep.subr.mxu0 0.0
    %1698 = vmatpush1.msra.mxu0 0.0
    %1699 = vmatprep.subr.mxu0 0.0
    %1700 = vmatpush1.msra.mxu0 0.0
    %1701 = vmatprep.subr.mxu0 0.0
    %1702 = vmatpush1.msra.mxu0 0.0
    %1703 = vmatprep.subr.mxu0 0.0
    %1704 = vmatpush1.msra.mxu0 0.0
    %1705 = vmatprep.subr.mxu0 0.0
    %1706 = vmatpush1.msra.mxu0 0.0
    %1707 = vmatprep.subr.mxu0 0.0
    %1708 = vmatpush1.msra.mxu0 0.0
    %1709 = vmatprep.subr.mxu0 0.0
    %1710 = vmatpush1.msra.mxu0 0.0
    %1711 = vmatprep.subr.mxu0 0.0
    %1712 = vmatpush1.msra.mxu0 0.0
    %1713 = vmatprep.subr.mxu0 0.0
    %1714 = vmatpush1.msra.mxu0 0.0
    %1715 = vmatprep.subr.mxu0 0.0
    %1716 = vmatpush1.msra.mxu0 0.0
    %1717 = vmatprep.subr.mxu0 0.0
    %1718 = vmatpush1.msra.mxu0 0.0
    %1719 = vmatprep.subr.mxu0 0.0
    %1720 = vmatpush1.msra.mxu0 0.0
    %1721 = vmatprep.subr.mxu0 0.0
    %1722 = vmatpush1.msra.mxu0 0.0
    %1723 = vmatprep.subr.mxu0 0.0
    %1724 = vmatpush1.msra.mxu0 0.0
    %1725 = vmatprep.subr.mxu0 0.0
    %1726 = vmatpush1.msra.mxu0 0.0
    %1727 = vmatprep.subr.mxu0 0.0
    %1728 = vmatpush1.msra.mxu0 0.0
    %1729 = vmatprep.subr.mxu0 0.0
    %1730 = vmatpush1.msra.mxu0 0.0
    %1731 = vmatprep.mubr.f32.mxu0 0.0
    %v1732 = vand.u32 %v1417, 4294901760
    %v1733 = vsub.f32 %v1417, %v1732
    %1734 = vmatmul.mubr.f32.gmra.mrb[0].mxu0 %v1733
    %v1735 = vpop.f32.mrb[0].mxu0
    %v1736 = vadd.f32 %v1631, %v1735
    %v1737 = vpop.f32.mrb[0].mxu0
    %v1738 = vadd.f32 %v1633, %v1737
    %1739 = vmatprep.mubr.f32.mxu0 0.0
    %v1740 = vand.u32 %v1420, 4294901760
    %v1741 = vsub.f32 %v1420, %v1740
    %1742 = vmatmul.mubr.f32.gmra.mrb[0].mxu0 %v1741
    %v1743 = vpop.f32.mrb[0].mxu0
    %v1744 = vadd.f32 %v1638, %v1743
    %v1745 = vpop.f32.mrb[0].mxu0
    %v1746 = vadd.f32 %v1640, %v1745
    %1747 = vmatprep.mubr.f32.mxu0 0.0
    %v1748 = vand.u32 %v1423, 4294901760
    %v1749 = vsub.f32 %v1423, %v1748
    %1750 = vmatmul.mubr.f32.gmra.mrb[0].mxu0 %v1749
    %v1751 = vpop.f32.mrb[0].mxu0
    %v1752 = vadd.f32 %v1645, %v1751
    %v1753 = vpop.f32.mrb[0].mxu0
    %v1754 = vadd.f32 %v1647, %v1753
    %1755 = vmatprep.mubr.f32.mxu0 0.0
    %v1756 = vand.u32 %v1426, 4294901760
    %v1757 = vsub.f32 %v1426, %v1756
    %1758 = vmatmul.mubr.f32.gmra.mrb[0].mxu0 %v1757
    %v1759 = vpop.f32.mrb[0].mxu0
    %v1760 = vadd.f32 %v1652, %v1759
    %v1761 = vpop.f32.mrb[0].mxu0
    %v1762 = vadd.f32 %v1654, %v1761
    %1763 = vmatprep.mubr.f32.mxu0 0.0
    %v1764 = vand.u32 %v1429, 4294901760
    %v1765 = vsub.f32 %v1429, %v1764
    %1766 = vmatmul.mubr.f32.gmra.mrb[0].mxu0 %v1765
    %v1767 = vpop.f32.mrb[0].mxu0
    %v1768 = vadd.f32 %v1659, %v1767
    %v1769 = vpop.f32.mrb[0].mxu0
    %v1770 = vadd.f32 %v1661, %v1769
    %1771 = vdwg.mxu0
    %v1772 = vand.u32 %v67, 4294901760
    %1773 = vmatprep.subr.mxu0 %v1772
    %v1774 = vand.u32 %v64, 4294901760
    %1775 = vmatpush1.msra.mxu0 %v1774
    %1776 = vmatprep.subr.mxu0 0.0
    %1777 = vmatpush1.msra.mxu0 0.0
    %1778 = vmatprep.subr.mxu0 0.0
    %1779 = vmatpush1.msra.mxu0 0.0
    %1780 = vmatprep.subr.mxu0 0.0
    %1781 = vmatpush1.msra.mxu0 0.0
    %1782 = vmatprep.subr.mxu0 0.0
    %1783 = vmatpush1.msra.mxu0 0.0
    %1784 = vmatprep.subr.mxu0 0.0
    %1785 = vmatpush1.msra.mxu0 0.0
    %1786 = vmatprep.subr.mxu0 0.0
    %1787 = vmatpush1.msra.mxu0 0.0
    %1788 = vmatprep.subr.mxu0 0.0
    %1789 = vmatpush1.msra.mxu0 0.0
    %1790 = vmatprep.subr.mxu0 0.0
    %1791 = vmatpush1.msra.mxu0 0.0
    %1792 = vmatprep.subr.mxu0 0.0
    %1793 = vmatpush1.msra.mxu0 0.0
    %1794 = vmatprep.subr.mxu0 0.0
    %1795 = vmatpush1.msra.mxu0 0.0
    %1796 = vmatprep.subr.mxu0 0.0
    %1797 = vmatpush1.msra.mxu0 0.0
    %1798 = vmatprep.subr.mxu0 0.0
    %1799 = vmatpush1.msra.mxu0 0.0
    %1800 = vmatprep.subr.mxu0 0.0
    %1801 = vmatpush1.msra.mxu0 0.0
    %1802 = vmatprep.subr.mxu0 0.0
    %1803 = vmatpush1.msra.mxu0 0.0
    %1804 = vmatprep.subr.mxu0 0.0
    %1805 = vmatpush1.msra.mxu0 0.0
    %1806 = vmatprep.subr.mxu0 0.0
    %1807 = vmatpush1.msra.mxu0 0.0
    %1808 = vmatprep.subr.mxu0 0.0
    %1809 = vmatpush1.msra.mxu0 0.0
    %1810 = vmatprep.subr.mxu0 0.0
    %1811 = vmatpush1.msra.mxu0 0.0
    %1812 = vmatprep.subr.mxu0 0.0
    %1813 = vmatpush1.msra.mxu0 0.0
    %1814 = vmatprep.subr.mxu0 0.0
    %1815 = vmatpush1.msra.mxu0 0.0
    %1816 = vmatprep.subr.mxu0 0.0
    %1817 = vmatpush1.msra.mxu0 0.0
    %1818 = vmatprep.subr.mxu0 0.0
    %1819 = vmatpush1.msra.mxu0 0.0
    %1820 = vmatprep.subr.mxu0 0.0
    %1821 = vmatpush1.msra.mxu0 0.0
    %1822 = vmatprep.subr.mxu0 0.0
    %1823 = vmatpush1.msra.mxu0 0.0
    %1824 = vmatprep.subr.mxu0 0.0
    %1825 = vmatpush1.msra.mxu0 0.0
    %1826 = vmatprep.subr.mxu0 0.0
    %1827 = vmatpush1.msra.mxu0 0.0
    %1828 = vmatprep.subr.mxu0 0.0
    %1829 = vmatpush1.msra.mxu0 0.0
    %1830 = vmatprep.subr.mxu0 0.0
    %1831 = vmatpush1.msra.mxu0 0.0
    %1832 = vmatprep.subr.mxu0 0.0
    %1833 = vmatpush1.msra.mxu0 0.0
    %1834 = vmatprep.subr.mxu0 0.0
    %1835 = vmatpush1.msra.mxu0 0.0
    %1836 = vmatprep.subr.mxu0 0.0
    %1837 = vmatpush1.msra.mxu0 0.0
    %1838 = vmatprep.mubr.f32.mxu0 0.0
    %v1839 = vand.u32 %v1417, 4294901760
    %v1840 = vsub.f32 %v1417, %v1839
    %v1841 = vand.u32 %v1840, 4294901760
    %1842 = vmatmul.mubr.f32.gmra.mrb[0].mxu0 %v1841
    %v1843 = vpop.f32.mrb[0].mxu0
    %v1844 = vadd.f32 %v1736, %v1843
    %v1845 = vpop.f32.mrb[0].mxu0
    %v1846 = vadd.f32 %v1738, %v1845
    %1847 = vmatprep.mubr.f32.mxu0 0.0
    %v1848 = vand.u32 %v1420, 4294901760
    %v1849 = vsub.f32 %v1420, %v1848
    %v1850 = vand.u32 %v1849, 4294901760
    %1851 = vmatmul.mubr.f32.gmra.mrb[0].mxu0 %v1850
    %v1852 = vpop.f32.mrb[0].mxu0
    %v1853 = vadd.f32 %v1744, %v1852
    %v1854 = vpop.f32.mrb[0].mxu0
    %v1855 = vadd.f32 %v1746, %v1854
    %1856 = vmatprep.mubr.f32.mxu0 0.0
    %v1857 = vand.u32 %v1423, 4294901760
    %v1858 = vsub.f32 %v1423, %v1857
    %v1859 = vand.u32 %v1858, 4294901760
    %1860 = vmatmul.mubr.f32.gmra.mrb[0].mxu0 %v1859
    %v1861 = vpop.f32.mrb[0].mxu0
    %v1862 = vadd.f32 %v1752, %v1861
    %v1863 = vpop.f32.mrb[0].mxu0
    %v1864 = vadd.f32 %v1754, %v1863
    %1865 = vmatprep.mubr.f32.mxu0 0.0
    %v1866 = vand.u32 %v1426, 4294901760
    %v1867 = vsub.f32 %v1426, %v1866
    %v1868 = vand.u32 %v1867, 4294901760
    %1869 = vmatmul.mubr.f32.gmra.mrb[0].mxu0 %v1868
    %v1870 = vpop.f32.mrb[0].mxu0
    %v1871 = vadd.f32 %v1760, %v1870
    %v1872 = vpop.f32.mrb[0].mxu0
    %v1873 = vadd.f32 %v1762, %v1872
    %1874 = vmatprep.mubr.f32.mxu0 0.0
    %v1875 = vand.u32 %v1429, 4294901760
    %v1876 = vsub.f32 %v1429, %v1875
    %v1877 = vand.u32 %v1876, 4294901760
    %1878 = vmatmul.mubr.f32.gmra.mrb[0].mxu0 %v1877
    %v1879 = vpop.f32.mrb[0].mxu0
    %v1880 = vadd.f32 %v1768, %v1879
    %v1881 = vpop.f32.mrb[0].mxu0
    %v1882 = vadd.f32 %v1770, %v1881
    %1883 = vdwg.mxu0
    %v1884 = vand.u32 %v67, 4294901760
    %v1885 = vsub.f32 %v67, %v1884
    %v1886 = vand.u32 %v1885, 4294901760
    %1887 = vmatprep.subr.mxu0 %v1886
    %v1888 = vand.u32 %v64, 4294901760
    %v1889 = vsub.f32 %v64, %v1888
    %v1890 = vand.u32 %v1889, 4294901760
    %1891 = vmatpush1.msra.mxu0 %v1890
    %1892 = vmatprep.subr.mxu0 0.0
    %1893 = vmatpush1.msra.mxu0 0.0
    %1894 = vmatprep.subr.mxu0 0.0
    %1895 = vmatpush1.msra.mxu0 0.0
    %1896 = vmatprep.subr.mxu0 0.0
    %1897 = vmatpush1.msra.mxu0 0.0
    %1898 = vmatprep.subr.mxu0 0.0
    %1899 = vmatpush1.msra.mxu0 0.0
    %1900 = vmatprep.subr.mxu0 0.0
    %1901 = vmatpush1.msra.mxu0 0.0
    %1902 = vmatprep.subr.mxu0 0.0
    %1903 = vmatpush1.msra.mxu0 0.0
    %1904 = vmatprep.subr.mxu0 0.0
    %1905 = vmatpush1.msra.mxu0 0.0
    %1906 = vmatprep.subr.mxu0 0.0
    %1907 = vmatpush1.msra.mxu0 0.0
    %1908 = vmatprep.subr.mxu0 0.0
    %1909 = vmatpush1.msra.mxu0 0.0
    %1910 = vmatprep.subr.mxu0 0.0
    %1911 = vmatpush1.msra.mxu0 0.0
    %1912 = vmatprep.subr.mxu0 0.0
    %1913 = vmatpush1.msra.mxu0 0.0
    %1914 = vmatprep.subr.mxu0 0.0
    %1915 = vmatpush1.msra.mxu0 0.0
    %1916 = vmatprep.subr.mxu0 0.0
    %1917 = vmatpush1.msra.mxu0 0.0
    %1918 = vmatprep.subr.mxu0 0.0
    %1919 = vmatpush1.msra.mxu0 0.0
    %1920 = vmatprep.subr.mxu0 0.0
    %1921 = vmatpush1.msra.mxu0 0.0
    %1922 = vmatprep.subr.mxu0 0.0
    %1923 = vmatpush1.msra.mxu0 0.0
    %1924 = vmatprep.subr.mxu0 0.0
    %1925 = vmatpush1.msra.mxu0 0.0
    %1926 = vmatprep.subr.mxu0 0.0
    %1927 = vmatpush1.msra.mxu0 0.0
    %1928 = vmatprep.subr.mxu0 0.0
    %1929 = vmatpush1.msra.mxu0 0.0
    %1930 = vmatprep.subr.mxu0 0.0
    %1931 = vmatpush1.msra.mxu0 0.0
    %1932 = vmatprep.subr.mxu0 0.0
    %1933 = vmatpush1.msra.mxu0 0.0
    %1934 = vmatprep.subr.mxu0 0.0
    %1935 = vmatpush1.msra.mxu0 0.0
    %1936 = vmatprep.subr.mxu0 0.0
    %1937 = vmatpush1.msra.mxu0 0.0
    %1938 = vmatprep.subr.mxu0 0.0
    %1939 = vmatpush1.msra.mxu0 0.0
    %1940 = vmatprep.subr.mxu0 0.0
    %1941 = vmatpush1.msra.mxu0 0.0
    %1942 = vmatprep.subr.mxu0 0.0
    %1943 = vmatpush1.msra.mxu0 0.0
    %1944 = vmatprep.subr.mxu0 0.0
    %1945 = vmatpush1.msra.mxu0 0.0
    %1946 = vmatprep.subr.mxu0 0.0
    %1947 = vmatpush1.msra.mxu0 0.0
    %1948 = vmatprep.subr.mxu0 0.0
    %1949 = vmatpush1.msra.mxu0 0.0
    %1950 = vmatprep.subr.mxu0 0.0
    %1951 = vmatpush1.msra.mxu0 0.0
    %1952 = vmatprep.subr.mxu0 0.0
    %1953 = vmatpush1.msra.mxu0 0.0
    %1954 = vmatprep.mubr.f32.mxu0 0.0
    %v1955 = vand.u32 %v1417, 4294901760
    %1956 = vmatmul.mubr.f32.gmra.mrb[0].mxu0 %v1955
    %v1957 = vpop.f32.mrb[0].mxu0
    %v1958 = vadd.f32 %v1844, %v1957
    %v1959 = vpop.f32.mrb[0].mxu0
    %v1960 = vadd.f32 %v1846, %v1959
    %1961 = vmatprep.mubr.f32.mxu0 0.0
    %v1962 = vand.u32 %v1420, 4294901760
    %1963 = vmatmul.mubr.f32.gmra.mrb[0].mxu0 %v1962
    %v1964 = vpop.f32.mrb[0].mxu0
    %v1965 = vadd.f32 %v1853, %v1964
    %v1966 = vpop.f32.mrb[0].mxu0
    %v1967 = vadd.f32 %v1855, %v1966
    %1968 = vmatprep.mubr.f32.mxu0 0.0
    %v1969 = vand.u32 %v1423, 4294901760
    %1970 = vmatmul.mubr.f32.gmra.mrb[0].mxu0 %v1969
    %v1971 = vpop.f32.mrb[0].mxu0
    %v1972 = vadd.f32 %v1862, %v1971
    %v1973 = vpop.f32.mrb[0].mxu0
    %v1974 = vadd.f32 %v1864, %v1973
    %1975 = vmatprep.mubr.f32.mxu0 0.0
    %v1976 = vand.u32 %v1426, 4294901760
    %1977 = vmatmul.mubr.f32.gmra.mrb[0].mxu0 %v1976
    %v1978 = vpop.f32.mrb[0].mxu0
    %v1979 = vadd.f32 %v1871, %v1978
    %v1980 = vpop.f32.mrb[0].mxu0
    %v1981 = vadd.f32 %v1873, %v1980
    %1982 = vmatprep.mubr.f32.mxu0 0.0
    %v1983 = vand.u32 %v1429, 4294901760
    %1984 = vmatmul.mubr.f32.gmra.mrb[0].mxu0 %v1983
    %v1985 = vpop.f32.mrb[0].mxu0
    %v1986 = vadd.f32 %v1880, %v1985
    %v1987 = vpop.f32.mrb[0].mxu0
    %v1988 = vadd.f32 %v1882, %v1987
    %1989 = vdwg.mxu0
    %v1990 = vand.u32 %v67, 4294901760
    %1991 = vmatprep.subr.mxu0 %v1990
    %v1992 = vand.u32 %v64, 4294901760
    %1993 = vmatpush1.msra.mxu0 %v1992
    %1994 = vmatprep.subr.mxu0 0.0
    %1995 = vmatpush1.msra.mxu0 0.0
    %1996 = vmatprep.subr.mxu0 0.0
    %1997 = vmatpush1.msra.mxu0 0.0
    %1998 = vmatprep.subr.mxu0 0.0
    %1999 = vmatpush1.msra.mxu0 0.0
    %2000 = vmatprep.subr.mxu0 0.0
    %2001 = vmatpush1.msra.mxu0 0.0
    %2002 = vmatprep.subr.mxu0 0.0
    %2003 = vmatpush1.msra.mxu0 0.0
    %2004 = vmatprep.subr.mxu0 0.0
    %2005 = vmatpush1.msra.mxu0 0.0
    %2006 = vmatprep.subr.mxu0 0.0
    %2007 = vmatpush1.msra.mxu0 0.0
    %2008 = vmatprep.subr.mxu0 0.0
    %2009 = vmatpush1.msra.mxu0 0.0
    %2010 = vmatprep.subr.mxu0 0.0
    %2011 = vmatpush1.msra.mxu0 0.0
    %2012 = vmatprep.subr.mxu0 0.0
    %2013 = vmatpush1.msra.mxu0 0.0
    %2014 = vmatprep.subr.mxu0 0.0
    %2015 = vmatpush1.msra.mxu0 0.0
    %2016 = vmatprep.subr.mxu0 0.0
    %2017 = vmatpush1.msra.mxu0 0.0
    %2018 = vmatprep.subr.mxu0 0.0
    %2019 = vmatpush1.msra.mxu0 0.0
    %2020 = vmatprep.subr.mxu0 0.0
    %2021 = vmatpush1.msra.mxu0 0.0
    %2022 = vmatprep.subr.mxu0 0.0
    %2023 = vmatpush1.msra.mxu0 0.0
    %2024 = vmatprep.subr.mxu0 0.0
    %2025 = vmatpush1.msra.mxu0 0.0
    %2026 = vmatprep.subr.mxu0 0.0
    %2027 = vmatpush1.msra.mxu0 0.0
    %2028 = vmatprep.subr.mxu0 0.0
    %2029 = vmatpush1.msra.mxu0 0.0
    %2030 = vmatprep.subr.mxu0 0.0
    %2031 = vmatpush1.msra.mxu0 0.0
    %2032 = vmatprep.subr.mxu0 0.0
    %2033 = vmatpush1.msra.mxu0 0.0
    %2034 = vmatprep.subr.mxu0 0.0
    %2035 = vmatpush1.msra.mxu0 0.0
    %2036 = vmatprep.subr.mxu0 0.0
    %2037 = vmatpush1.msra.mxu0 0.0
    %2038 = vmatprep.subr.mxu0 0.0
    %2039 = vmatpush1.msra.mxu0 0.0
    %2040 = vmatprep.subr.mxu0 0.0
    %2041 = vmatpush1.msra.mxu0 0.0
    %2042 = vmatprep.subr.mxu0 0.0
    %2043 = vmatpush1.msra.mxu0 0.0
    %2044 = vmatprep.subr.mxu0 0.0
    %2045 = vmatpush1.msra.mxu0 0.0
    %2046 = vmatprep.subr.mxu0 0.0
    %2047 = vmatpush1.msra.mxu0 0.0
    %2048 = vmatprep.subr.mxu0 0.0
    %2049 = vmatpush1.msra.mxu0 0.0
    %2050 = vmatprep.subr.mxu0 0.0
    %2051 = vmatpush1.msra.mxu0 0.0
    %2052 = vmatprep.subr.mxu0 0.0
    %2053 = vmatpush1.msra.mxu0 0.0
    %2054 = vmatprep.subr.mxu0 0.0
    %2055 = vmatpush1.msra.mxu0 0.0
    %2056 = vmatprep.mubr.f32.mxu0 0.0
    %v2057 = vand.u32 %v1417, 4294901760
    %2058 = vmatmul.mubr.f32.gmra.mrb[0].mxu0 %v2057
    %v2059 = vpop.f32.mrb[0].mxu0
    %v2060 = vadd.f32 %v1958, %v2059
    %v2061 = vpop.f32.mrb[0].mxu0
    %v2062 = vadd.f32 %v1960, %v2061
    %2063 = vmatprep.mubr.f32.mxu0 0.0
    %v2064 = vand.u32 %v1420, 4294901760
    %2065 = vmatmul.mubr.f32.gmra.mrb[0].mxu0 %v2064
    %v2066 = vpop.f32.mrb[0].mxu0
    %v2067 = vadd.f32 %v1965, %v2066
    %v2068 = vpop.f32.mrb[0].mxu0
    %v2069 = vadd.f32 %v1967, %v2068
    %2070 = vmatprep.mubr.f32.mxu0 0.0
    %v2071 = vand.u32 %v1423, 4294901760
    %2072 = vmatmul.mubr.f32.gmra.mrb[0].mxu0 %v2071
    %v2073 = vpop.f32.mrb[0].mxu0
    %v2074 = vadd.f32 %v1972, %v2073
    %v2075 = vpop.f32.mrb[0].mxu0
    %v2076 = vadd.f32 %v1974, %v2075
    %2077 = vmatprep.mubr.f32.mxu0 0.0
    %v2078 = vand.u32 %v1426, 4294901760
    %2079 = vmatmul.mubr.f32.gmra.mrb[0].mxu0 %v2078
    %v2080 = vpop.f32.mrb[0].mxu0
    %v2081 = vadd.f32 %v1979, %v2080
    %v2082 = vpop.f32.mrb[0].mxu0
    %v2083 = vadd.f32 %v1981, %v2082
    %2084 = vmatprep.mubr.f32.mxu0 0.0
    %v2085 = vand.u32 %v1429, 4294901760
    %2086 = vmatmul.mubr.f32.gmra.mrb[0].mxu0 %v2085
    %v2087 = vpop.f32.mrb[0].mxu0
    %v2088 = vadd.f32 %v1986, %v2087
    %v2089 = vpop.f32.mrb[0].mxu0
    %v2090 = vadd.f32 %v1988, %v2089
    %2091 = vdwg.mxu0
    %v2092 = vmul.f32 %v698, %v1379
    %v2093 = vmul.f32 %v700, %v1381
    %v2094 = vmul.f32 %v705, %v1386
    %v2095 = vmul.f32 %v707, %v1388
    %v2096 = vmul.f32 %v712, %v1393
    %v2097 = vmul.f32 %v714, %v1395
    %v2098 = vmul.f32 %v719, %v1400
    %v2099 = vmul.f32 %v721, %v1402
    %v2100 = vmul.f32 %v726, %v1407
    %v2101 = vmul.f32 %v728, %v1409
    %v2102 = vmul.f32 %v2092, %v2060
    %v2103 = vmul.f32 %v2093, %v2062
    %v2104 = vmul.f32 %v2094, %v2067
    %v2105 = vmul.f32 %v2095, %v2069
    %v2106 = vmul.f32 %v2096, %v2074
    %v2107 = vmul.f32 %v2097, %v2076
    %v2108 = vmul.f32 %v2098, %v2081
    %v2109 = vmul.f32 %v2099, %v2083
    %v2110 = vmul.f32 %v2100, %v2088
    %v2111 = vmul.f32 %v2101, %v2090
    %v2112 = vld [vmem:[%s4] sm:$0xff]
    %v2113 = vld [vmem:[%s4 + $0x8] sm:$0xff]
    %v2114 = vld [vmem:[%s4 + $0x10] sm:$0xff]
    %v2115 = vld [vmem:[%s4 + $0x18] sm:$0xff]
    %v2116 = vld [vmem:[%s8] sm:$0xf]
    %2118 = vset.pattern.permute.xlu0 0
    %2119 = vperm.xlu0 %2118, %v2116
    %v2120 = vpop.permute.xlu0 %2119
    %v2122 = vmul.f32 %v39, %v2120
    %v2123 = vmul.f32 %v40, %v2120
    %v2124 = vand.u32 2147483647, %v2122
    %vm2125 = vcmp.le.f32.partialorder %v2124, 0.7853982
    %vm2126 = vcmp.lt.s32.totalorder %v2122, 0
    %v2127 = vand.u32 %v2122, 2139095040
    %v2128 = vshrl.u32 %v2127, 23
    %v2129 = vsub.s32 %v2128, 127
    %v2130 = vand.u32 2147483647, %v2122
    %v2131 = vand.u32 %v2130, 8388607
    %v2132 = vor.u32 %v2131, 8388608
    %v2133 = vsub.s32 0, %v2132
    %v2134 = vadd.s32 %v2129, 1
    %vm2135 = vcmp.gt.s32.totalorder %v2134, 0
    %v2136 = vsel %vm2135, %v2134, 0
    %v2137 = vshrl.u32 %v2136, 5
    %v2138 = vand.u32 %v2136, 31
    %v2139 = vsub.s32 32, %v2138
    %v2140 = vshrl.u32 683565275, %v2139
    %v2141 = vshll.u32 683565275, %v2138
    %v2142 = vshrl.u32 2475754826, %v2139
    %v2143 = vor.u32 %v2141, %v2142
    %v2144 = vshll.u32 2475754826, %v2138
    %v2145 = vshrl.u32 2131351028, %v2139
    %v2146 = vor.u32 %v2144, %v2145
    %v2147 = vshll.u32 2131351028, %v2138
    %v2148 = vshrl.u32 2102212464, %v2139
    %v2149 = vor.u32 %v2147, %v2148
    %v2150 = vshll.u32 2102212464, %v2138
    %v2151 = vshrl.u32 920167782, %v2139
    %v2152 = vor.u32 %v2150, %v2151
    %v2153 = vshll.u32 920167782, %v2138
    %v2154 = vshrl.u32 1326507024, %v2139
    %v2155 = vor.u32 %v2153, %v2154
    %vm2156 = vcmp.lt.s32.totalorder %v2137, 1
    %vm2157 = vcmp.lt.s32.totalorder %v2137, 2
    %vm2158 = vcmp.lt.s32.totalorder %v2137, 3
    %vm2159 = vcmp.lt.s32.totalorder %v2137, 4
    %v2160 = vsel %vm2156, %v2140, %v2143
    %v2161 = vsel %vm2159, %v2149, 2102212464
    %v2162 = vsel %vm2158, %v2146, %v2161
    %v2163 = vsel %vm2157, %v2160, %v2162
    %v2164 = vsel %vm2156, %v2143, %v2146
    %v2165 = vsel %vm2159, %v2152, 920167782
    %v2166 = vsel %vm2158, %v2149, %v2165
    %v2167 = vsel %vm2157, %v2164, %v2166
    %v2168 = vsel %vm2156, %v2146, %v2149
    %v2169 = vsel %vm2159, %v2155, 1326507024
    %v2170 = vsel %vm2158, %v2152, %v2169
    %v2171 = vsel %vm2157, %v2168, %v2170
    %v2172 = vshll.u32 %v2132, 8
    %v2173 = vmul.u32.u64.compose %v2172, %v2171
    %v2174 = vextract.low.u32 %v2173
    %v2175 = vextract.high.u32 %v2173
    %v2176 = vmul.u32.u64.compose %v2172, %v2167
    %v2177 = vextract.low.u32 %v2176
    %v2178 = vextract.high.u32 %v2176
    %v2179 = vmul.u32 %v2172, %v2163
    %v2180 = vadd.s32 %v2175, %v2177
    %vm2181 = vc.u32 %v2175, %v2177
    %v2182 = vadd.s32 %v2178, 1
    %v2183 = vsel %vm2181, %v2182, %v2178
    %v2184 = vadd.s32 %v2179, %v2183
    %v2185 = vadd.s32 %v2184, 536870912
    %v2186 = vshrl.u32 %v2185, 30
    %v2187 = vshll.u32 %v2186, 30
    %v2188 = vsub.s32 %v2184, %v2187
    %vm2189 = vcmp.lt.s32.totalorder %v2188, 0
    %v2190 = vsub.s32 0, %v2188
    %v2191 = vsel %vm2189, %v2190, %v2188
    %v2192 = vclz %v2191
    %v2193 = vsub.s32 %v2192, 2
    %vm2194 = vcmp.gt.s32.totalorder 0, %v2193
    %v2195 = vsel %vm2194, 0, %v2193
    %v2196 = vsub.s32 32, %v2195
    %v2197 = vshll.u32 %v2188, %v2195
    %v2198 = vshrl.u32 %v2180, %v2196
    %v2199 = vor.u32 %v2197, %v2198
    %v2200 = vsub.s32 4294967266, %v2195
    %v2201 = vadd.s32 %v2200, 127
    %v2202 = vshll.u32 %v2201, 23
    %v2203 = vor.u32 4788187, %v2202
    %v2204 = vand.u32 2147483647, %v2203
    %v2206 = vcvt.s32.f32 %v2199
    %v2207 = vmul.f32 %v2206, %v2204
    %v2208 = vxor.u32 %v2207, 2147483648
    %v2209 = vsel %vm2126, %v2208, %v2207
    %v2210 = vsub.s32 4, %v2186
    %v2211 = vsel %vm2126, %v2210, %v2186
    %v2212 = vsel %vm2125, %v2122, %v2209
    %v2213 = vsel %vm2125, 0, %v2211
    %v2214 = vcosq.f32.pop %v2212
    %v2215 = vsinq.f32.pop %v2212
    %vm2216 = vweird.f32 %v2122
    %v2217 = vadd.s32 %v2213, 3
    %v2218 = vand.u32 %v2217, 3
    %vm2219 = vcmp.lt.s32.totalorder %v2218, 2
    %vm2220 = vcmp.eq.s32.totalorder %v2218, 0
    %v2221 = vxor.u32 %v2215, 2147483648
    %v2222 = vsel %vm2220, %v2214, %v2221
    %vm2223 = vcmp.eq.s32.totalorder %v2218, 2
    %v2224 = vxor.u32 %v2214, 2147483648
    %v2225 = vsel %vm2223, %v2224, %v2215
    %v2226 = vsel %vm2219, %v2222, %v2225
    %v2227 = vsel %vm2216, nan, %v2226
    %v2228 = vand.u32 2147483647, %v2123
    %vm2229 = vcmp.le.f32.partialorder %v2228, 0.7853982
    %vm2230 = vcmp.lt.s32.totalorder %v2123, 0
    %v2231 = vand.u32 %v2123, 2139095040
    %v2232 = vshrl.u32 %v2231, 23
    %v2233 = vsub.s32 %v2232, 127
    %v2234 = vand.u32 2147483647, %v2123
    %v2235 = vand.u32 %v2234, 8388607
    %v2236 = vor.u32 %v2235, 8388608
    %v2237 = vsub.s32 0, %v2236
    %v2238 = vadd.s32 %v2233, 1
    %vm2239 = vcmp.gt.s32.totalorder %v2238, 0
    %v2240 = vsel %vm2239, %v2238, 0
    %v2241 = vshrl.u32 %v2240, 5
    %v2242 = vand.u32 %v2240, 31
    %v2243 = vsub.s32 32, %v2242
    %v2244 = vshrl.u32 683565275, %v2243
    %v2245 = vshll.u32 683565275, %v2242
    %v2246 = vshrl.u32 2475754826, %v2243
    %v2247 = vor.u32 %v2245, %v2246
    %v2248 = vshll.u32 2475754826, %v2242
    %v2249 = vshrl.u32 2131351028, %v2243
    %v2250 = vor.u32 %v2248, %v2249
    %v2251 = vshll.u32 2131351028, %v2242
    %v2252 = vshrl.u32 2102212464, %v2243
    %v2253 = vor.u32 %v2251, %v2252
    %v2254 = vshll.u32 2102212464, %v2242
    %v2255 = vshrl.u32 920167782, %v2243
    %v2256 = vor.u32 %v2254, %v2255
    %v2257 = vshll.u32 920167782, %v2242
    %v2258 = vshrl.u32 1326507024, %v2243
    %v2259 = vor.u32 %v2257, %v2258
    %vm2260 = vcmp.lt.s32.totalorder %v2241, 1
    %vm2261 = vcmp.lt.s32.totalorder %v2241, 2
    %vm2262 = vcmp.lt.s32.totalorder %v2241, 3
    %vm2263 = vcmp.lt.s32.totalorder %v2241, 4
    %v2264 = vsel %vm2260, %v2244, %v2247
    %v2265 = vsel %vm2263, %v2253, 2102212464
    %v2266 = vsel %vm2262, %v2250, %v2265
    %v2267 = vsel %vm2261, %v2264, %v2266
    %v2268 = vsel %vm2260, %v2247, %v2250
    %v2269 = vsel %vm2263, %v2256, 920167782
    %v2270 = vsel %vm2262, %v2253, %v2269
    %v2271 = vsel %vm2261, %v2268, %v2270
    %v2272 = vsel %vm2260, %v2250, %v2253
    %v2273 = vsel %vm2263, %v2259, 1326507024
    %v2274 = vsel %vm2262, %v2256, %v2273
    %v2275 = vsel %vm2261, %v2272, %v2274
    %v2276 = vshll.u32 %v2236, 8
    %v2277 = vmul.u32.u64.compose %v2276, %v2275
    %v2278 = vextract.low.u32 %v2277
    %v2279 = vextract.high.u32 %v2277
    %v2280 = vmul.u32.u64.compose %v2276, %v2271
    %v2281 = vextract.low.u32 %v2280
    %v2282 = vextract.high.u32 %v2280
    %v2283 = vmul.u32 %v2276, %v2267
    %v2284 = vadd.s32 %v2279, %v2281
    %vm2285 = vc.u32 %v2279, %v2281
    %v2286 = vadd.s32 %v2282, 1
    %v2287 = vsel %vm2285, %v2286, %v2282
    %v2288 = vadd.s32 %v2283, %v2287
    %v2289 = vadd.s32 %v2288, 536870912
    %v2290 = vshrl.u32 %v2289, 30
    %v2291 = vshll.u32 %v2290, 30
    %v2292 = vsub.s32 %v2288, %v2291
    %vm2293 = vcmp.lt.s32.totalorder %v2292, 0
    %v2294 = vsub.s32 0, %v2292
    %v2295 = vsel %vm2293, %v2294, %v2292
    %v2296 = vclz %v2295
    %v2297 = vsub.s32 %v2296, 2
    %vm2298 = vcmp.gt.s32.totalorder 0, %v2297
    %v2299 = vsel %vm2298, 0, %v2297
    %v2300 = vsub.s32 32, %v2299
    %v2301 = vshll.u32 %v2292, %v2299
    %v2302 = vshrl.u32 %v2284, %v2300
    %v2303 = vor.u32 %v2301, %v2302
    %v2304 = vsub.s32 4294967266, %v2299
    %v2305 = vadd.s32 %v2304, 127
    %v2306 = vshll.u32 %v2305, 23
    %v2307 = vor.u32 4788187, %v2306
    %v2308 = vand.u32 2147483647, %v2307
    %v2310 = vcvt.s32.f32 %v2303
    %v2311 = vmul.f32 %v2310, %v2308
    %v2312 = vxor.u32 %v2311, 2147483648
    %v2313 = vsel %vm2230, %v2312, %v2311
    %v2314 = vsub.s32 4, %v2290
    %v2315 = vsel %vm2230, %v2314, %v2290
    %v2316 = vsel %vm2229, %v2123, %v2313
    %v2317 = vsel %vm2229, 0, %v2315
    %v2318 = vcosq.f32.pop %v2316
    %v2319 = vsinq.f32.pop %v2316
    %vm2320 = vweird.f32 %v2123
    %v2321 = vadd.s32 %v2317, 3
    %v2322 = vand.u32 %v2321, 3
    %vm2323 = vcmp.lt.s32.totalorder %v2322, 2
    %vm2324 = vcmp.eq.s32.totalorder %v2322, 0
    %v2325 = vxor.u32 %v2319, 2147483648
    %v2326 = vsel %vm2324, %v2318, %v2325
    %vm2327 = vcmp.eq.s32.totalorder %v2322, 2
    %v2328 = vxor.u32 %v2318, 2147483648
    %v2329 = vsel %vm2327, %v2328, %v2319
    %v2330 = vsel %vm2323, %v2326, %v2329
    %v2331 = vsel %vm2320, nan, %v2330
    %v2332 = vld [vmem:[%s9] sm:$0xf]
    %2334 = vset.pattern.permute.xlu0 0
    %2335 = vperm.xlu0 %2334, %v2332
    %v2336 = vpop.permute.xlu0 %2335
    %v2338 = vmul.f32 %v39, %v2336
    %v2339 = vmul.f32 %v40, %v2336
    %v2340 = vand.u32 2147483647, %v2338
    %vm2341 = vcmp.le.f32.partialorder %v2340, 0.7853982
    %vm2342 = vcmp.lt.s32.totalorder %v2338, 0
    %v2343 = vand.u32 %v2338, 2139095040
    %v2344 = vshrl.u32 %v2343, 23
    %v2345 = vsub.s32 %v2344, 127
    %v2346 = vand.u32 2147483647, %v2338
    %v2347 = vand.u32 %v2346, 8388607
    %v2348 = vor.u32 %v2347, 8388608
    %v2349 = vsub.s32 0, %v2348
    %v2350 = vadd.s32 %v2345, 1
    %vm2351 = vcmp.gt.s32.totalorder %v2350, 0
    %v2352 = vsel %vm2351, %v2350, 0
    %v2353 = vshrl.u32 %v2352, 5
    %v2354 = vand.u32 %v2352, 31
    %v2355 = vsub.s32 32, %v2354
    %v2356 = vshrl.u32 683565275, %v2355
    %v2357 = vshll.u32 683565275, %v2354
    %v2358 = vshrl.u32 2475754826, %v2355
    %v2359 = vor.u32 %v2357, %v2358
    %v2360 = vshll.u32 2475754826, %v2354
    %v2361 = vshrl.u32 2131351028, %v2355
    %v2362 = vor.u32 %v2360, %v2361
    %v2363 = vshll.u32 2131351028, %v2354
    %v2364 = vshrl.u32 2102212464, %v2355
    %v2365 = vor.u32 %v2363, %v2364
    %v2366 = vshll.u32 2102212464, %v2354
    %v2367 = vshrl.u32 920167782, %v2355
    %v2368 = vor.u32 %v2366, %v2367
    %v2369 = vshll.u32 920167782, %v2354
    %v2370 = vshrl.u32 1326507024, %v2355
    %v2371 = vor.u32 %v2369, %v2370
    %vm2372 = vcmp.lt.s32.totalorder %v2353, 1
    %vm2373 = vcmp.lt.s32.totalorder %v2353, 2
    %vm2374 = vcmp.lt.s32.totalorder %v2353, 3
    %vm2375 = vcmp.lt.s32.totalorder %v2353, 4
    %v2376 = vsel %vm2372, %v2356, %v2359
    %v2377 = vsel %vm2375, %v2365, 2102212464
    %v2378 = vsel %vm2374, %v2362, %v2377
    %v2379 = vsel %vm2373, %v2376, %v2378
    %v2380 = vsel %vm2372, %v2359, %v2362
    %v2381 = vsel %vm2375, %v2368, 920167782
    %v2382 = vsel %vm2374, %v2365, %v2381
    %v2383 = vsel %vm2373, %v2380, %v2382
    %v2384 = vsel %vm2372, %v2362, %v2365
    %v2385 = vsel %vm2375, %v2371, 1326507024
    %v2386 = vsel %vm2374, %v2368, %v2385
    %v2387 = vsel %vm2373, %v2384, %v2386
    %v2388 = vshll.u32 %v2348, 8
    %v2389 = vmul.u32.u64.compose %v2388, %v2387
    %v2390 = vextract.low.u32 %v2389
    %v2391 = vextract.high.u32 %v2389
    %v2392 = vmul.u32.u64.compose %v2388, %v2383
    %v2393 = vextract.low.u32 %v2392
    %v2394 = vextract.high.u32 %v2392
    %v2395 = vmul.u32 %v2388, %v2379
    %v2396 = vadd.s32 %v2391, %v2393
    %vm2397 = vc.u32 %v2391, %v2393
    %v2398 = vadd.s32 %v2394, 1
    %v2399 = vsel %vm2397, %v2398, %v2394
    %v2400 = vadd.s32 %v2395, %v2399
    %v2401 = vadd.s32 %v2400, 536870912
    %v2402 = vshrl.u32 %v2401, 30
    %v2403 = vshll.u32 %v2402, 30
    %v2404 = vsub.s32 %v2400, %v2403
    %vm2405 = vcmp.lt.s32.totalorder %v2404, 0
    %v2406 = vsub.s32 0, %v2404
    %v2407 = vsel %vm2405, %v2406, %v2404
    %v2408 = vclz %v2407
    %v2409 = vsub.s32 %v2408, 2
    %vm2410 = vcmp.gt.s32.totalorder 0, %v2409
    %v2411 = vsel %vm2410, 0, %v2409
    %v2412 = vsub.s32 32, %v2411
    %v2413 = vshll.u32 %v2404, %v2411
    %v2414 = vshrl.u32 %v2396, %v2412
    %v2415 = vor.u32 %v2413, %v2414
    %v2416 = vsub.s32 4294967266, %v2411
    %v2417 = vadd.s32 %v2416, 127
    %v2418 = vshll.u32 %v2417, 23
    %v2419 = vor.u32 4788187, %v2418
    %v2420 = vand.u32 2147483647, %v2419
    %v2422 = vcvt.s32.f32 %v2415
    %v2423 = vmul.f32 %v2422, %v2420
    %v2424 = vxor.u32 %v2423, 2147483648
    %v2425 = vsel %vm2342, %v2424, %v2423
    %v2426 = vsub.s32 4, %v2402
    %v2427 = vsel %vm2342, %v2426, %v2402
    %v2428 = vsel %vm2341, %v2338, %v2425
    %v2429 = vsel %vm2341, 0, %v2427
    %v2430 = vcosq.f32.pop %v2428
    %v2431 = vsinq.f32.pop %v2428
    %vm2432 = vweird.f32 %v2338
    %v2433 = vand.u32 %v2429, 3
    %vm2434 = vcmp.lt.s32.totalorder %v2433, 2
    %vm2435 = vcmp.eq.s32.totalorder %v2433, 0
    %v2436 = vxor.u32 %v2431, 2147483648
    %v2437 = vsel %vm2435, %v2430, %v2436
    %vm2438 = vcmp.eq.s32.totalorder %v2433, 2
    %v2439 = vxor.u32 %v2430, 2147483648
    %v2440 = vsel %vm2438, %v2439, %v2431
    %v2441 = vsel %vm2434, %v2437, %v2440
    %v2442 = vsel %vm2432, nan, %v2441
    %v2443 = vand.u32 2147483647, %v2339
    %vm2444 = vcmp.le.f32.partialorder %v2443, 0.7853982
    %vm2445 = vcmp.lt.s32.totalorder %v2339, 0
    %v2446 = vand.u32 %v2339, 2139095040
    %v2447 = vshrl.u32 %v2446, 23
    %v2448 = vsub.s32 %v2447, 127
    %v2449 = vand.u32 2147483647, %v2339
    %v2450 = vand.u32 %v2449, 8388607
    %v2451 = vor.u32 %v2450, 8388608
    %v2452 = vsub.s32 0, %v2451
    %v2453 = vadd.s32 %v2448, 1
    %vm2454 = vcmp.gt.s32.totalorder %v2453, 0
    %v2455 = vsel %vm2454, %v2453, 0
    %v2456 = vshrl.u32 %v2455, 5
    %v2457 = vand.u32 %v2455, 31
    %v2458 = vsub.s32 32, %v2457
    %v2459 = vshrl.u32 683565275, %v2458
    %v2460 = vshll.u32 683565275, %v2457
    %v2461 = vshrl.u32 2475754826, %v2458
    %v2462 = vor.u32 %v2460, %v2461
    %v2463 = vshll.u32 2475754826, %v2457
    %v2464 = vshrl.u32 2131351028, %v2458
    %v2465 = vor.u32 %v2463, %v2464
    %v2466 = vshll.u32 2131351028, %v2457
    %v2467 = vshrl.u32 2102212464, %v2458
    %v2468 = vor.u32 %v2466, %v2467
    %v2469 = vshll.u32 2102212464, %v2457
    %v2470 = vshrl.u32 920167782, %v2458
    %v2471 = vor.u32 %v2469, %v2470
    %v2472 = vshll.u32 920167782, %v2457
    %v2473 = vshrl.u32 1326507024, %v2458
    %v2474 = vor.u32 %v2472, %v2473
    %vm2475 = vcmp.lt.s32.totalorder %v2456, 1
    %vm2476 = vcmp.lt.s32.totalorder %v2456, 2
    %vm2477 = vcmp.lt.s32.totalorder %v2456, 3
    %vm2478 = vcmp.lt.s32.totalorder %v2456, 4
    %v2479 = vsel %vm2475, %v2459, %v2462
    %v2480 = vsel %vm2478, %v2468, 2102212464
    %v2481 = vsel %vm2477, %v2465, %v2480
    %v2482 = vsel %vm2476, %v2479, %v2481
    %v2483 = vsel %vm2475, %v2462, %v2465
    %v2484 = vsel %vm2478, %v2471, 920167782
    %v2485 = vsel %vm2477, %v2468, %v2484
    %v2486 = vsel %vm2476, %v2483, %v2485
    %v2487 = vsel %vm2475, %v2465, %v2468
    %v2488 = vsel %vm2478, %v2474, 1326507024
    %v2489 = vsel %vm2477, %v2471, %v2488
    %v2490 = vsel %vm2476, %v2487, %v2489
    %v2491 = vshll.u32 %v2451, 8
    %v2492 = vmul.u32.u64.compose %v2491, %v2490
    %v2493 = vextract.low.u32 %v2492
    %v2494 = vextract.high.u32 %v2492
    %v2495 = vmul.u32.u64.compose %v2491, %v2486
    %v2496 = vextract.low.u32 %v2495
    %v2497 = vextract.high.u32 %v2495
    %v2498 = vmul.u32 %v2491, %v2482
    %v2499 = vadd.s32 %v2494, %v2496
    %vm2500 = vc.u32 %v2494, %v2496
    %v2501 = vadd.s32 %v2497, 1
    %v2502 = vsel %vm2500, %v2501, %v2497
    %v2503 = vadd.s32 %v2498, %v2502
    %v2504 = vadd.s32 %v2503, 536870912
    %v2505 = vshrl.u32 %v2504, 30
    %v2506 = vshll.u32 %v2505, 30
    %v2507 = vsub.s32 %v2503, %v2506
    %vm2508 = vcmp.lt.s32.totalorder %v2507, 0
    %v2509 = vsub.s32 0, %v2507
    %v2510 = vsel %vm2508, %v2509, %v2507
    %v2511 = vclz %v2510
    %v2512 = vsub.s32 %v2511, 2
    %vm2513 = vcmp.gt.s32.totalorder 0, %v2512
    %v2514 = vsel %vm2513, 0, %v2512
    %v2515 = vsub.s32 32, %v2514
    %v2516 = vshll.u32 %v2507, %v2514
    %v2517 = vshrl.u32 %v2499, %v2515
    %v2518 = vor.u32 %v2516, %v2517
    %v2519 = vsub.s32 4294967266, %v2514
    %v2520 = vadd.s32 %v2519, 127
    %v2521 = vshll.u32 %v2520, 23
    %v2522 = vor.u32 4788187, %v2521
    %v2523 = vand.u32 2147483647, %v2522
    %v2525 = vcvt.s32.f32 %v2518
    %v2526 = vmul.f32 %v2525, %v2523
    %v2527 = vxor.u32 %v2526, 2147483648
    %v2528 = vsel %vm2445, %v2527, %v2526
    %v2529 = vsub.s32 4, %v2505
    %v2530 = vsel %vm2445, %v2529, %v2505
    %v2531 = vsel %vm2444, %v2339, %v2528
    %v2532 = vsel %vm2444, 0, %v2530
    %v2533 = vcosq.f32.pop %v2531
    %v2534 = vsinq.f32.pop %v2531
    %vm2535 = vweird.f32 %v2339
    %v2536 = vand.u32 %v2532, 3
    %vm2537 = vcmp.lt.s32.totalorder %v2536, 2
    %vm2538 = vcmp.eq.s32.totalorder %v2536, 0
    %v2539 = vxor.u32 %v2534, 2147483648
    %v2540 = vsel %vm2538, %v2533, %v2539
    %vm2541 = vcmp.eq.s32.totalorder %v2536, 2
    %v2542 = vxor.u32 %v2533, 2147483648
    %v2543 = vsel %vm2541, %v2542, %v2534
    %v2544 = vsel %vm2537, %v2540, %v2543
    %v2545 = vsel %vm2535, nan, %v2544
    %v2546 = vld [vmem:[%s10] sm:$0xf]
    %2548 = vset.pattern.permute.xlu0 0
    %2549 = vperm.xlu0 %2548, %v2546
    %v2550 = vpop.permute.xlu0 %2549
    %v2552 = vmul.f32 %v39, %v2550
    %v2553 = vmul.f32 %v40, %v2550
    %v2554 = vtanh.pop %v2552
    %v2555 = vtanh.pop %v2553
    %v2556 = vld [vmem:[%s5] sm:$0xff]
    %v2557 = vld [vmem:[%s5 + $0x8] sm:$0xff]
    %v2558 = vld [vmem:[%s5 + $0x10] sm:$0xff]
    %v2559 = vld [vmem:[%s5 + $0x18] sm:$0xff]
    %vm2560 = vcmask 31744
    %v2562 = vsel %vm2560, %v2556, 0
    %v2565 = vsel %vm2560, %v2557, 0
    %v2568 = vsel %vm2560, %v2558, 0
    %v2571 = vsel %vm2560, %v2559, 0
    %vm2573 = vcmask 1043456
    %v2575 = vsel %vm2573, %v2227, 0
    %v2578 = vsel %vm2573, %v2331, 0
    %v2580 = vand.u32 %v2578, 4294901760
    %2581 = vmatprep.subr.mxu0 %v2580
    %v2582 = vand.u32 %v2575, 4294901760
    %2583 = vmatpush1.msra.mxu0 %v2582
    %2584 = vmatprep.subr.mxu0 0.0
    %2585 = vmatpush1.msra.mxu0 0.0
    %2586 = vmatprep.subr.mxu0 0.0
    %2587 = vmatpush1.msra.mxu0 0.0
    %2588 = vmatprep.subr.mxu0 0.0
    %2589 = vmatpush1.msra.mxu0 0.0
    %2590 = vmatprep.subr.mxu0 0.0
    %2591 = vmatpush1.msra.mxu0 0.0
    %2592 = vmatprep.subr.mxu0 0.0
    %2593 = vmatpush1.msra.mxu0 0.0
    %2594 = vmatprep.subr.mxu0 0.0
    %2595 = vmatpush1.msra.mxu0 0.0
    %2596 = vmatprep.subr.mxu0 0.0
    %2597 = vmatpush1.msra.mxu0 0.0
    %2598 = vmatprep.subr.mxu0 0.0
    %2599 = vmatpush1.msra.mxu0 0.0
    %2600 = vmatprep.subr.mxu0 0.0
    %2601 = vmatpush1.msra.mxu0 0.0
    %2602 = vmatprep.subr.mxu0 0.0
    %2603 = vmatpush1.msra.mxu0 0.0
    %2604 = vmatprep.subr.mxu0 0.0
    %2605 = vmatpush1.msra.mxu0 0.0
    %2606 = vmatprep.subr.mxu0 0.0
    %2607 = vmatpush1.msra.mxu0 0.0
    %2608 = vmatprep.subr.mxu0 0.0
    %2609 = vmatpush1.msra.mxu0 0.0
    %2610 = vmatprep.subr.mxu0 0.0
    %2611 = vmatpush1.msra.mxu0 0.0
    %2612 = vmatprep.subr.mxu0 0.0
    %2613 = vmatpush1.msra.mxu0 0.0
    %2614 = vmatprep.subr.mxu0 0.0
    %2615 = vmatpush1.msra.mxu0 0.0
    %2616 = vmatprep.subr.mxu0 0.0
    %2617 = vmatpush1.msra.mxu0 0.0
    %2618 = vmatprep.subr.mxu0 0.0
    %2619 = vmatpush1.msra.mxu0 0.0
    %2620 = vmatprep.subr.mxu0 0.0
    %2621 = vmatpush1.msra.mxu0 0.0
    %2622 = vmatprep.subr.mxu0 0.0
    %2623 = vmatpush1.msra.mxu0 0.0
    %2624 = vmatprep.subr.mxu0 0.0
    %2625 = vmatpush1.msra.mxu0 0.0
    %2626 = vmatprep.subr.mxu0 0.0
    %2627 = vmatpush1.msra.mxu0 0.0
    %2628 = vmatprep.subr.mxu0 0.0
    %2629 = vmatpush1.msra.mxu0 0.0
    %2630 = vmatprep.subr.mxu0 0.0
    %2631 = vmatpush1.msra.mxu0 0.0
    %2632 = vmatprep.subr.mxu0 0.0
    %2633 = vmatpush1.msra.mxu0 0.0
    %2634 = vmatprep.subr.mxu0 0.0
    %2635 = vmatpush1.msra.mxu0 0.0
    %2636 = vmatprep.subr.mxu0 0.0
    %2637 = vmatpush1.msra.mxu0 0.0
    %2638 = vmatprep.subr.mxu0 0.0
    %2639 = vmatpush1.msra.mxu0 0.0
    %2640 = vmatprep.subr.mxu0 0.0
    %2641 = vmatpush1.msra.mxu0 0.0
    %2642 = vmatprep.subr.mxu0 0.0
    %2643 = vmatpush1.msra.mxu0 0.0
    %2644 = vmatprep.subr.mxu0 0.0
    %2645 = vmatpush1.msra.mxu0 0.0
    %2646 = vmatprep.mubr.f32.mxu0 0.0
    %v2647 = vand.u32 %v2562, 4294901760
    %v2648 = vsub.f32 %v2562, %v2647
    %v2649 = vand.u32 %v2648, 4294901760
    %v2650 = vsub.f32 %v2648, %v2649
    %v2651 = vand.u32 %v2650, 4294901760
    %2652 = vmatmul.mubr.f32.gmra.mrb[0].mxu0 %v2651
    %v2653 = vpop.f32.mrb[0].mxu0
    %v2654 = vadd.f32 0.0, %v2653
    %v2655 = vpop.f32.mrb[0].mxu0
    %v2656 = vadd.f32 0.0, %v2655
    %2657 = vmatprep.mubr.f32.mxu0 0.0
    %v2658 = vand.u32 %v2565, 4294901760
    %v2659 = vsub.f32 %v2565, %v2658
    %v2660 = vand.u32 %v2659, 4294901760
    %v2661 = vsub.f32 %v2659, %v2660
    %v2662 = vand.u32 %v2661, 4294901760
    %2663 = vmatmul.mubr.f32.gmra.mrb[0].mxu0 %v2662
    %v2664 = vpop.f32.mrb[0].mxu0
    %v2665 = vadd.f32 0.0, %v2664
    %v2666 = vpop.f32.mrb[0].mxu0
    %v2667 = vadd.f32 0.0, %v2666
    %2668 = vmatprep.mubr.f32.mxu0 0.0
    %v2669 = vand.u32 %v2568, 4294901760
    %v2670 = vsub.f32 %v2568, %v2669
    %v2671 = vand.u32 %v2670, 4294901760
    %v2672 = vsub.f32 %v2670, %v2671
    %v2673 = vand.u32 %v2672, 4294901760
    %2674 = vmatmul.mubr.f32.gmra.mrb[0].mxu0 %v2673
    %v2675 = vpop.f32.mrb[0].mxu0
    %v2676 = vadd.f32 0.0, %v2675
    %v2677 = vpop.f32.mrb[0].mxu0
    %v2678 = vadd.f32 0.0, %v2677
    %2679 = vmatprep.mubr.f32.mxu0 0.0
    %v2680 = vand.u32 %v2571, 4294901760
    %v2681 = vsub.f32 %v2571, %v2680
    %v2682 = vand.u32 %v2681, 4294901760
    %v2683 = vsub.f32 %v2681, %v2682
    %v2684 = vand.u32 %v2683, 4294901760
    %2685 = vmatmul.mubr.f32.gmra.mrb[0].mxu0 %v2684
    %v2686 = vpop.f32.mrb[0].mxu0
    %v2687 = vadd.f32 0.0, %v2686
    %v2688 = vpop.f32.mrb[0].mxu0
    %v2689 = vadd.f32 0.0, %v2688
    %2690 = vdwg.mxu0
    %v2691 = vand.u32 %v2578, 4294901760
    %v2692 = vsub.f32 %v2578, %v2691
    %v2693 = vand.u32 %v2692, 4294901760
    %v2694 = vsub.f32 %v2692, %v2693
    %v2695 = vand.u32 %v2694, 4294901760
    %2696 = vmatprep.subr.mxu0 %v2695
    %v2697 = vand.u32 %v2575, 4294901760
    %v2698 = vsub.f32 %v2575, %v2697
    %v2699 = vand.u32 %v2698, 4294901760
    %v2700 = vsub.f32 %v2698, %v2699
    %v2701 = vand.u32 %v2700, 4294901760
    %2702 = vmatpush1.msra.mxu0 %v2701
    %2703 = vmatprep.subr.mxu0 0.0
    %2704 = vmatpush1.msra.mxu0 0.0
    %2705 = vmatprep.subr.mxu0 0.0
    %2706 = vmatpush1.msra.mxu0 0.0
    %2707 = vmatprep.subr.mxu0 0.0
    %2708 = vmatpush1.msra.mxu0 0.0
    %2709 = vmatprep.subr.mxu0 0.0
    %2710 = vmatpush1.msra.mxu0 0.0
    %2711 = vmatprep.subr.mxu0 0.0
    %2712 = vmatpush1.msra.mxu0 0.0
    %2713 = vmatprep.subr.mxu0 0.0
    %2714 = vmatpush1.msra.mxu0 0.0
    %2715 = vmatprep.subr.mxu0 0.0
    %2716 = vmatpush1.msra.mxu0 0.0
    %2717 = vmatprep.subr.mxu0 0.0
    %2718 = vmatpush1.msra.mxu0 0.0
    %2719 = vmatprep.subr.mxu0 0.0
    %2720 = vmatpush1.msra.mxu0 0.0
    %2721 = vmatprep.subr.mxu0 0.0
    %2722 = vmatpush1.msra.mxu0 0.0
    %2723 = vmatprep.subr.mxu0 0.0
    %2724 = vmatpush1.msra.mxu0 0.0
    %2725 = vmatprep.subr.mxu0 0.0
    %2726 = vmatpush1.msra.mxu0 0.0
    %2727 = vmatprep.subr.mxu0 0.0
    %2728 = vmatpush1.msra.mxu0 0.0
    %2729 = vmatprep.subr.mxu0 0.0
    %2730 = vmatpush1.msra.mxu0 0.0
    %2731 = vmatprep.subr.mxu0 0.0
    %2732 = vmatpush1.msra.mxu0 0.0
    %2733 = vmatprep.subr.mxu0 0.0
    %2734 = vmatpush1.msra.mxu0 0.0
    %2735 = vmatprep.subr.mxu0 0.0
    %2736 = vmatpush1.msra.mxu0 0.0
    %2737 = vmatprep.subr.mxu0 0.0
    %2738 = vmatpush1.msra.mxu0 0.0
    %2739 = vmatprep.subr.mxu0 0.0
    %2740 = vmatpush1.msra.mxu0 0.0
    %2741 = vmatprep.subr.mxu0 0.0
    %2742 = vmatpush1.msra.mxu0 0.0
    %2743 = vmatprep.subr.mxu0 0.0
    %2744 = vmatpush1.msra.mxu0 0.0
    %2745 = vmatprep.subr.mxu0 0.0
    %2746 = vmatpush1.msra.mxu0 0.0
    %2747 = vmatprep.subr.mxu0 0.0
    %2748 = vmatpush1.msra.mxu0 0.0
    %2749 = vmatprep.subr.mxu0 0.0
    %2750 = vmatpush1.msra.mxu0 0.0
    %2751 = vmatprep.subr.mxu0 0.0
    %2752 = vmatpush1.msra.mxu0 0.0
    %2753 = vmatprep.subr.mxu0 0.0
    %2754 = vmatpush1.msra.mxu0 0.0
    %2755 = vmatprep.subr.mxu0 0.0
    %2756 = vmatpush1.msra.mxu0 0.0
    %2757 = vmatprep.subr.mxu0 0.0
    %2758 = vmatpush1.msra.mxu0 0.0
    %2759 = vmatprep.subr.mxu0 0.0
    %2760 = vmatpush1.msra.mxu0 0.0
    %2761 = vmatprep.subr.mxu0 0.0
    %2762 = vmatpush1.msra.mxu0 0.0
    %2763 = vmatprep.subr.mxu0 0.0
    %2764 = vmatpush1.msra.mxu0 0.0
    %2765 = vmatprep.mubr.f32.mxu0 0.0
    %v2766 = vand.u32 %v2562, 4294901760
    %2767 = vmatmul.mubr.f32.gmra.mrb[0].mxu0 %v2766
    %v2768 = vpop.f32.mrb[0].mxu0
    %v2769 = vadd.f32 %v2654, %v2768
    %v2770 = vpop.f32.mrb[0].mxu0
    %v2771 = vadd.f32 %v2656, %v2770
    %2772 = vmatprep.mubr.f32.mxu0 0.0
    %v2773 = vand.u32 %v2565, 4294901760
    %2774 = vmatmul.mubr.f32.gmra.mrb[0].mxu0 %v2773
    %v2775 = vpop.f32.mrb[0].mxu0
    %v2776 = vadd.f32 %v2665, %v2775
    %v2777 = vpop.f32.mrb[0].mxu0
    %v2778 = vadd.f32 %v2667, %v2777
    %2779 = vmatprep.mubr.f32.mxu0 0.0
    %v2780 = vand.u32 %v2568, 4294901760
    %2781 = vmatmul.mubr.f32.gmra.mrb[0].mxu0 %v2780
    %v2782 = vpop.f32.mrb[0].mxu0
    %v2783 = vadd.f32 %v2676, %v2782
    %v2784 = vpop.f32.mrb[0].mxu0
    %v2785 = vadd.f32 %v2678, %v2784
    %2786 = vmatprep.mubr.f32.mxu0 0.0
    %v2787 = vand.u32 %v2571, 4294901760
    %2788 = vmatmul.mubr.f32.gmra.mrb[0].mxu0 %v2787
    %v2789 = vpop.f32.mrb[0].mxu0
    %v2790 = vadd.f32 %v2687, %v2789
    %v2791 = vpop.f32.mrb[0].mxu0
    %v2792 = vadd.f32 %v2689, %v2791
    %2793 = vdwg.mxu0
    %v2794 = vand.u32 %v2578, 4294901760
    %v2795 = vsub.f32 %v2578, %v2794
    %2796 = vmatprep.subr.mxu0 %v2795
    %v2797 = vand.u32 %v2575, 4294901760
    %v2798 = vsub.f32 %v2575, %v2797
    %2799 = vmatpush1.msra.mxu0 %v2798
    %2800 = vmatprep.subr.mxu0 0.0
    %2801 = vmatpush1.msra.mxu0 0.0
    %2802 = vmatprep.subr.mxu0 0.0
    %2803 = vmatpush1.msra.mxu0 0.0
    %2804 = vmatprep.subr.mxu0 0.0
    %2805 = vmatpush1.msra.mxu0 0.0
    %2806 = vmatprep.subr.mxu0 0.0
    %2807 = vmatpush1.msra.mxu0 0.0
    %2808 = vmatprep.subr.mxu0 0.0
    %2809 = vmatpush1.msra.mxu0 0.0
    %2810 = vmatprep.subr.mxu0 0.0
    %2811 = vmatpush1.msra.mxu0 0.0
    %2812 = vmatprep.subr.mxu0 0.0
    %2813 = vmatpush1.msra.mxu0 0.0
    %2814 = vmatprep.subr.mxu0 0.0
    %2815 = vmatpush1.msra.mxu0 0.0
    %2816 = vmatprep.subr.mxu0 0.0
    %2817 = vmatpush1.msra.mxu0 0.0
    %2818 = vmatprep.subr.mxu0 0.0
    %2819 = vmatpush1.msra.mxu0 0.0
    %2820 = vmatprep.subr.mxu0 0.0
    %2821 = vmatpush1.msra.mxu0 0.0
    %2822 = vmatprep.subr.mxu0 0.0
    %2823 = vmatpush1.msra.mxu0 0.0
    %2824 = vmatprep.subr.mxu0 0.0
    %2825 = vmatpush1.msra.mxu0 0.0
    %2826 = vmatprep.subr.mxu0 0.0
    %2827 = vmatpush1.msra.mxu0 0.0
    %2828 = vmatprep.subr.mxu0 0.0
    %2829 = vmatpush1.msra.mxu0 0.0
    %2830 = vmatprep.subr.mxu0 0.0
    %2831 = vmatpush1.msra.mxu0 0.0
    %2832 = vmatprep.subr.mxu0 0.0
    %2833 = vmatpush1.msra.mxu0 0.0
    %2834 = vmatprep.subr.mxu0 0.0
    %2835 = vmatpush1.msra.mxu0 0.0
    %2836 = vmatprep.subr.mxu0 0.0
    %2837 = vmatpush1.msra.mxu0 0.0
    %2838 = vmatprep.subr.mxu0 0.0
    %2839 = vmatpush1.msra.mxu0 0.0
    %2840 = vmatprep.subr.mxu0 0.0
    %2841 = vmatpush1.msra.mxu0 0.0
    %2842 = vmatprep.subr.mxu0 0.0
    %2843 = vmatpush1.msra.mxu0 0.0
    %2844 = vmatprep.subr.mxu0 0.0
    %2845 = vmatpush1.msra.mxu0 0.0
    %2846 = vmatprep.subr.mxu0 0.0
    %2847 = vmatpush1.msra.mxu0 0.0
    %2848 = vmatprep.subr.mxu0 0.0
    %2849 = vmatpush1.msra.mxu0 0.0
    %2850 = vmatprep.subr.mxu0 0.0
    %2851 = vmatpush1.msra.mxu0 0.0
    %2852 = vmatprep.subr.mxu0 0.0
    %2853 = vmatpush1.msra.mxu0 0.0
    %2854 = vmatprep.subr.mxu0 0.0
    %2855 = vmatpush1.msra.mxu0 0.0
    %2856 = vmatprep.subr.mxu0 0.0
    %2857 = vmatpush1.msra.mxu0 0.0
    %2858 = vmatprep.subr.mxu0 0.0
    %2859 = vmatpush1.msra.mxu0 0.0
    %2860 = vmatprep.subr.mxu0 0.0
    %2861 = vmatpush1.msra.mxu0 0.0
    %2862 = vmatprep.mubr.f32.mxu0 0.0
    %v2863 = vand.u32 %v2562, 4294901760
    %v2864 = vsub.f32 %v2562, %v2863
    %2865 = vmatmul.mubr.f32.gmra.mrb[0].mxu0 %v2864
    %v2866 = vpop.f32.mrb[0].mxu0
    %v2867 = vadd.f32 %v2769, %v2866
    %v2868 = vpop.f32.mrb[0].mxu0
    %v2869 = vadd.f32 %v2771, %v2868
    %2870 = vmatprep.mubr.f32.mxu0 0.0
    %v2871 = vand.u32 %v2565, 4294901760
    %v2872 = vsub.f32 %v2565, %v2871
    %2873 = vmatmul.mubr.f32.gmra.mrb[0].mxu0 %v2872
    %v2874 = vpop.f32.mrb[0].mxu0
    %v2875 = vadd.f32 %v2776, %v2874
    %v2876 = vpop.f32.mrb[0].mxu0
    %v2877 = vadd.f32 %v2778, %v2876
    %2878 = vmatprep.mubr.f32.mxu0 0.0
    %v2879 = vand.u32 %v2568, 4294901760
    %v2880 = vsub.f32 %v2568, %v2879
    %2881 = vmatmul.mubr.f32.gmra.mrb[0].mxu0 %v2880
    %v2882 = vpop.f32.mrb[0].mxu0
    %v2883 = vadd.f32 %v2783, %v2882
    %v2884 = vpop.f32.mrb[0].mxu0
    %v2885 = vadd.f32 %v2785, %v2884
    %2886 = vmatprep.mubr.f32.mxu0 0.0
    %v2887 = vand.u32 %v2571, 4294901760
    %v2888 = vsub.f32 %v2571, %v2887
    %2889 = vmatmul.mubr.f32.gmra.mrb[0].mxu0 %v2888
    %v2890 = vpop.f32.mrb[0].mxu0
    %v2891 = vadd.f32 %v2790, %v2890
    %v2892 = vpop.f32.mrb[0].mxu0
    %v2893 = vadd.f32 %v2792, %v2892
    %2894 = vdwg.mxu0
    %v2895 = vand.u32 %v2578, 4294901760
    %2896 = vmatprep.subr.mxu0 %v2895
    %v2897 = vand.u32 %v2575, 4294901760
    %2898 = vmatpush1.msra.mxu0 %v2897
    %2899 = vmatprep.subr.mxu0 0.0
    %2900 = vmatpush1.msra.mxu0 0.0
    %2901 = vmatprep.subr.mxu0 0.0
    %2902 = vmatpush1.msra.mxu0 0.0
    %2903 = vmatprep.subr.mxu0 0.0
    %2904 = vmatpush1.msra.mxu0 0.0
    %2905 = vmatprep.subr.mxu0 0.0
    %2906 = vmatpush1.msra.mxu0 0.0
    %2907 = vmatprep.subr.mxu0 0.0
    %2908 = vmatpush1.msra.mxu0 0.0
    %2909 = vmatprep.subr.mxu0 0.0
    %2910 = vmatpush1.msra.mxu0 0.0
    %2911 = vmatprep.subr.mxu0 0.0
    %2912 = vmatpush1.msra.mxu0 0.0
    %2913 = vmatprep.subr.mxu0 0.0
    %2914 = vmatpush1.msra.mxu0 0.0
    %2915 = vmatprep.subr.mxu0 0.0
    %2916 = vmatpush1.msra.mxu0 0.0
    %2917 = vmatprep.subr.mxu0 0.0
    %2918 = vmatpush1.msra.mxu0 0.0
    %2919 = vmatprep.subr.mxu0 0.0
    %2920 = vmatpush1.msra.mxu0 0.0
    %2921 = vmatprep.subr.mxu0 0.0
    %2922 = vmatpush1.msra.mxu0 0.0
    %2923 = vmatprep.subr.mxu0 0.0
    %2924 = vmatpush1.msra.mxu0 0.0
    %2925 = vmatprep.subr.mxu0 0.0
    %2926 = vmatpush1.msra.mxu0 0.0
    %2927 = vmatprep.subr.mxu0 0.0
    %2928 = vmatpush1.msra.mxu0 0.0
    %2929 = vmatprep.subr.mxu0 0.0
    %2930 = vmatpush1.msra.mxu0 0.0
    %2931 = vmatprep.subr.mxu0 0.0
    %2932 = vmatpush1.msra.mxu0 0.0
    %2933 = vmatprep.subr.mxu0 0.0
    %2934 = vmatpush1.msra.mxu0 0.0
    %2935 = vmatprep.subr.mxu0 0.0
    %2936 = vmatpush1.msra.mxu0 0.0
    %2937 = vmatprep.subr.mxu0 0.0
    %2938 = vmatpush1.msra.mxu0 0.0
    %2939 = vmatprep.subr.mxu0 0.0
    %2940 = vmatpush1.msra.mxu0 0.0
    %2941 = vmatprep.subr.mxu0 0.0
    %2942 = vmatpush1.msra.mxu0 0.0
    %2943 = vmatprep.subr.mxu0 0.0
    %2944 = vmatpush1.msra.mxu0 0.0
    %2945 = vmatprep.subr.mxu0 0.0
    %2946 = vmatpush1.msra.mxu0 0.0
    %2947 = vmatprep.subr.mxu0 0.0
    %2948 = vmatpush1.msra.mxu0 0.0
    %2949 = vmatprep.subr.mxu0 0.0
    %2950 = vmatpush1.msra.mxu0 0.0
    %2951 = vmatprep.subr.mxu0 0.0
    %2952 = vmatpush1.msra.mxu0 0.0
    %2953 = vmatprep.subr.mxu0 0.0
    %2954 = vmatpush1.msra.mxu0 0.0
    %2955 = vmatprep.subr.mxu0 0.0
    %2956 = vmatpush1.msra.mxu0 0.0
    %2957 = vmatprep.subr.mxu0 0.0
    %2958 = vmatpush1.msra.mxu0 0.0
    %2959 = vmatprep.subr.mxu0 0.0
    %2960 = vmatpush1.msra.mxu0 0.0
    %2961 = vmatprep.mubr.f32.mxu0 0.0
    %v2962 = vand.u32 %v2562, 4294901760
    %v2963 = vsub.f32 %v2562, %v2962
    %v2964 = vand.u32 %v2963, 4294901760
    %2965 = vmatmul.mubr.f32.gmra.mrb[0].mxu0 %v2964
    %v2966 = vpop.f32.mrb[0].mxu0
    %v2967 = vadd.f32 %v2867, %v2966
    %v2968 = vpop.f32.mrb[0].mxu0
    %v2969 = vadd.f32 %v2869, %v2968
    %2970 = vmatprep.mubr.f32.mxu0 0.0
    %v2971 = vand.u32 %v2565, 4294901760
    %v2972 = vsub.f32 %v2565, %v2971
    %v2973 = vand.u32 %v2972, 4294901760
    %2974 = vmatmul.mubr.f32.gmra.mrb[0].mxu0 %v2973
    %v2975 = vpop.f32.mrb[0].mxu0
    %v2976 = vadd.f32 %v2875, %v2975
    %v2977 = vpop.f32.mrb[0].mxu0
    %v2978 = vadd.f32 %v2877, %v2977
    %2979 = vmatprep.mubr.f32.mxu0 0.0
    %v2980 = vand.u32 %v2568, 4294901760
    %v2981 = vsub.f32 %v2568, %v2980
    %v2982 = vand.u32 %v2981, 4294901760
    %2983 = vmatmul.mubr.f32.gmra.mrb[0].mxu0 %v2982
    %v2984 = vpop.f32.mrb[0].mxu0
    %v2985 = vadd.f32 %v2883, %v2984
    %v2986 = vpop.f32.mrb[0].mxu0
    %v2987 = vadd.f32 %v2885, %v2986
    %2988 = vmatprep.mubr.f32.mxu0 0.0
    %v2989 = vand.u32 %v2571, 4294901760
    %v2990 = vsub.f32 %v2571, %v2989
    %v2991 = vand.u32 %v2990, 4294901760
    %2992 = vmatmul.mubr.f32.gmra.mrb[0].mxu0 %v2991
    %v2993 = vpop.f32.mrb[0].mxu0
    %v2994 = vadd.f32 %v2891, %v2993
    %v2995 = vpop.f32.mrb[0].mxu0
    %v2996 = vadd.f32 %v2893, %v2995
    %2997 = vdwg.mxu0
    %v2998 = vand.u32 %v2578, 4294901760
    %v2999 = vsub.f32 %v2578, %v2998
    %v3000 = vand.u32 %v2999, 4294901760
    %3001 = vmatprep.subr.mxu0 %v3000
    %v3002 = vand.u32 %v2575, 4294901760
    %v3003 = vsub.f32 %v2575, %v3002
    %v3004 = vand.u32 %v3003, 4294901760
    %3005 = vmatpush1.msra.mxu0 %v3004
    %3006 = vmatprep.subr.mxu0 0.0
    %3007 = vmatpush1.msra.mxu0 0.0
    %3008 = vmatprep.subr.mxu0 0.0
    %3009 = vmatpush1.msra.mxu0 0.0
    %3010 = vmatprep.subr.mxu0 0.0
    %3011 = vmatpush1.msra.mxu0 0.0
    %3012 = vmatprep.subr.mxu0 0.0
    %3013 = vmatpush1.msra.mxu0 0.0
    %3014 = vmatprep.subr.mxu0 0.0
    %3015 = vmatpush1.msra.mxu0 0.0
    %3016 = vmatprep.subr.mxu0 0.0
    %3017 = vmatpush1.msra.mxu0 0.0
    %3018 = vmatprep.subr.mxu0 0.0
    %3019 = vmatpush1.msra.mxu0 0.0
    %3020 = vmatprep.subr.mxu0 0.0
    %3021 = vmatpush1.msra.mxu0 0.0
    %3022 = vmatprep.subr.mxu0 0.0
    %3023 = vmatpush1.msra.mxu0 0.0
    %3024 = vmatprep.subr.mxu0 0.0
    %3025 = vmatpush1.msra.mxu0 0.0
    %3026 = vmatprep.subr.mxu0 0.0
    %3027 = vmatpush1.msra.mxu0 0.0
    %3028 = vmatprep.subr.mxu0 0.0
    %3029 = vmatpush1.msra.mxu0 0.0
    %3030 = vmatprep.subr.mxu0 0.0
    %3031 = vmatpush1.msra.mxu0 0.0
    %3032 = vmatprep.subr.mxu0 0.0
    %3033 = vmatpush1.msra.mxu0 0.0
    %3034 = vmatprep.subr.mxu0 0.0
    %3035 = vmatpush1.msra.mxu0 0.0
    %3036 = vmatprep.subr.mxu0 0.0
    %3037 = vmatpush1.msra.mxu0 0.0
    %3038 = vmatprep.subr.mxu0 0.0
    %3039 = vmatpush1.msra.mxu0 0.0
    %3040 = vmatprep.subr.mxu0 0.0
    %3041 = vmatpush1.msra.mxu0 0.0
    %3042 = vmatprep.subr.mxu0 0.0
    %3043 = vmatpush1.msra.mxu0 0.0
    %3044 = vmatprep.subr.mxu0 0.0
    %3045 = vmatpush1.msra.mxu0 0.0
    %3046 = vmatprep.subr.mxu0 0.0
    %3047 = vmatpush1.msra.mxu0 0.0
    %3048 = vmatprep.subr.mxu0 0.0
    %3049 = vmatpush1.msra.mxu0 0.0
    %3050 = vmatprep.subr.mxu0 0.0
    %3051 = vmatpush1.msra.mxu0 0.0
    %3052 = vmatprep.subr.mxu0 0.0
    %3053 = vmatpush1.msra.mxu0 0.0
    %3054 = vmatprep.subr.mxu0 0.0
    %3055 = vmatpush1.msra.mxu0 0.0
    %3056 = vmatprep.subr.mxu0 0.0
    %3057 = vmatpush1.msra.mxu0 0.0
    %3058 = vmatprep.subr.mxu0 0.0
    %3059 = vmatpush1.msra.mxu0 0.0
    %3060 = vmatprep.subr.mxu0 0.0
    %3061 = vmatpush1.msra.mxu0 0.0
    %3062 = vmatprep.subr.mxu0 0.0
    %3063 = vmatpush1.msra.mxu0 0.0
    %3064 = vmatprep.subr.mxu0 0.0
    %3065 = vmatpush1.msra.mxu0 0.0
    %3066 = vmatprep.subr.mxu0 0.0
    %3067 = vmatpush1.msra.mxu0 0.0
    %3068 = vmatprep.mubr.f32.mxu0 0.0
    %v3069 = vand.u32 %v2562, 4294901760
    %3070 = vmatmul.mubr.f32.gmra.mrb[0].mxu0 %v3069
    %v3071 = vpop.f32.mrb[0].mxu0
    %v3072 = vadd.f32 %v2967, %v3071
    %v3073 = vpop.f32.mrb[0].mxu0
    %v3074 = vadd.f32 %v2969, %v3073
    %3075 = vmatprep.mubr.f32.mxu0 0.0
    %v3076 = vand.u32 %v2565, 4294901760
    %3077 = vmatmul.mubr.f32.gmra.mrb[0].mxu0 %v3076
    %v3078 = vpop.f32.mrb[0].mxu0
    %v3079 = vadd.f32 %v2976, %v3078
    %v3080 = vpop.f32.mrb[0].mxu0
    %v3081 = vadd.f32 %v2978, %v3080
    %3082 = vmatprep.mubr.f32.mxu0 0.0
    %v3083 = vand.u32 %v2568, 4294901760
    %3084 = vmatmul.mubr.f32.gmra.mrb[0].mxu0 %v3083
    %v3085 = vpop.f32.mrb[0].mxu0
    %v3086 = vadd.f32 %v2985, %v3085
    %v3087 = vpop.f32.mrb[0].mxu0
    %v3088 = vadd.f32 %v2987, %v3087
    %3089 = vmatprep.mubr.f32.mxu0 0.0
    %v3090 = vand.u32 %v2571, 4294901760
    %3091 = vmatmul.mubr.f32.gmra.mrb[0].mxu0 %v3090
    %v3092 = vpop.f32.mrb[0].mxu0
    %v3093 = vadd.f32 %v2994, %v3092
    %v3094 = vpop.f32.mrb[0].mxu0
    %v3095 = vadd.f32 %v2996, %v3094
    %3096 = vdwg.mxu0
    %v3097 = vand.u32 %v2578, 4294901760
    %3098 = vmatprep.subr.mxu0 %v3097
    %v3099 = vand.u32 %v2575, 4294901760
    %3100 = vmatpush1.msra.mxu0 %v3099
    %3101 = vmatprep.subr.mxu0 0.0
    %3102 = vmatpush1.msra.mxu0 0.0
    %3103 = vmatprep.subr.mxu0 0.0
    %3104 = vmatpush1.msra.mxu0 0.0
    %3105 = vmatprep.subr.mxu0 0.0
    %3106 = vmatpush1.msra.mxu0 0.0
    %3107 = vmatprep.subr.mxu0 0.0
    %3108 = vmatpush1.msra.mxu0 0.0
    %3109 = vmatprep.subr.mxu0 0.0
    %3110 = vmatpush1.msra.mxu0 0.0
    %3111 = vmatprep.subr.mxu0 0.0
    %3112 = vmatpush1.msra.mxu0 0.0
    %3113 = vmatprep.subr.mxu0 0.0
    %3114 = vmatpush1.msra.mxu0 0.0
    %3115 = vmatprep.subr.mxu0 0.0
    %3116 = vmatpush1.msra.mxu0 0.0
    %3117 = vmatprep.subr.mxu0 0.0
    %3118 = vmatpush1.msra.mxu0 0.0
    %3119 = vmatprep.subr.mxu0 0.0
    %3120 = vmatpush1.msra.mxu0 0.0
    %3121 = vmatprep.subr.mxu0 0.0
    %3122 = vmatpush1.msra.mxu0 0.0
    %3123 = vmatprep.subr.mxu0 0.0
    %3124 = vmatpush1.msra.mxu0 0.0
    %3125 = vmatprep.subr.mxu0 0.0
    %3126 = vmatpush1.msra.mxu0 0.0
    %3127 = vmatprep.subr.mxu0 0.0
    %3128 = vmatpush1.msra.mxu0 0.0
    %3129 = vmatprep.subr.mxu0 0.0
    %3130 = vmatpush1.msra.mxu0 0.0
    %3131 = vmatprep.subr.mxu0 0.0
    %3132 = vmatpush1.msra.mxu0 0.0
    %3133 = vmatprep.subr.mxu0 0.0
    %3134 = vmatpush1.msra.mxu0 0.0
    %3135 = vmatprep.subr.mxu0 0.0
    %3136 = vmatpush1.msra.mxu0 0.0
    %3137 = vmatprep.subr.mxu0 0.0
    %3138 = vmatpush1.msra.mxu0 0.0
    %3139 = vmatprep.subr.mxu0 0.0
    %3140 = vmatpush1.msra.mxu0 0.0
    %3141 = vmatprep.subr.mxu0 0.0
    %3142 = vmatpush1.msra.mxu0 0.0
    %3143 = vmatprep.subr.mxu0 0.0
    %3144 = vmatpush1.msra.mxu0 0.0
    %3145 = vmatprep.subr.mxu0 0.0
    %3146 = vmatpush1.msra.mxu0 0.0
    %3147 = vmatprep.subr.mxu0 0.0
    %3148 = vmatpush1.msra.mxu0 0.0
    %3149 = vmatprep.subr.mxu0 0.0
    %3150 = vmatpush1.msra.mxu0 0.0
    %3151 = vmatprep.subr.mxu0 0.0
    %3152 = vmatpush1.msra.mxu0 0.0
    %3153 = vmatprep.subr.mxu0 0.0
    %3154 = vmatpush1.msra.mxu0 0.0
    %3155 = vmatprep.subr.mxu0 0.0
    %3156 = vmatpush1.msra.mxu0 0.0
    %3157 = vmatprep.subr.mxu0 0.0
    %3158 = vmatpush1.msra.mxu0 0.0
    %3159 = vmatprep.subr.mxu0 0.0
    %3160 = vmatpush1.msra.mxu0 0.0
    %3161 = vmatprep.subr.mxu0 0.0
    %3162 = vmatpush1.msra.mxu0 0.0
    %3163 = vmatprep.mubr.f32.mxu0 0.0
    %v3164 = vand.u32 %v2562, 4294901760
    %3165 = vmatmul.mubr.f32.gmra.mrb[0].mxu0 %v3164
    %v3166 = vpop.f32.mrb[0].mxu0
    %v3167 = vadd.f32 %v3072, %v3166
    %v3168 = vpop.f32.mrb[0].mxu0
    %v3169 = vadd.f32 %v3074, %v3168
    %3170 = vmatprep.mubr.f32.mxu0 0.0
    %v3171 = vand.u32 %v2565, 4294901760
    %3172 = vmatmul.mubr.f32.gmra.mrb[0].mxu0 %v3171
    %v3173 = vpop.f32.mrb[0].mxu0
    %v3174 = vadd.f32 %v3079, %v3173
    %v3175 = vpop.f32.mrb[0].mxu0
    %v3176 = vadd.f32 %v3081, %v3175
    %3177 = vmatprep.mubr.f32.mxu0 0.0
    %v3178 = vand.u32 %v2568, 4294901760
    %3179 = vmatmul.mubr.f32.gmra.mrb[0].mxu0 %v3178
    %v3180 = vpop.f32.mrb[0].mxu0
    %v3181 = vadd.f32 %v3086, %v3180
    %v3182 = vpop.f32.mrb[0].mxu0
    %v3183 = vadd.f32 %v3088, %v3182
    %3184 = vmatprep.mubr.f32.mxu0 0.0
    %v3185 = vand.u32 %v2571, 4294901760
    %3186 = vmatmul.mubr.f32.gmra.mrb[0].mxu0 %v3185
    %v3187 = vpop.f32.mrb[0].mxu0
    %v3188 = vadd.f32 %v3093, %v3187
    %v3189 = vpop.f32.mrb[0].mxu0
    %v3190 = vadd.f32 %v3095, %v3189
    %3191 = vdwg.mxu0
    %vm3192 = vcmask 285696
    %v3194 = vsel %vm3192, %v2112, 0
    %v3197 = vsel %vm3192, %v2113, 0
    %v3200 = vsel %vm3192, %v2114, 0
    %v3203 = vsel %vm3192, %v2115, 0
    %vm3205 = vcmask 1042432
    %v3207 = vsel %vm3205, %v2110, 0
    %v3210 = vsel %vm3205, %v2111, 0
    %v3212 = vand.u32 %v2103, 4294901760
    %3213 = vmatprep.subr.mxu0 %v3212
    %v3214 = vand.u32 %v2102, 4294901760
    %3215 = vmatpush1.msra.mxu0 %v3214
    %v3216 = vand.u32 %v2105, 4294901760
    %3217 = vmatprep.subr.mxu0 %v3216
    %v3218 = vand.u32 %v2104, 4294901760
    %3219 = vmatpush1.msra.mxu0 %v3218
    %v3220 = vand.u32 %v2107, 4294901760
    %3221 = vmatprep.subr.mxu0 %v3220
    %v3222 = vand.u32 %v2106, 4294901760
    %3223 = vmatpush1.msra.mxu0 %v3222
    %v3224 = vand.u32 %v2109, 4294901760
    %3225 = vmatprep.subr.mxu0 %v3224
    %v3226 = vand.u32 %v2108, 4294901760
    %3227 = vmatpush1.msra.mxu0 %v3226
    %v3228 = vand.u32 %v3210, 4294901760
    %3229 = vmatprep.subr.mxu0 %v3228
    %v3230 = vand.u32 %v3207, 4294901760
    %3231 = vmatpush1.msra.mxu0 %v3230
    %3232 = vmatprep.subr.mxu0 0.0
    %3233 = vmatpush1.msra.mxu0 0.0
    %3234 = vmatprep.subr.mxu0 0.0
    %3235 = vmatpush1.msra.mxu0 0.0
    %3236 = vmatprep.subr.mxu0 0.0
    %3237 = vmatpush1.msra.mxu0 0.0
    %3238 = vmatprep.subr.mxu0 0.0
    %3239 = vmatpush1.msra.mxu0 0.0
    %3240 = vmatprep.subr.mxu0 0.0
    %3241 = vmatpush1.msra.mxu0 0.0
    %3242 = vmatprep.subr.mxu0 0.0
    %3243 = vmatpush1.msra.mxu0 0.0
    %3244 = vmatprep.subr.mxu0 0.0
    %3245 = vmatpush1.msra.mxu0 0.0
    %3246 = vmatprep.subr.mxu0 0.0
    %3247 = vmatpush1.msra.mxu0 0.0
    %3248 = vmatprep.subr.mxu0 0.0
    %3249 = vmatpush1.msra.mxu0 0.0
    %3250 = vmatprep.subr.mxu0 0.0
    %3251 = vmatpush1.msra.mxu0 0.0
    %3252 = vmatprep.subr.mxu0 0.0
    %3253 = vmatpush1.msra.mxu0 0.0
    %3254 = vmatprep.subr.mxu0 0.0
    %3255 = vmatpush1.msra.mxu0 0.0
    %3256 = vmatprep.subr.mxu0 0.0
    %3257 = vmatpush1.msra.mxu0 0.0
    %3258 = vmatprep.subr.mxu0 0.0
    %3259 = vmatpush1.msra.mxu0 0.0
    %3260 = vmatprep.subr.mxu0 0.0
    %3261 = vmatpush1.msra.mxu0 0.0
    %3262 = vmatprep.subr.mxu0 0.0
    %3263 = vmatpush1.msra.mxu0 0.0
    %3264 = vmatprep.subr.mxu0 0.0
    %3265 = vmatpush1.msra.mxu0 0.0
    %3266 = vmatprep.subr.mxu0 0.0
    %3267 = vmatpush1.msra.mxu0 0.0
    %3268 = vmatprep.subr.mxu0 0.0
    %3269 = vmatpush1.msra.mxu0 0.0
    %3270 = vmatprep.subr.mxu0 0.0
    %3271 = vmatpush1.msra.mxu0 0.0
    %3272 = vmatprep.subr.mxu0 0.0
    %3273 = vmatpush1.msra.mxu0 0.0
    %3274 = vmatprep.subr.mxu0 0.0
    %3275 = vmatpush1.msra.mxu0 0.0
    %3276 = vmatprep.subr.mxu0 0.0
    %3277 = vmatpush1.msra.mxu0 0.0
    %3278 = vmatprep.subr.mxu0 0.0
    %3279 = vmatpush1.msra.mxu0 0.0
    %3280 = vmatprep.subr.mxu0 0.0
    %3281 = vmatpush1.msra.mxu0 0.0
    %3282 = vmatprep.subr.mxu0 0.0
    %3283 = vmatpush1.msra.mxu0 0.0
    %3284 = vmatprep.subr.mxu0 0.0
    %3285 = vmatpush1.msra.mxu0 0.0
    %3286 = vmatprep.mubr.f32.mxu0 0.0
    %v3287 = vand.u32 %v3194, 4294901760
    %v3288 = vsub.f32 %v3194, %v3287
    %v3289 = vand.u32 %v3288, 4294901760
    %v3290 = vsub.f32 %v3288, %v3289
    %v3291 = vand.u32 %v3290, 4294901760
    %3292 = vmatmul.mubr.f32.gmra.mrb[0].mxu0 %v3291
    %v3293 = vpop.f32.mrb[0].mxu0
    %v3294 = vadd.f32 %v3167, %v3293
    %v3295 = vpop.f32.mrb[0].mxu0
    %v3296 = vadd.f32 %v3169, %v3295
    %3297 = vmatprep.mubr.f32.mxu0 0.0
    %v3298 = vand.u32 %v3197, 4294901760
    %v3299 = vsub.f32 %v3197, %v3298
    %v3300 = vand.u32 %v3299, 4294901760
    %v3301 = vsub.f32 %v3299, %v3300
    %v3302 = vand.u32 %v3301, 4294901760
    %3303 = vmatmul.mubr.f32.gmra.mrb[0].mxu0 %v3302
    %v3304 = vpop.f32.mrb[0].mxu0
    %v3305 = vadd.f32 %v3174, %v3304
    %v3306 = vpop.f32.mrb[0].mxu0
    %v3307 = vadd.f32 %v3176, %v3306
    %3308 = vmatprep.mubr.f32.mxu0 0.0
    %v3309 = vand.u32 %v3200, 4294901760
    %v3310 = vsub.f32 %v3200, %v3309
    %v3311 = vand.u32 %v3310, 4294901760
    %v3312 = vsub.f32 %v3310, %v3311
    %v3313 = vand.u32 %v3312, 4294901760
    %3314 = vmatmul.mubr.f32.gmra.mrb[0].mxu0 %v3313
    %v3315 = vpop.f32.mrb[0].mxu0
    %v3316 = vadd.f32 %v3181, %v3315
    %v3317 = vpop.f32.mrb[0].mxu0
    %v3318 = vadd.f32 %v3183, %v3317
    %3319 = vmatprep.mubr.f32.mxu0 0.0
    %v3320 = vand.u32 %v3203, 4294901760
    %v3321 = vsub.f32 %v3203, %v3320
    %v3322 = vand.u32 %v3321, 4294901760
    %v3323 = vsub.f32 %v3321, %v3322
    %v3324 = vand.u32 %v3323, 4294901760
    %3325 = vmatmul.mubr.f32.gmra.mrb[0].mxu0 %v3324
    %v3326 = vpop.f32.mrb[0].mxu0
    %v3327 = vadd.f32 %v3188, %v3326
    %v3328 = vpop.f32.mrb[0].mxu0
    %v3329 = vadd.f32 %v3190, %v3328
    %3330 = vdwg.mxu0
    %v3331 = vand.u32 %v2103, 4294901760
    %v3332 = vsub.f32 %v2103, %v3331
    %v3333 = vand.u32 %v3332, 4294901760
    %v3334 = vsub.f32 %v3332, %v3333
    %v3335 = vand.u32 %v3334, 4294901760
    %3336 = vmatprep.subr.mxu0 %v3335
    %v3337 = vand.u32 %v2102, 4294901760
    %v3338 = vsub.f32 %v2102, %v3337
    %v3339 = vand.u32 %v3338, 4294901760
    %v3340 = vsub.f32 %v3338, %v3339
    %v3341 = vand.u32 %v3340, 4294901760
    %3342 = vmatpush1.msra.mxu0 %v3341
    %v3343 = vand.u32 %v2105, 4294901760
    %v3344 = vsub.f32 %v2105, %v3343
    %v3345 = vand.u32 %v3344, 4294901760
    %v3346 = vsub.f32 %v3344, %v3345
    %v3347 = vand.u32 %v3346, 4294901760
    %3348 = vmatprep.subr.mxu0 %v3347
    %v3349 = vand.u32 %v2104, 4294901760
    %v3350 = vsub.f32 %v2104, %v3349
    %v3351 = vand.u32 %v3350, 4294901760
    %v3352 = vsub.f32 %v3350, %v3351
    %v3353 = vand.u32 %v3352, 4294901760
    %3354 = vmatpush1.msra.mxu0 %v3353
    %v3355 = vand.u32 %v2107, 4294901760
    %v3356 = vsub.f32 %v2107, %v3355
    %v3357 = vand.u32 %v3356, 4294901760
    %v3358 = vsub.f32 %v3356, %v3357
    %v3359 = vand.u32 %v3358, 4294901760
    %3360 = vmatprep.subr.mxu0 %v3359
    %v3361 = vand.u32 %v2106, 4294901760
    %v3362 = vsub.f32 %v2106, %v3361
    %v3363 = vand.u32 %v3362, 4294901760
    %v3364 = vsub.f32 %v3362, %v3363
    %v3365 = vand.u32 %v3364, 4294901760
    %3366 = vmatpush1.msra.mxu0 %v3365
    %v3367 = vand.u32 %v2109, 4294901760
    %v3368 = vsub.f32 %v2109, %v3367
    %v3369 = vand.u32 %v3368, 4294901760
    %v3370 = vsub.f32 %v3368, %v3369
    %v3371 = vand.u32 %v3370, 4294901760
    %3372 = vmatprep.subr.mxu0 %v3371
    %v3373 = vand.u32 %v2108, 4294901760
    %v3374 = vsub.f32 %v2108, %v3373
    %v3375 = vand.u32 %v3374, 4294901760
    %v3376 = vsub.f32 %v3374, %v3375
    %v3377 = vand.u32 %v3376, 4294901760
    %3378 = vmatpush1.msra.mxu0 %v3377
    %v3379 = vand.u32 %v3210, 4294901760
    %v3380 = vsub.f32 %v3210, %v3379
    %v3381 = vand.u32 %v3380, 4294901760
    %v3382 = vsub.f32 %v3380, %v3381
    %v3383 = vand.u32 %v3382, 4294901760
    %3384 = vmatprep.subr.mxu0 %v3383
    %v3385 = vand.u32 %v3207, 4294901760
    %v3386 = vsub.f32 %v3207, %v3385
    %v3387 = vand.u32 %v3386, 4294901760
    %v3388 = vsub.f32 %v3386, %v3387
    %v3389 = vand.u32 %v3388, 4294901760
    %3390 = vmatpush1.msra.mxu0 %v3389
    %3391 = vmatprep.subr.mxu0 0.0
    %3392 = vmatpush1.msra.mxu0 0.0
    %3393 = vmatprep.subr.mxu0 0.0
    %3394 = vmatpush1.msra.mxu0 0.0
    %3395 = vmatprep.subr.mxu0 0.0
    %3396 = vmatpush1.msra.mxu0 0.0
    %3397 = vmatprep.subr.mxu0 0.0
    %3398 = vmatpush1.msra.mxu0 0.0
    %3399 = vmatprep.subr.mxu0 0.0
    %3400 = vmatpush1.msra.mxu0 0.0
    %3401 = vmatprep.subr.mxu0 0.0
    %3402 = vmatpush1.msra.mxu0 0.0
    %3403 = vmatprep.subr.mxu0 0.0
    %3404 = vmatpush1.msra.mxu0 0.0
    %3405 = vmatprep.subr.mxu0 0.0
    %3406 = vmatpush1.msra.mxu0 0.0
    %3407 = vmatprep.subr.mxu0 0.0
    %3408 = vmatpush1.msra.mxu0 0.0
    %3409 = vmatprep.subr.mxu0 0.0
    %3410 = vmatpush1.msra.mxu0 0.0
    %3411 = vmatprep.subr.mxu0 0.0
    %3412 = vmatpush1.msra.mxu0 0.0
    %3413 = vmatprep.subr.mxu0 0.0
    %3414 = vmatpush1.msra.mxu0 0.0
    %3415 = vmatprep.subr.mxu0 0.0
    %3416 = vmatpush1.msra.mxu0 0.0
    %3417 = vmatprep.subr.mxu0 0.0
    %3418 = vmatpush1.msra.mxu0 0.0
    %3419 = vmatprep.subr.mxu0 0.0
    %3420 = vmatpush1.msra.mxu0 0.0
    %3421 = vmatprep.subr.mxu0 0.0
    %3422 = vmatpush1.msra.mxu0 0.0
    %3423 = vmatprep.subr.mxu0 0.0
    %3424 = vmatpush1.msra.mxu0 0.0
    %3425 = vmatprep.subr.mxu0 0.0
    %3426 = vmatpush1.msra.mxu0 0.0
    %3427 = vmatprep.subr.mxu0 0.0
    %3428 = vmatpush1.msra.mxu0 0.0
    %3429 = vmatprep.subr.mxu0 0.0
    %3430 = vmatpush1.msra.mxu0 0.0
    %3431 = vmatprep.subr.mxu0 0.0
    %3432 = vmatpush1.msra.mxu0 0.0
    %3433 = vmatprep.subr.mxu0 0.0
    %3434 = vmatpush1.msra.mxu0 0.0
    %3435 = vmatprep.subr.mxu0 0.0
    %3436 = vmatpush1.msra.mxu0 0.0
    %3437 = vmatprep.subr.mxu0 0.0
    %3438 = vmatpush1.msra.mxu0 0.0
    %3439 = vmatprep.subr.mxu0 0.0
    %3440 = vmatpush1.msra.mxu0 0.0
    %3441 = vmatprep.subr.mxu0 0.0
    %3442 = vmatpush1.msra.mxu0 0.0
    %3443 = vmatprep.subr.mxu0 0.0
    %3444 = vmatpush1.msra.mxu0 0.0
    %3445 = vmatprep.mubr.f32.mxu0 0.0
    %v3446 = vand.u32 %v3194, 4294901760
    %3447 = vmatmul.mubr.f32.gmra.mrb[0].mxu0 %v3446
    %v3448 = vpop.f32.mrb[0].mxu0
    %v3449 = vadd.f32 %v3294, %v3448
    %v3450 = vpop.f32.mrb[0].mxu0
    %v3451 = vadd.f32 %v3296, %v3450
    %3452 = vmatprep.mubr.f32.mxu0 0.0
    %v3453 = vand.u32 %v3197, 4294901760
    %3454 = vmatmul.mubr.f32.gmra.mrb[0].mxu0 %v3453
    %v3455 = vpop.f32.mrb[0].mxu0
    %v3456 = vadd.f32 %v3305, %v3455
    %v3457 = vpop.f32.mrb[0].mxu0
    %v3458 = vadd.f32 %v3307, %v3457
    %3459 = vmatprep.mubr.f32.mxu0 0.0
    %v3460 = vand.u32 %v3200, 4294901760
    %3461 = vmatmul.mubr.f32.gmra.mrb[0].mxu0 %v3460
    %v3462 = vpop.f32.mrb[0].mxu0
    %v3463 = vadd.f32 %v3316, %v3462
    %v3464 = vpop.f32.mrb[0].mxu0
    %v3465 = vadd.f32 %v3318, %v3464
    %3466 = vmatprep.mubr.f32.mxu0 0.0
    %v3467 = vand.u32 %v3203, 4294901760
    %3468 = vmatmul.mubr.f32.gmra.mrb[0].mxu0 %v3467
    %v3469 = vpop.f32.mrb[0].mxu0
    %v3470 = vadd.f32 %v3327, %v3469
    %v3471 = vpop.f32.mrb[0].mxu0
    %v3472 = vadd.f32 %v3329, %v3471
    %3473 = vdwg.mxu0
    %v3474 = vand.u32 %v2103, 4294901760
    %v3475 = vsub.f32 %v2103, %v3474
    %3476 = vmatprep.subr.mxu0 %v3475
    %v3477 = vand.u32 %v2102, 4294901760
    %v3478 = vsub.f32 %v2102, %v3477
    %3479 = vmatpush1.msra.mxu0 %v3478
    %v3480 = vand.u32 %v2105, 4294901760
    %v3481 = vsub.f32 %v2105, %v3480
    %3482 = vmatprep.subr.mxu0 %v3481
    %v3483 = vand.u32 %v2104, 4294901760
    %v3484 = vsub.f32 %v2104, %v3483
    %3485 = vmatpush1.msra.mxu0 %v3484
    %v3486 = vand.u32 %v2107, 4294901760
    %v3487 = vsub.f32 %v2107, %v3486
    %3488 = vmatprep.subr.mxu0 %v3487
    %v3489 = vand.u32 %v2106, 4294901760
    %v3490 = vsub.f32 %v2106, %v3489
    %3491 = vmatpush1.msra.mxu0 %v3490
    %v3492 = vand.u32 %v2109, 4294901760
    %v3493 = vsub.f32 %v2109, %v3492
    %3494 = vmatprep.subr.mxu0 %v3493
    %v3495 = vand.u32 %v2108, 4294901760
    %v3496 = vsub.f32 %v2108, %v3495
    %3497 = vmatpush1.msra.mxu0 %v3496
    %v3498 = vand.u32 %v3210, 4294901760
    %v3499 = vsub.f32 %v3210, %v3498
    %3500 = vmatprep.subr.mxu0 %v3499
    %v3501 = vand.u32 %v3207, 4294901760
    %v3502 = vsub.f32 %v3207, %v3501
    %3503 = vmatpush1.msra.mxu0 %v3502
    %3504 = vmatprep.subr.mxu0 0.0
    %3505 = vmatpush1.msra.mxu0 0.0
    %3506 = vmatprep.subr.mxu0 0.0
    %3507 = vmatpush1.msra.mxu0 0.0
    %3508 = vmatprep.subr.mxu0 0.0
    %3509 = vmatpush1.msra.mxu0 0.0
    %3510 = vmatprep.subr.mxu0 0.0
    %3511 = vmatpush1.msra.mxu0 0.0
    %3512 = vmatprep.subr.mxu0 0.0
    %3513 = vmatpush1.msra.mxu0 0.0
    %3514 = vmatprep.subr.mxu0 0.0
    %3515 = vmatpush1.msra.mxu0 0.0
    %3516 = vmatprep.subr.mxu0 0.0
    %3517 = vmatpush1.msra.mxu0 0.0
    %3518 = vmatprep.subr.mxu0 0.0
    %3519 = vmatpush1.msra.mxu0 0.0
    %3520 = vmatprep.subr.mxu0 0.0
    %3521 = vmatpush1.msra.mxu0 0.0
    %3522 = vmatprep.subr.mxu0 0.0
    %3523 = vmatpush1.msra.mxu0 0.0
    %3524 = vmatprep.subr.mxu0 0.0
    %3525 = vmatpush1.msra.mxu0 0.0
    %3526 = vmatprep.subr.mxu0 0.0
    %3527 = vmatpush1.msra.mxu0 0.0
    %3528 = vmatprep.subr.mxu0 0.0
    %3529 = vmatpush1.msra.mxu0 0.0
    %3530 = vmatprep.subr.mxu0 0.0
    %3531 = vmatpush1.msra.mxu0 0.0
    %3532 = vmatprep.subr.mxu0 0.0
    %3533 = vmatpush1.msra.mxu0 0.0
    %3534 = vmatprep.subr.mxu0 0.0
    %3535 = vmatpush1.msra.mxu0 0.0
    %3536 = vmatprep.subr.mxu0 0.0
    %3537 = vmatpush1.msra.mxu0 0.0
    %3538 = vmatprep.subr.mxu0 0.0
    %3539 = vmatpush1.msra.mxu0 0.0
    %3540 = vmatprep.subr.mxu0 0.0
    %3541 = vmatpush1.msra.mxu0 0.0
    %3542 = vmatprep.subr.mxu0 0.0
    %3543 = vmatpush1.msra.mxu0 0.0
    %3544 = vmatprep.subr.mxu0 0.0
    %3545 = vmatpush1.msra.mxu0 0.0
    %3546 = vmatprep.subr.mxu0 0.0
    %3547 = vmatpush1.msra.mxu0 0.0
    %3548 = vmatprep.subr.mxu0 0.0
    %3549 = vmatpush1.msra.mxu0 0.0
    %3550 = vmatprep.subr.mxu0 0.0
    %3551 = vmatpush1.msra.mxu0 0.0
    %3552 = vmatprep.subr.mxu0 0.0
    %3553 = vmatpush1.msra.mxu0 0.0
    %3554 = vmatprep.subr.mxu0 0.0
    %3555 = vmatpush1.msra.mxu0 0.0
    %3556 = vmatprep.subr.mxu0 0.0
    %3557 = vmatpush1.msra.mxu0 0.0
    %3558 = vmatprep.mubr.f32.mxu0 0.0
    %v3559 = vand.u32 %v3194, 4294901760
    %v3560 = vsub.f32 %v3194, %v3559
    %3561 = vmatmul.mubr.f32.gmra.mrb[0].mxu0 %v3560
    %v3562 = vpop.f32.mrb[0].mxu0
    %v3563 = vadd.f32 %v3449, %v3562
    %v3564 = vpop.f32.mrb[0].mxu0
    %v3565 = vadd.f32 %v3451, %v3564
    %3566 = vmatprep.mubr.f32.mxu0 0.0
    %v3567 = vand.u32 %v3197, 4294901760
    %v3568 = vsub.f32 %v3197, %v3567
    %3569 = vmatmul.mubr.f32.gmra.mrb[0].mxu0 %v3568
    %v3570 = vpop.f32.mrb[0].mxu0
    %v3571 = vadd.f32 %v3456, %v3570
    %v3572 = vpop.f32.mrb[0].mxu0
    %v3573 = vadd.f32 %v3458, %v3572
    %3574 = vmatprep.mubr.f32.mxu0 0.0
    %v3575 = vand.u32 %v3200, 4294901760
    %v3576 = vsub.f32 %v3200, %v3575
    %3577 = vmatmul.mubr.f32.gmra.mrb[0].mxu0 %v3576
    %v3578 = vpop.f32.mrb[0].mxu0
    %v3579 = vadd.f32 %v3463, %v3578
    %v3580 = vpop.f32.mrb[0].mxu0
    %v3581 = vadd.f32 %v3465, %v3580
    %3582 = vmatprep.mubr.f32.mxu0 0.0
    %v3583 = vand.u32 %v3203, 4294901760
    %v3584 = vsub.f32 %v3203, %v3583
    %3585 = vmatmul.mubr.f32.gmra.mrb[0].mxu0 %v3584
    %v3586 = vpop.f32.mrb[0].mxu0
    %v3587 = vadd.f32 %v3470, %v3586
    %v3588 = vpop.f32.mrb[0].mxu0
    %v3589 = vadd.f32 %v3472, %v3588
    %3590 = vdwg.mxu0
    %v3591 = vand.u32 %v2103, 4294901760
    %3592 = vmatprep.subr.mxu0 %v3591
    %v3593 = vand.u32 %v2102, 4294901760
    %3594 = vmatpush1.msra.mxu0 %v3593
    %v3595 = vand.u32 %v2105, 4294901760
    %3596 = vmatprep.subr.mxu0 %v3595
    %v3597 = vand.u32 %v2104, 4294901760
    %3598 = vmatpush1.msra.mxu0 %v3597
    %v3599 = vand.u32 %v2107, 4294901760
    %3600 = vmatprep.subr.mxu0 %v3599
    %v3601 = vand.u32 %v2106, 4294901760
    %3602 = vmatpush1.msra.mxu0 %v3601
    %v3603 = vand.u32 %v2109, 4294901760
    %3604 = vmatprep.subr.mxu0 %v3603
    %v3605 = vand.u32 %v2108, 4294901760
    %3606 = vmatpush1.msra.mxu0 %v3605
    %v3607 = vand.u32 %v3210, 4294901760
    %3608 = vmatprep.subr.mxu0 %v3607
    %v3609 = vand.u32 %v3207, 4294901760
    %3610 = vmatpush1.msra.mxu0 %v3609
    %3611 = vmatprep.subr.mxu0 0.0
    %3612 = vmatpush1.msra.mxu0 0.0
    %3613 = vmatprep.subr.mxu0 0.0
    %3614 = vmatpush1.msra.mxu0 0.0
    %3615 = vmatprep.subr.mxu0 0.0
    %3616 = vmatpush1.msra.mxu0 0.0
    %3617 = vmatprep.subr.mxu0 0.0
    %3618 = vmatpush1.msra.mxu0 0.0
    %3619 = vmatprep.subr.mxu0 0.0
    %3620 = vmatpush1.msra.mxu0 0.0
    %3621 = vmatprep.subr.mxu0 0.0
    %3622 = vmatpush1.msra.mxu0 0.0
    %3623 = vmatprep.subr.mxu0 0.0
    %3624 = vmatpush1.msra.mxu0 0.0
    %3625 = vmatprep.subr.mxu0 0.0
    %3626 = vmatpush1.msra.mxu0 0.0
    %3627 = vmatprep.subr.mxu0 0.0
    %3628 = vmatpush1.msra.mxu0 0.0
    %3629 = vmatprep.subr.mxu0 0.0
    %3630 = vmatpush1.msra.mxu0 0.0
    %3631 = vmatprep.subr.mxu0 0.0
    %3632 = vmatpush1.msra.mxu0 0.0
    %3633 = vmatprep.subr.mxu0 0.0
    %3634 = vmatpush1.msra.mxu0 0.0
    %3635 = vmatprep.subr.mxu0 0.0
    %3636 = vmatpush1.msra.mxu0 0.0
    %3637 = vmatprep.subr.mxu0 0.0
    %3638 = vmatpush1.msra.mxu0 0.0
    %3639 = vmatprep.subr.mxu0 0.0
    %3640 = vmatpush1.msra.mxu0 0.0
    %3641 = vmatprep.subr.mxu0 0.0
    %3642 = vmatpush1.msra.mxu0 0.0
    %3643 = vmatprep.subr.mxu0 0.0
    %3644 = vmatpush1.msra.mxu0 0.0
    %3645 = vmatprep.subr.mxu0 0.0
    %3646 = vmatpush1.msra.mxu0 0.0
    %3647 = vmatprep.subr.mxu0 0.0
    %3648 = vmatpush1.msra.mxu0 0.0
    %3649 = vmatprep.subr.mxu0 0.0
    %3650 = vmatpush1.msra.mxu0 0.0
    %3651 = vmatprep.subr.mxu0 0.0
    %3652 = vmatpush1.msra.mxu0 0.0
    %3653 = vmatprep.subr.mxu0 0.0
    %3654 = vmatpush1.msra.mxu0 0.0
    %3655 = vmatprep.subr.mxu0 0.0
    %3656 = vmatpush1.msra.mxu0 0.0
    %3657 = vmatprep.subr.mxu0 0.0
    %3658 = vmatpush1.msra.mxu0 0.0
    %3659 = vmatprep.subr.mxu0 0.0
    %3660 = vmatpush1.msra.mxu0 0.0
    %3661 = vmatprep.subr.mxu0 0.0
    %3662 = vmatpush1.msra.mxu0 0.0
    %3663 = vmatprep.subr.mxu0 0.0
    %3664 = vmatpush1.msra.mxu0 0.0
    %3665 = vmatprep.mubr.f32.mxu0 0.0
    %v3666 = vand.u32 %v3194, 4294901760
    %v3667 = vsub.f32 %v3194, %v3666
    %v3668 = vand.u32 %v3667, 4294901760
    %3669 = vmatmul.mubr.f32.gmra.mrb[0].mxu0 %v3668
    %v3670 = vpop.f32.mrb[0].mxu0
    %v3671 = vadd.f32 %v3563, %v3670
    %v3672 = vpop.f32.mrb[0].mxu0
    %v3673 = vadd.f32 %v3565, %v3672
    %3674 = vmatprep.mubr.f32.mxu0 0.0
    %v3675 = vand.u32 %v3197, 4294901760
    %v3676 = vsub.f32 %v3197, %v3675
    %v3677 = vand.u32 %v3676, 4294901760
    %3678 = vmatmul.mubr.f32.gmra.mrb[0].mxu0 %v3677
    %v3679 = vpop.f32.mrb[0].mxu0
    %v3680 = vadd.f32 %v3571, %v3679
    %v3681 = vpop.f32.mrb[0].mxu0
    %v3682 = vadd.f32 %v3573, %v3681
    %3683 = vmatprep.mubr.f32.mxu0 0.0
    %v3684 = vand.u32 %v3200, 4294901760
    %v3685 = vsub.f32 %v3200, %v3684
    %v3686 = vand.u32 %v3685, 4294901760
    %3687 = vmatmul.mubr.f32.gmra.mrb[0].mxu0 %v3686
    %v3688 = vpop.f32.mrb[0].mxu0
    %v3689 = vadd.f32 %v3579, %v3688
    %v3690 = vpop.f32.mrb[0].mxu0
    %v3691 = vadd.f32 %v3581, %v3690
    %3692 = vmatprep.mubr.f32.mxu0 0.0
    %v3693 = vand.u32 %v3203, 4294901760
    %v3694 = vsub.f32 %v3203, %v3693
    %v3695 = vand.u32 %v3694, 4294901760
    %3696 = vmatmul.mubr.f32.gmra.mrb[0].mxu0 %v3695
    %v3697 = vpop.f32.mrb[0].mxu0
    %v3698 = vadd.f32 %v3587, %v3697
    %v3699 = vpop.f32.mrb[0].mxu0
    %v3700 = vadd.f32 %v3589, %v3699
    %3701 = vdwg.mxu0
    %v3702 = vand.u32 %v2103, 4294901760
    %v3703 = vsub.f32 %v2103, %v3702
    %v3704 = vand.u32 %v3703, 4294901760
    %3705 = vmatprep.subr.mxu0 %v3704
    %v3706 = vand.u32 %v2102, 4294901760
    %v3707 = vsub.f32 %v2102, %v3706
    %v3708 = vand.u32 %v3707, 4294901760
    %3709 = vmatpush1.msra.mxu0 %v3708
    %v3710 = vand.u32 %v2105, 4294901760
    %v3711 = vsub.f32 %v2105, %v3710
    %v3712 = vand.u32 %v3711, 4294901760
    %3713 = vmatprep.subr.mxu0 %v3712
    %v3714 = vand.u32 %v2104, 4294901760
    %v3715 = vsub.f32 %v2104, %v3714
    %v3716 = vand.u32 %v3715, 4294901760
    %3717 = vmatpush1.msra.mxu0 %v3716
    %v3718 = vand.u32 %v2107, 4294901760
    %v3719 = vsub.f32 %v2107, %v3718
    %v3720 = vand.u32 %v3719, 4294901760
    %3721 = vmatprep.subr.mxu0 %v3720
    %v3722 = vand.u32 %v2106, 4294901760
    %v3723 = vsub.f32 %v2106, %v3722
    %v3724 = vand.u32 %v3723, 4294901760
    %3725 = vmatpush1.msra.mxu0 %v3724
    %v3726 = vand.u32 %v2109, 4294901760
    %v3727 = vsub.f32 %v2109, %v3726
    %v3728 = vand.u32 %v3727, 4294901760
    %3729 = vmatprep.subr.mxu0 %v3728
    %v3730 = vand.u32 %v2108, 4294901760
    %v3731 = vsub.f32 %v2108, %v3730
    %v3732 = vand.u32 %v3731, 4294901760
    %3733 = vmatpush1.msra.mxu0 %v3732
    %v3734 = vand.u32 %v3210, 4294901760
    %v3735 = vsub.f32 %v3210, %v3734
    %v3736 = vand.u32 %v3735, 4294901760
    %3737 = vmatprep.subr.mxu0 %v3736
    %v3738 = vand.u32 %v3207, 4294901760
    %v3739 = vsub.f32 %v3207, %v3738
    %v3740 = vand.u32 %v3739, 4294901760
    %3741 = vmatpush1.msra.mxu0 %v3740
    %3742 = vmatprep.subr.mxu0 0.0
    %3743 = vmatpush1.msra.mxu0 0.0
    %3744 = vmatprep.subr.mxu0 0.0
    %3745 = vmatpush1.msra.mxu0 0.0
    %3746 = vmatprep.subr.mxu0 0.0
    %3747 = vmatpush1.msra.mxu0 0.0
    %3748 = vmatprep.subr.mxu0 0.0
    %3749 = vmatpush1.msra.mxu0 0.0
    %3750 = vmatprep.subr.mxu0 0.0
    %3751 = vmatpush1.msra.mxu0 0.0
    %3752 = vmatprep.subr.mxu0 0.0
    %3753 = vmatpush1.msra.mxu0 0.0
    %3754 = vmatprep.subr.mxu0 0.0
    %3755 = vmatpush1.msra.mxu0 0.0
    %3756 = vmatprep.subr.mxu0 0.0
    %3757 = vmatpush1.msra.mxu0 0.0
    %3758 = vmatprep.subr.mxu0 0.0
    %3759 = vmatpush1.msra.mxu0 0.0
    %3760 = vmatprep.subr.mxu0 0.0
    %3761 = vmatpush1.msra.mxu0 0.0
    %3762 = vmatprep.subr.mxu0 0.0
    %3763 = vmatpush1.msra.mxu0 0.0
    %3764 = vmatprep.subr.mxu0 0.0
    %3765 = vmatpush1.msra.mxu0 0.0
    %3766 = vmatprep.subr.mxu0 0.0
    %3767 = vmatpush1.msra.mxu0 0.0
    %3768 = vmatprep.subr.mxu0 0.0
    %3769 = vmatpush1.msra.mxu0 0.0
    %3770 = vmatprep.subr.mxu0 0.0
    %3771 = vmatpush1.msra.mxu0 0.0
    %3772 = vmatprep.subr.mxu0 0.0
    %3773 = vmatpush1.msra.mxu0 0.0
    %3774 = vmatprep.subr.mxu0 0.0
    %3775 = vmatpush1.msra.mxu0 0.0
    %3776 = vmatprep.subr.mxu0 0.0
    %3777 = vmatpush1.msra.mxu0 0.0
    %3778 = vmatprep.subr.mxu0 0.0
    %3779 = vmatpush1.msra.mxu0 0.0
    %3780 = vmatprep.subr.mxu0 0.0
    %3781 = vmatpush1.msra.mxu0 0.0
    %3782 = vmatprep.subr.mxu0 0.0
    %3783 = vmatpush1.msra.mxu0 0.0
    %3784 = vmatprep.subr.mxu0 0.0
    %3785 = vmatpush1.msra.mxu0 0.0
    %3786 = vmatprep.subr.mxu0 0.0
    %3787 = vmatpush1.msra.mxu0 0.0
    %3788 = vmatprep.subr.mxu0 0.0
    %3789 = vmatpush1.msra.mxu0 0.0
    %3790 = vmatprep.subr.mxu0 0.0
    %3791 = vmatpush1.msra.mxu0 0.0
    %3792 = vmatprep.subr.mxu0 0.0
    %3793 = vmatpush1.msra.mxu0 0.0
    %3794 = vmatprep.subr.mxu0 0.0
    %3795 = vmatpush1.msra.mxu0 0.0
    %3796 = vmatprep.mubr.f32.mxu0 0.0
    %v3797 = vand.u32 %v3194, 4294901760
    %3798 = vmatmul.mubr.f32.gmra.mrb[0].mxu0 %v3797
    %v3799 = vpop.f32.mrb[0].mxu0
    %v3800 = vadd.f32 %v3671, %v3799
    %v3801 = vpop.f32.mrb[0].mxu0
    %v3802 = vadd.f32 %v3673, %v3801
    %3803 = vmatprep.mubr.f32.mxu0 0.0
    %v3804 = vand.u32 %v3197, 4294901760
    %3805 = vmatmul.mubr.f32.gmra.mrb[0].mxu0 %v3804
    %v3806 = vpop.f32.mrb[0].mxu0
    %v3807 = vadd.f32 %v3680, %v3806
    %v3808 = vpop.f32.mrb[0].mxu0
    %v3809 = vadd.f32 %v3682, %v3808
    %3810 = vmatprep.mubr.f32.mxu0 0.0
    %v3811 = vand.u32 %v3200, 4294901760
    %3812 = vmatmul.mubr.f32.gmra.mrb[0].mxu0 %v3811
    %v3813 = vpop.f32.mrb[0].mxu0
    %v3814 = vadd.f32 %v3689, %v3813
    %v3815 = vpop.f32.mrb[0].mxu0
    %v3816 = vadd.f32 %v3691, %v3815
    %3817 = vmatprep.mubr.f32.mxu0 0.0
    %v3818 = vand.u32 %v3203, 4294901760
    %3819 = vmatmul.mubr.f32.gmra.mrb[0].mxu0 %v3818
    %v3820 = vpop.f32.mrb[0].mxu0
    %v3821 = vadd.f32 %v3698, %v3820
    %v3822 = vpop.f32.mrb[0].mxu0
    %v3823 = vadd.f32 %v3700, %v3822
    %3824 = vdwg.mxu0
    %v3825 = vand.u32 %v2103, 4294901760
    %3826 = vmatprep.subr.mxu0 %v3825
    %v3827 = vand.u32 %v2102, 4294901760
    %3828 = vmatpush1.msra.mxu0 %v3827
    %v3829 = vand.u32 %v2105, 4294901760
    %3830 = vmatprep.subr.mxu0 %v3829
    %v3831 = vand.u32 %v2104, 4294901760
    %3832 = vmatpush1.msra.mxu0 %v3831
    %v3833 = vand.u32 %v2107, 4294901760
    %3834 = vmatprep.subr.mxu0 %v3833
    %v3835 = vand.u32 %v2106, 4294901760
    %3836 = vmatpush1.msra.mxu0 %v3835
    %v3837 = vand.u32 %v2109, 4294901760
    %3838 = vmatprep.subr.mxu0 %v3837
    %v3839 = vand.u32 %v2108, 4294901760
    %3840 = vmatpush1.msra.mxu0 %v3839
    %v3841 = vand.u32 %v3210, 4294901760
    %3842 = vmatprep.subr.mxu0 %v3841
    %v3843 = vand.u32 %v3207, 4294901760
    %3844 = vmatpush1.msra.mxu0 %v3843
    %3845 = vmatprep.subr.mxu0 0.0
    %3846 = vmatpush1.msra.mxu0 0.0
    %3847 = vmatprep.subr.mxu0 0.0
    %3848 = vmatpush1.msra.mxu0 0.0
    %3849 = vmatprep.subr.mxu0 0.0
    %3850 = vmatpush1.msra.mxu0 0.0
    %3851 = vmatprep.subr.mxu0 0.0
    %3852 = vmatpush1.msra.mxu0 0.0
    %3853 = vmatprep.subr.mxu0 0.0
    %3854 = vmatpush1.msra.mxu0 0.0
    %3855 = vmatprep.subr.mxu0 0.0
    %3856 = vmatpush1.msra.mxu0 0.0
    %3857 = vmatprep.subr.mxu0 0.0
    %3858 = vmatpush1.msra.mxu0 0.0
    %3859 = vmatprep.subr.mxu0 0.0
    %3860 = vmatpush1.msra.mxu0 0.0
    %3861 = vmatprep.subr.mxu0 0.0
    %3862 = vmatpush1.msra.mxu0 0.0
    %3863 = vmatprep.subr.mxu0 0.0
    %3864 = vmatpush1.msra.mxu0 0.0
    %3865 = vmatprep.subr.mxu0 0.0
    %3866 = vmatpush1.msra.mxu0 0.0
    %3867 = vmatprep.subr.mxu0 0.0
    %3868 = vmatpush1.msra.mxu0 0.0
    %3869 = vmatprep.subr.mxu0 0.0
    %3870 = vmatpush1.msra.mxu0 0.0
    %3871 = vmatprep.subr.mxu0 0.0
    %3872 = vmatpush1.msra.mxu0 0.0
    %3873 = vmatprep.subr.mxu0 0.0
    %3874 = vmatpush1.msra.mxu0 0.0
    %3875 = vmatprep.subr.mxu0 0.0
    %3876 = vmatpush1.msra.mxu0 0.0
    %3877 = vmatprep.subr.mxu0 0.0
    %3878 = vmatpush1.msra.mxu0 0.0
    %3879 = vmatprep.subr.mxu0 0.0
    %3880 = vmatpush1.msra.mxu0 0.0
    %3881 = vmatprep.subr.mxu0 0.0
    %3882 = vmatpush1.msra.mxu0 0.0
    %3883 = vmatprep.subr.mxu0 0.0
    %3884 = vmatpush1.msra.mxu0 0.0
    %3885 = vmatprep.subr.mxu0 0.0
    %3886 = vmatpush1.msra.mxu0 0.0
    %3887 = vmatprep.subr.mxu0 0.0
    %3888 = vmatpush1.msra.mxu0 0.0
    %3889 = vmatprep.subr.mxu0 0.0
    %3890 = vmatpush1.msra.mxu0 0.0
    %3891 = vmatprep.subr.mxu0 0.0
    %3892 = vmatpush1.msra.mxu0 0.0
    %3893 = vmatprep.subr.mxu0 0.0
    %3894 = vmatpush1.msra.mxu0 0.0
    %3895 = vmatprep.subr.mxu0 0.0
    %3896 = vmatpush1.msra.mxu0 0.0
    %3897 = vmatprep.subr.mxu0 0.0
    %3898 = vmatpush1.msra.mxu0 0.0
    %3899 = vmatprep.mubr.f32.mxu0 0.0
    %v3900 = vand.u32 %v3194, 4294901760
    %3901 = vmatmul.mubr.f32.gmra.mrb[0].mxu0 %v3900
    %v3902 = vpop.f32.mrb[0].mxu0
    %v3903 = vadd.f32 %v3800, %v3902
    %v3904 = vpop.f32.mrb[0].mxu0
    %v3905 = vadd.f32 %v3802, %v3904
    %3906 = vmatprep.mubr.f32.mxu0 0.0
    %v3907 = vand.u32 %v3197, 4294901760
    %3908 = vmatmul.mubr.f32.gmra.mrb[0].mxu0 %v3907
    %v3909 = vpop.f32.mrb[0].mxu0
    %v3910 = vadd.f32 %v3807, %v3909
    %v3911 = vpop.f32.mrb[0].mxu0
    %v3912 = vadd.f32 %v3809, %v3911
    %3913 = vmatprep.mubr.f32.mxu0 0.0
    %v3914 = vand.u32 %v3200, 4294901760
    %3915 = vmatmul.mubr.f32.gmra.mrb[0].mxu0 %v3914
    %v3916 = vpop.f32.mrb[0].mxu0
    %v3917 = vadd.f32 %v3814, %v3916
    %v3918 = vpop.f32.mrb[0].mxu0
    %v3919 = vadd.f32 %v3816, %v3918
    %3920 = vmatprep.mubr.f32.mxu0 0.0
    %v3921 = vand.u32 %v3203, 4294901760
    %3922 = vmatmul.mubr.f32.gmra.mrb[0].mxu0 %v3921
    %v3923 = vpop.f32.mrb[0].mxu0
    %v3924 = vadd.f32 %v3821, %v3923
    %v3925 = vpop.f32.mrb[0].mxu0
    %v3926 = vadd.f32 %v3823, %v3925
    %3927 = vdwg.mxu0
    %v3928 = vld [vmem:[%s6] sm:$0xff]
    %v3929 = vld [vmem:[%s6 + $0x8] sm:$0xff]
    %v3930 = vld [vmem:[%s6 + $0x10] sm:$0xff]
    %v3931 = vld [vmem:[%s6 + $0x18] sm:$0xff]
    %v3933 = vsel %vm2560, %v3928, 0
    %v3936 = vsel %vm2560, %v3929, 0
    %v3939 = vsel %vm2560, %v3930, 0
    %v3942 = vsel %vm2560, %v3931, 0
    %v3945 = vsel %vm2573, %v2442, 0
    %v3948 = vsel %vm2573, %v2545, 0
    %v3950 = vand.u32 %v3948, 4294901760
    %3951 = vmatprep.subr.mxu0 %v3950
    %v3952 = vand.u32 %v3945, 4294901760
    %3953 = vmatpush1.msra.mxu0 %v3952
    %3954 = vmatprep.subr.mxu0 0.0
    %3955 = vmatpush1.msra.mxu0 0.0
    %3956 = vmatprep.subr.mxu0 0.0
    %3957 = vmatpush1.msra.mxu0 0.0
    %3958 = vmatprep.subr.mxu0 0.0
    %3959 = vmatpush1.msra.mxu0 0.0
    %3960 = vmatprep.subr.mxu0 0.0
    %3961 = vmatpush1.msra.mxu0 0.0
    %3962 = vmatprep.subr.mxu0 0.0
    %3963 = vmatpush1.msra.mxu0 0.0
    %3964 = vmatprep.subr.mxu0 0.0
    %3965 = vmatpush1.msra.mxu0 0.0
    %3966 = vmatprep.subr.mxu0 0.0
    %3967 = vmatpush1.msra.mxu0 0.0
    %3968 = vmatprep.subr.mxu0 0.0
    %3969 = vmatpush1.msra.mxu0 0.0
    %3970 = vmatprep.subr.mxu0 0.0
    %3971 = vmatpush1.msra.mxu0 0.0
    %3972 = vmatprep.subr.mxu0 0.0
    %3973 = vmatpush1.msra.mxu0 0.0
    %3974 = vmatprep.subr.mxu0 0.0
    %3975 = vmatpush1.msra.mxu0 0.0
    %3976 = vmatprep.subr.mxu0 0.0
    %3977 = vmatpush1.msra.mxu0 0.0
    %3978 = vmatprep.subr.mxu0 0.0
    %3979 = vmatpush1.msra.mxu0 0.0
    %3980 = vmatprep.subr.mxu0 0.0
    %3981 = vmatpush1.msra.mxu0 0.0
    %3982 = vmatprep.subr.mxu0 0.0
    %3983 = vmatpush1.msra.mxu0 0.0
    %3984 = vmatprep.subr.mxu0 0.0
    %3985 = vmatpush1.msra.mxu0 0.0
    %3986 = vmatprep.subr.mxu0 0.0
    %3987 = vmatpush1.msra.mxu0 0.0
    %3988 = vmatprep.subr.mxu0 0.0
    %3989 = vmatpush1.msra.mxu0 0.0
    %3990 = vmatprep.subr.mxu0 0.0
    %3991 = vmatpush1.msra.mxu0 0.0
    %3992 = vmatprep.subr.mxu0 0.0
    %3993 = vmatpush1.msra.mxu0 0.0
    %3994 = vmatprep.subr.mxu0 0.0
    %3995 = vmatpush1.msra.mxu0 0.0
    %3996 = vmatprep.subr.mxu0 0.0
    %3997 = vmatpush1.msra.mxu0 0.0
    %3998 = vmatprep.subr.mxu0 0.0
    %3999 = vmatpush1.msra.mxu0 0.0
    %4000 = vmatprep.subr.mxu0 0.0
    %4001 = vmatpush1.msra.mxu0 0.0
    %4002 = vmatprep.subr.mxu0 0.0
    %4003 = vmatpush1.msra.mxu0 0.0
    %4004 = vmatprep.subr.mxu0 0.0
    %4005 = vmatpush1.msra.mxu0 0.0
    %4006 = vmatprep.subr.mxu0 0.0
    %4007 = vmatpush1.msra.mxu0 0.0
    %4008 = vmatprep.subr.mxu0 0.0
    %4009 = vmatpush1.msra.mxu0 0.0
    %4010 = vmatprep.subr.mxu0 0.0
    %4011 = vmatpush1.msra.mxu0 0.0
    %4012 = vmatprep.subr.mxu0 0.0
    %4013 = vmatpush1.msra.mxu0 0.0
    %4014 = vmatprep.subr.mxu0 0.0
    %4015 = vmatpush1.msra.mxu0 0.0
    %4016 = vmatprep.mubr.f32.mxu0 0.0
    %v4017 = vand.u32 %v3933, 4294901760
    %v4018 = vsub.f32 %v3933, %v4017
    %v4019 = vand.u32 %v4018, 4294901760
    %v4020 = vsub.f32 %v4018, %v4019
    %v4021 = vand.u32 %v4020, 4294901760
    %4022 = vmatmul.mubr.f32.gmra.mrb[0].mxu0 %v4021
    %v4023 = vpop.f32.mrb[0].mxu0
    %v4024 = vadd.f32 0.0, %v4023
    %v4025 = vpop.f32.mrb[0].mxu0
    %v4026 = vadd.f32 0.0, %v4025
    %4027 = vmatprep.mubr.f32.mxu0 0.0
    %v4028 = vand.u32 %v3936, 4294901760
    %v4029 = vsub.f32 %v3936, %v4028
    %v4030 = vand.u32 %v4029, 4294901760
    %v4031 = vsub.f32 %v4029, %v4030
    %v4032 = vand.u32 %v4031, 4294901760
    %4033 = vmatmul.mubr.f32.gmra.mrb[0].mxu0 %v4032
    %v4034 = vpop.f32.mrb[0].mxu0
    %v4035 = vadd.f32 0.0, %v4034
    %v4036 = vpop.f32.mrb[0].mxu0
    %v4037 = vadd.f32 0.0, %v4036
    %4038 = vmatprep.mubr.f32.mxu0 0.0
    %v4039 = vand.u32 %v3939, 4294901760
    %v4040 = vsub.f32 %v3939, %v4039
    %v4041 = vand.u32 %v4040, 4294901760
    %v4042 = vsub.f32 %v4040, %v4041
    %v4043 = vand.u32 %v4042, 4294901760
    %4044 = vmatmul.mubr.f32.gmra.mrb[0].mxu0 %v4043
    %v4045 = vpop.f32.mrb[0].mxu0
    %v4046 = vadd.f32 0.0, %v4045
    %v4047 = vpop.f32.mrb[0].mxu0
    %v4048 = vadd.f32 0.0, %v4047
    %4049 = vmatprep.mubr.f32.mxu0 0.0
    %v4050 = vand.u32 %v3942, 4294901760
    %v4051 = vsub.f32 %v3942, %v4050
    %v4052 = vand.u32 %v4051, 4294901760
    %v4053 = vsub.f32 %v4051, %v4052
    %v4054 = vand.u32 %v4053, 4294901760
    %4055 = vmatmul.mubr.f32.gmra.mrb[0].mxu0 %v4054
    %v4056 = vpop.f32.mrb[0].mxu0
    %v4057 = vadd.f32 0.0, %v4056
    %v4058 = vpop.f32.mrb[0].mxu0
    %v4059 = vadd.f32 0.0, %v4058
    %4060 = vdwg.mxu0
    %v4061 = vand.u32 %v3948, 4294901760
    %v4062 = vsub.f32 %v3948, %v4061
    %v4063 = vand.u32 %v4062, 4294901760
    %v4064 = vsub.f32 %v4062, %v4063
    %v4065 = vand.u32 %v4064, 4294901760
    %4066 = vmatprep.subr.mxu0 %v4065
    %v4067 = vand.u32 %v3945, 4294901760
    %v4068 = vsub.f32 %v3945, %v4067
    %v4069 = vand.u32 %v4068, 4294901760
    %v4070 = vsub.f32 %v4068, %v4069
    %v4071 = vand.u32 %v4070, 4294901760
    %4072 = vmatpush1.msra.mxu0 %v4071
    %4073 = vmatprep.subr.mxu0 0.0
    %4074 = vmatpush1.msra.mxu0 0.0
    %4075 = vmatprep.subr.mxu0 0.0
    %4076 = vmatpush1.msra.mxu0 0.0
    %4077 = vmatprep.subr.mxu0 0.0
    %4078 = vmatpush1.msra.mxu0 0.0
    %4079 = vmatprep.subr.mxu0 0.0
    %4080 = vmatpush1.msra.mxu0 0.0
    %4081 = vmatprep.subr.mxu0 0.0
    %4082 = vmatpush1.msra.mxu0 0.0
    %4083 = vmatprep.subr.mxu0 0.0
    %4084 = vmatpush1.msra.mxu0 0.0
    %4085 = vmatprep.subr.mxu0 0.0
    %4086 = vmatpush1.msra.mxu0 0.0
    %4087 = vmatprep.subr.mxu0 0.0
    %4088 = vmatpush1.msra.mxu0 0.0
    %4089 = vmatprep.subr.mxu0 0.0
    %4090 = vmatpush1.msra.mxu0 0.0
    %4091 = vmatprep.subr.mxu0 0.0
    %4092 = vmatpush1.msra.mxu0 0.0
    %4093 = vmatprep.subr.mxu0 0.0
    %4094 = vmatpush1.msra.mxu0 0.0
    %4095 = vmatprep.subr.mxu0 0.0
    %4096 = vmatpush1.msra.mxu0 0.0
    %4097 = vmatprep.subr.mxu0 0.0
    %4098 = vmatpush1.msra.mxu0 0.0
    %4099 = vmatprep.subr.mxu0 0.0
    %4100 = vmatpush1.msra.mxu0 0.0
    %4101 = vmatprep.subr.mxu0 0.0
    %4102 = vmatpush1.msra.mxu0 0.0
    %4103 = vmatprep.subr.mxu0 0.0
    %4104 = vmatpush1.msra.mxu0 0.0
    %4105 = vmatprep.subr.mxu0 0.0
    %4106 = vmatpush1.msra.mxu0 0.0
    %4107 = vmatprep.subr.mxu0 0.0
    %4108 = vmatpush1.msra.mxu0 0.0
    %4109 = vmatprep.subr.mxu0 0.0
    %4110 = vmatpush1.msra.mxu0 0.0
    %4111 = vmatprep.subr.mxu0 0.0
    %4112 = vmatpush1.msra.mxu0 0.0
    %4113 = vmatprep.subr.mxu0 0.0
    %4114 = vmatpush1.msra.mxu0 0.0
    %4115 = vmatprep.subr.mxu0 0.0
    %4116 = vmatpush1.msra.mxu0 0.0
    %4117 = vmatprep.subr.mxu0 0.0
    %4118 = vmatpush1.msra.mxu0 0.0
    %4119 = vmatprep.subr.mxu0 0.0
    %4120 = vmatpush1.msra.mxu0 0.0
    %4121 = vmatprep.subr.mxu0 0.0
    %4122 = vmatpush1.msra.mxu0 0.0
    %4123 = vmatprep.subr.mxu0 0.0
    %4124 = vmatpush1.msra.mxu0 0.0
    %4125 = vmatprep.subr.mxu0 0.0
    %4126 = vmatpush1.msra.mxu0 0.0
    %4127 = vmatprep.subr.mxu0 0.0
    %4128 = vmatpush1.msra.mxu0 0.0
    %4129 = vmatprep.subr.mxu0 0.0
    %4130 = vmatpush1.msra.mxu0 0.0
    %4131 = vmatprep.subr.mxu0 0.0
    %4132 = vmatpush1.msra.mxu0 0.0
    %4133 = vmatprep.subr.mxu0 0.0
    %4134 = vmatpush1.msra.mxu0 0.0
    %4135 = vmatprep.mubr.f32.mxu0 0.0
    %v4136 = vand.u32 %v3933, 4294901760
    %4137 = vmatmul.mubr.f32.gmra.mrb[0].mxu0 %v4136
    %v4138 = vpop.f32.mrb[0].mxu0
    %v4139 = vadd.f32 %v4024, %v4138
    %v4140 = vpop.f32.mrb[0].mxu0
    %v4141 = vadd.f32 %v4026, %v4140
    %4142 = vmatprep.mubr.f32.mxu0 0.0
    %v4143 = vand.u32 %v3936, 4294901760
    %4144 = vmatmul.mubr.f32.gmra.mrb[0].mxu0 %v4143
    %v4145 = vpop.f32.mrb[0].mxu0
    %v4146 = vadd.f32 %v4035, %v4145
    %v4147 = vpop.f32.mrb[0].mxu0
    %v4148 = vadd.f32 %v4037, %v4147
    %4149 = vmatprep.mubr.f32.mxu0 0.0
    %v4150 = vand.u32 %v3939, 4294901760
    %4151 = vmatmul.mubr.f32.gmra.mrb[0].mxu0 %v4150
    %v4152 = vpop.f32.mrb[0].mxu0
    %v4153 = vadd.f32 %v4046, %v4152
    %v4154 = vpop.f32.mrb[0].mxu0
    %v4155 = vadd.f32 %v4048, %v4154
    %4156 = vmatprep.mubr.f32.mxu0 0.0
    %v4157 = vand.u32 %v3942, 4294901760
    %4158 = vmatmul.mubr.f32.gmra.mrb[0].mxu0 %v4157
    %v4159 = vpop.f32.mrb[0].mxu0
    %v4160 = vadd.f32 %v4057, %v4159
    %v4161 = vpop.f32.mrb[0].mxu0
    %v4162 = vadd.f32 %v4059, %v4161
    %4163 = vdwg.mxu0
    %v4164 = vand.u32 %v3948, 4294901760
    %v4165 = vsub.f32 %v3948, %v4164
    %4166 = vmatprep.subr.mxu0 %v4165
    %v4167 = vand.u32 %v3945, 4294901760
    %v4168 = vsub.f32 %v3945, %v4167
    %4169 = vmatpush1.msra.mxu0 %v4168
    %4170 = vmatprep.subr.mxu0 0.0
    %4171 = vmatpush1.msra.mxu0 0.0
    %4172 = vmatprep.subr.mxu0 0.0
    %4173 = vmatpush1.msra.mxu0 0.0
    %4174 = vmatprep.subr.mxu0 0.0
    %4175 = vmatpush1.msra.mxu0 0.0
    %4176 = vmatprep.subr.mxu0 0.0
    %4177 = vmatpush1.msra.mxu0 0.0
    %4178 = vmatprep.subr.mxu0 0.0
    %4179 = vmatpush1.msra.mxu0 0.0
    %4180 = vmatprep.subr.mxu0 0.0
    %4181 = vmatpush1.msra.mxu0 0.0
    %4182 = vmatprep.subr.mxu0 0.0
    %4183 = vmatpush1.msra.mxu0 0.0
    %4184 = vmatprep.subr.mxu0 0.0
    %4185 = vmatpush1.msra.mxu0 0.0
    %4186 = vmatprep.subr.mxu0 0.0
    %4187 = vmatpush1.msra.mxu0 0.0
    %4188 = vmatprep.subr.mxu0 0.0
    %4189 = vmatpush1.msra.mxu0 0.0
    %4190 = vmatprep.subr.mxu0 0.0
    %4191 = vmatpush1.msra.mxu0 0.0
    %4192 = vmatprep.subr.mxu0 0.0
    %4193 = vmatpush1.msra.mxu0 0.0
    %4194 = vmatprep.subr.mxu0 0.0
    %4195 = vmatpush1.msra.mxu0 0.0
    %4196 = vmatprep.subr.mxu0 0.0
    %4197 = vmatpush1.msra.mxu0 0.0
    %4198 = vmatprep.subr.mxu0 0.0
    %4199 = vmatpush1.msra.mxu0 0.0
    %4200 = vmatprep.subr.mxu0 0.0
    %4201 = vmatpush1.msra.mxu0 0.0
    %4202 = vmatprep.subr.mxu0 0.0
    %4203 = vmatpush1.msra.mxu0 0.0
    %4204 = vmatprep.subr.mxu0 0.0
    %4205 = vmatpush1.msra.mxu0 0.0
    %4206 = vmatprep.subr.mxu0 0.0
    %4207 = vmatpush1.msra.mxu0 0.0
    %4208 = vmatprep.subr.mxu0 0.0
    %4209 = vmatpush1.msra.mxu0 0.0
    %4210 = vmatprep.subr.mxu0 0.0
    %4211 = vmatpush1.msra.mxu0 0.0
    %4212 = vmatprep.subr.mxu0 0.0
    %4213 = vmatpush1.msra.mxu0 0.0
    %4214 = vmatprep.subr.mxu0 0.0
    %4215 = vmatpush1.msra.mxu0 0.0
    %4216 = vmatprep.subr.mxu0 0.0
    %4217 = vmatpush1.msra.mxu0 0.0
    %4218 = vmatprep.subr.mxu0 0.0
    %4219 = vmatpush1.msra.mxu0 0.0
    %4220 = vmatprep.subr.mxu0 0.0
    %4221 = vmatpush1.msra.mxu0 0.0
    %4222 = vmatprep.subr.mxu0 0.0
    %4223 = vmatpush1.msra.mxu0 0.0
    %4224 = vmatprep.subr.mxu0 0.0
    %4225 = vmatpush1.msra.mxu0 0.0
    %4226 = vmatprep.subr.mxu0 0.0
    %4227 = vmatpush1.msra.mxu0 0.0
    %4228 = vmatprep.subr.mxu0 0.0
    %4229 = vmatpush1.msra.mxu0 0.0
    %4230 = vmatprep.subr.mxu0 0.0
    %4231 = vmatpush1.msra.mxu0 0.0
    %4232 = vmatprep.mubr.f32.mxu0 0.0
    %v4233 = vand.u32 %v3933, 4294901760
    %v4234 = vsub.f32 %v3933, %v4233
    %4235 = vmatmul.mubr.f32.gmra.mrb[0].mxu0 %v4234
    %v4236 = vpop.f32.mrb[0].mxu0
    %v4237 = vadd.f32 %v4139, %v4236
    %v4238 = vpop.f32.mrb[0].mxu0
    %v4239 = vadd.f32 %v4141, %v4238
    %4240 = vmatprep.mubr.f32.mxu0 0.0
    %v4241 = vand.u32 %v3936, 4294901760
    %v4242 = vsub.f32 %v3936, %v4241
    %4243 = vmatmul.mubr.f32.gmra.mrb[0].mxu0 %v4242
    %v4244 = vpop.f32.mrb[0].mxu0
    %v4245 = vadd.f32 %v4146, %v4244
    %v4246 = vpop.f32.mrb[0].mxu0
    %v4247 = vadd.f32 %v4148, %v4246
    %4248 = vmatprep.mubr.f32.mxu0 0.0
    %v4249 = vand.u32 %v3939, 4294901760
    %v4250 = vsub.f32 %v3939, %v4249
    %4251 = vmatmul.mubr.f32.gmra.mrb[0].mxu0 %v4250
    %v4252 = vpop.f32.mrb[0].mxu0
    %v4253 = vadd.f32 %v4153, %v4252
    %v4254 = vpop.f32.mrb[0].mxu0
    %v4255 = vadd.f32 %v4155, %v4254
    %4256 = vmatprep.mubr.f32.mxu0 0.0
    %v4257 = vand.u32 %v3942, 4294901760
    %v4258 = vsub.f32 %v3942, %v4257
    %4259 = vmatmul.mubr.f32.gmra.mrb[0].mxu0 %v4258
    %v4260 = vpop.f32.mrb[0].mxu0
    %v4261 = vadd.f32 %v4160, %v4260
    %v4262 = vpop.f32.mrb[0].mxu0
    %v4263 = vadd.f32 %v4162, %v4262
    %4264 = vdwg.mxu0
    %v4265 = vand.u32 %v3948, 4294901760
    %4266 = vmatprep.subr.mxu0 %v4265
    %v4267 = vand.u32 %v3945, 4294901760
    %4268 = vmatpush1.msra.mxu0 %v4267
    %4269 = vmatprep.subr.mxu0 0.0
    %4270 = vmatpush1.msra.mxu0 0.0
    %4271 = vmatprep.subr.mxu0 0.0
    %4272 = vmatpush1.msra.mxu0 0.0
    %4273 = vmatprep.subr.mxu0 0.0
    %4274 = vmatpush1.msra.mxu0 0.0
    %4275 = vmatprep.subr.mxu0 0.0
    %4276 = vmatpush1.msra.mxu0 0.0
    %4277 = vmatprep.subr.mxu0 0.0
    %4278 = vmatpush1.msra.mxu0 0.0
    %4279 = vmatprep.subr.mxu0 0.0
    %4280 = vmatpush1.msra.mxu0 0.0
    %4281 = vmatprep.subr.mxu0 0.0
    %4282 = vmatpush1.msra.mxu0 0.0
    %4283 = vmatprep.subr.mxu0 0.0
    %4284 = vmatpush1.msra.mxu0 0.0
    %4285 = vmatprep.subr.mxu0 0.0
    %4286 = vmatpush1.msra.mxu0 0.0
    %4287 = vmatprep.subr.mxu0 0.0
    %4288 = vmatpush1.msra.mxu0 0.0
    %4289 = vmatprep.subr.mxu0 0.0
    %4290 = vmatpush1.msra.mxu0 0.0
    %4291 = vmatprep.subr.mxu0 0.0
    %4292 = vmatpush1.msra.mxu0 0.0
    %4293 = vmatprep.subr.mxu0 0.0
    %4294 = vmatpush1.msra.mxu0 0.0
    %4295 = vmatprep.subr.mxu0 0.0
    %4296 = vmatpush1.msra.mxu0 0.0
    %4297 = vmatprep.subr.mxu0 0.0
    %4298 = vmatpush1.msra.mxu0 0.0
    %4299 = vmatprep.subr.mxu0 0.0
    %4300 = vmatpush1.msra.mxu0 0.0
    %4301 = vmatprep.subr.mxu0 0.0
    %4302 = vmatpush1.msra.mxu0 0.0
    %4303 = vmatprep.subr.mxu0 0.0
    %4304 = vmatpush1.msra.mxu0 0.0
    %4305 = vmatprep.subr.mxu0 0.0
    %4306 = vmatpush1.msra.mxu0 0.0
    %4307 = vmatprep.subr.mxu0 0.0
    %4308 = vmatpush1.msra.mxu0 0.0
    %4309 = vmatprep.subr.mxu0 0.0
    %4310 = vmatpush1.msra.mxu0 0.0
    %4311 = vmatprep.subr.mxu0 0.0
    %4312 = vmatpush1.msra.mxu0 0.0
    %4313 = vmatprep.subr.mxu0 0.0
    %4314 = vmatpush1.msra.mxu0 0.0
    %4315 = vmatprep.subr.mxu0 0.0
    %4316 = vmatpush1.msra.mxu0 0.0
    %4317 = vmatprep.subr.mxu0 0.0
    %4318 = vmatpush1.msra.mxu0 0.0
    %4319 = vmatprep.subr.mxu0 0.0
    %4320 = vmatpush1.msra.mxu0 0.0
    %4321 = vmatprep.subr.mxu0 0.0
    %4322 = vmatpush1.msra.mxu0 0.0
    %4323 = vmatprep.subr.mxu0 0.0
    %4324 = vmatpush1.msra.mxu0 0.0
    %4325 = vmatprep.subr.mxu0 0.0
    %4326 = vmatpush1.msra.mxu0 0.0
    %4327 = vmatprep.subr.mxu0 0.0
    %4328 = vmatpush1.msra.mxu0 0.0
    %4329 = vmatprep.subr.mxu0 0.0
    %4330 = vmatpush1.msra.mxu0 0.0
    %4331 = vmatprep.mubr.f32.mxu0 0.0
    %v4332 = vand.u32 %v3933, 4294901760
    %v4333 = vsub.f32 %v3933, %v4332
    %v4334 = vand.u32 %v4333, 4294901760
    %4335 = vmatmul.mubr.f32.gmra.mrb[0].mxu0 %v4334
    %v4336 = vpop.f32.mrb[0].mxu0
    %v4337 = vadd.f32 %v4237, %v4336
    %v4338 = vpop.f32.mrb[0].mxu0
    %v4339 = vadd.f32 %v4239, %v4338
    %4340 = vmatprep.mubr.f32.mxu0 0.0
    %v4341 = vand.u32 %v3936, 4294901760
    %v4342 = vsub.f32 %v3936, %v4341
    %v4343 = vand.u32 %v4342, 4294901760
    %4344 = vmatmul.mubr.f32.gmra.mrb[0].mxu0 %v4343
    %v4345 = vpop.f32.mrb[0].mxu0
    %v4346 = vadd.f32 %v4245, %v4345
    %v4347 = vpop.f32.mrb[0].mxu0
    %v4348 = vadd.f32 %v4247, %v4347
    %4349 = vmatprep.mubr.f32.mxu0 0.0
    %v4350 = vand.u32 %v3939, 4294901760
    %v4351 = vsub.f32 %v3939, %v4350
    %v4352 = vand.u32 %v4351, 4294901760
    %4353 = vmatmul.mubr.f32.gmra.mrb[0].mxu0 %v4352
    %v4354 = vpop.f32.mrb[0].mxu0
    %v4355 = vadd.f32 %v4253, %v4354
    %v4356 = vpop.f32.mrb[0].mxu0
    %v4357 = vadd.f32 %v4255, %v4356
    %4358 = vmatprep.mubr.f32.mxu0 0.0
    %v4359 = vand.u32 %v3942, 4294901760
    %v4360 = vsub.f32 %v3942, %v4359
    %v4361 = vand.u32 %v4360, 4294901760
    %4362 = vmatmul.mubr.f32.gmra.mrb[0].mxu0 %v4361
    %v4363 = vpop.f32.mrb[0].mxu0
    %v4364 = vadd.f32 %v4261, %v4363
    %v4365 = vpop.f32.mrb[0].mxu0
    %v4366 = vadd.f32 %v4263, %v4365
    %4367 = vdwg.mxu0
    %v4368 = vand.u32 %v3948, 4294901760
    %v4369 = vsub.f32 %v3948, %v4368
    %v4370 = vand.u32 %v4369, 4294901760
    %4371 = vmatprep.subr.mxu0 %v4370
    %v4372 = vand.u32 %v3945, 4294901760
    %v4373 = vsub.f32 %v3945, %v4372
    %v4374 = vand.u32 %v4373, 4294901760
    %4375 = vmatpush1.msra.mxu0 %v4374
    %4376 = vmatprep.subr.mxu0 0.0
    %4377 = vmatpush1.msra.mxu0 0.0
    %4378 = vmatprep.subr.mxu0 0.0
    %4379 = vmatpush1.msra.mxu0 0.0
    %4380 = vmatprep.subr.mxu0 0.0
    %4381 = vmatpush1.msra.mxu0 0.0
    %4382 = vmatprep.subr.mxu0 0.0
    %4383 = vmatpush1.msra.mxu0 0.0
    %4384 = vmatprep.subr.mxu0 0.0
    %4385 = vmatpush1.msra.mxu0 0.0
    %4386 = vmatprep.subr.mxu0 0.0
    %4387 = vmatpush1.msra.mxu0 0.0
    %4388 = vmatprep.subr.mxu0 0.0
    %4389 = vmatpush1.msra.mxu0 0.0
    %4390 = vmatprep.subr.mxu0 0.0
    %4391 = vmatpush1.msra.mxu0 0.0
    %4392 = vmatprep.subr.mxu0 0.0
    %4393 = vmatpush1.msra.mxu0 0.0
    %4394 = vmatprep.subr.mxu0 0.0
    %4395 = vmatpush1.msra.mxu0 0.0
    %4396 = vmatprep.subr.mxu0 0.0
    %4397 = vmatpush1.msra.mxu0 0.0
    %4398 = vmatprep.subr.mxu0 0.0
    %4399 = vmatpush1.msra.mxu0 0.0
    %4400 = vmatprep.subr.mxu0 0.0
    %4401 = vmatpush1.msra.mxu0 0.0
    %4402 = vmatprep.subr.mxu0 0.0
    %4403 = vmatpush1.msra.mxu0 0.0
    %4404 = vmatprep.subr.mxu0 0.0
    %4405 = vmatpush1.msra.mxu0 0.0
    %4406 = vmatprep.subr.mxu0 0.0
    %4407 = vmatpush1.msra.mxu0 0.0
    %4408 = vmatprep.subr.mxu0 0.0
    %4409 = vmatpush1.msra.mxu0 0.0
    %4410 = vmatprep.subr.mxu0 0.0
    %4411 = vmatpush1.msra.mxu0 0.0
    %4412 = vmatprep.subr.mxu0 0.0
    %4413 = vmatpush1.msra.mxu0 0.0
    %4414 = vmatprep.subr.mxu0 0.0
    %4415 = vmatpush1.msra.mxu0 0.0
    %4416 = vmatprep.subr.mxu0 0.0
    %4417 = vmatpush1.msra.mxu0 0.0
    %4418 = vmatprep.subr.mxu0 0.0
    %4419 = vmatpush1.msra.mxu0 0.0
    %4420 = vmatprep.subr.mxu0 0.0
    %4421 = vmatpush1.msra.mxu0 0.0
    %4422 = vmatprep.subr.mxu0 0.0
    %4423 = vmatpush1.msra.mxu0 0.0
    %4424 = vmatprep.subr.mxu0 0.0
    %4425 = vmatpush1.msra.mxu0 0.0
    %4426 = vmatprep.subr.mxu0 0.0
    %4427 = vmatpush1.msra.mxu0 0.0
    %4428 = vmatprep.subr.mxu0 0.0
    %4429 = vmatpush1.msra.mxu0 0.0
    %4430 = vmatprep.subr.mxu0 0.0
    %4431 = vmatpush1.msra.mxu0 0.0
    %4432 = vmatprep.subr.mxu0 0.0
    %4433 = vmatpush1.msra.mxu0 0.0
    %4434 = vmatprep.subr.mxu0 0.0
    %4435 = vmatpush1.msra.mxu0 0.0
    %4436 = vmatprep.subr.mxu0 0.0
    %4437 = vmatpush1.msra.mxu0 0.0
    %4438 = vmatprep.mubr.f32.mxu0 0.0
    %v4439 = vand.u32 %v3933, 4294901760
    %4440 = vmatmul.mubr.f32.gmra.mrb[0].mxu0 %v4439
    %v4441 = vpop.f32.mrb[0].mxu0
    %v4442 = vadd.f32 %v4337, %v4441
    %v4443 = vpop.f32.mrb[0].mxu0
    %v4444 = vadd.f32 %v4339, %v4443
    %4445 = vmatprep.mubr.f32.mxu0 0.0
    %v4446 = vand.u32 %v3936, 4294901760
    %4447 = vmatmul.mubr.f32.gmra.mrb[0].mxu0 %v4446
    %v4448 = vpop.f32.mrb[0].mxu0
    %v4449 = vadd.f32 %v4346, %v4448
    %v4450 = vpop.f32.mrb[0].mxu0
    %v4451 = vadd.f32 %v4348, %v4450
    %4452 = vmatprep.mubr.f32.mxu0 0.0
    %v4453 = vand.u32 %v3939, 4294901760
    %4454 = vmatmul.mubr.f32.gmra.mrb[0].mxu0 %v4453
    %v4455 = vpop.f32.mrb[0].mxu0
    %v4456 = vadd.f32 %v4355, %v4455
    %v4457 = vpop.f32.mrb[0].mxu0
    %v4458 = vadd.f32 %v4357, %v4457
    %4459 = vmatprep.mubr.f32.mxu0 0.0
    %v4460 = vand.u32 %v3942, 4294901760
    %4461 = vmatmul.mubr.f32.gmra.mrb[0].mxu0 %v4460
    %v4462 = vpop.f32.mrb[0].mxu0
    %v4463 = vadd.f32 %v4364, %v4462
    %v4464 = vpop.f32.mrb[0].mxu0
    %v4465 = vadd.f32 %v4366, %v4464
    %4466 = vdwg.mxu0
    %v4467 = vand.u32 %v3948, 4294901760
    %4468 = vmatprep.subr.mxu0 %v4467
    %v4469 = vand.u32 %v3945, 4294901760
    %4470 = vmatpush1.msra.mxu0 %v4469
    %4471 = vmatprep.subr.mxu0 0.0
    %4472 = vmatpush1.msra.mxu0 0.0
    %4473 = vmatprep.subr.mxu0 0.0
    %4474 = vmatpush1.msra.mxu0 0.0
    %4475 = vmatprep.subr.mxu0 0.0
    %4476 = vmatpush1.msra.mxu0 0.0
    %4477 = vmatprep.subr.mxu0 0.0
    %4478 = vmatpush1.msra.mxu0 0.0
    %4479 = vmatprep.subr.mxu0 0.0
    %4480 = vmatpush1.msra.mxu0 0.0
    %4481 = vmatprep.subr.mxu0 0.0
    %4482 = vmatpush1.msra.mxu0 0.0
    %4483 = vmatprep.subr.mxu0 0.0
    %4484 = vmatpush1.msra.mxu0 0.0
    %4485 = vmatprep.subr.mxu0 0.0
    %4486 = vmatpush1.msra.mxu0 0.0
    %4487 = vmatprep.subr.mxu0 0.0
    %4488 = vmatpush1.msra.mxu0 0.0
    %4489 = vmatprep.subr.mxu0 0.0
    %4490 = vmatpush1.msra.mxu0 0.0
    %4491 = vmatprep.subr.mxu0 0.0
    %4492 = vmatpush1.msra.mxu0 0.0
    %4493 = vmatprep.subr.mxu0 0.0
    %4494 = vmatpush1.msra.mxu0 0.0
    %4495 = vmatprep.subr.mxu0 0.0
    %4496 = vmatpush1.msra.mxu0 0.0
    %4497 = vmatprep.subr.mxu0 0.0
    %4498 = vmatpush1.msra.mxu0 0.0
    %4499 = vmatprep.subr.mxu0 0.0
    %4500 = vmatpush1.msra.mxu0 0.0
    %4501 = vmatprep.subr.mxu0 0.0
    %4502 = vmatpush1.msra.mxu0 0.0
    %4503 = vmatprep.subr.mxu0 0.0
    %4504 = vmatpush1.msra.mxu0 0.0
    %4505 = vmatprep.subr.mxu0 0.0
    %4506 = vmatpush1.msra.mxu0 0.0
    %4507 = vmatprep.subr.mxu0 0.0
    %4508 = vmatpush1.msra.mxu0 0.0
    %4509 = vmatprep.subr.mxu0 0.0
    %4510 = vmatpush1.msra.mxu0 0.0
    %4511 = vmatprep.subr.mxu0 0.0
    %4512 = vmatpush1.msra.mxu0 0.0
    %4513 = vmatprep.subr.mxu0 0.0
    %4514 = vmatpush1.msra.mxu0 0.0
    %4515 = vmatprep.subr.mxu0 0.0
    %4516 = vmatpush1.msra.mxu0 0.0
    %4517 = vmatprep.subr.mxu0 0.0
    %4518 = vmatpush1.msra.mxu0 0.0
    %4519 = vmatprep.subr.mxu0 0.0
    %4520 = vmatpush1.msra.mxu0 0.0
    %4521 = vmatprep.subr.mxu0 0.0
    %4522 = vmatpush1.msra.mxu0 0.0
    %4523 = vmatprep.subr.mxu0 0.0
    %4524 = vmatpush1.msra.mxu0 0.0
    %4525 = vmatprep.subr.mxu0 0.0
    %4526 = vmatpush1.msra.mxu0 0.0
    %4527 = vmatprep.subr.mxu0 0.0
    %4528 = vmatpush1.msra.mxu0 0.0
    %4529 = vmatprep.subr.mxu0 0.0
    %4530 = vmatpush1.msra.mxu0 0.0
    %4531 = vmatprep.subr.mxu0 0.0
    %4532 = vmatpush1.msra.mxu0 0.0
    %4533 = vmatprep.mubr.f32.mxu0 0.0
    %v4534 = vand.u32 %v3933, 4294901760
    %4535 = vmatmul.mubr.f32.gmra.mrb[0].mxu0 %v4534
    %v4536 = vpop.f32.mrb[0].mxu0
    %v4537 = vadd.f32 %v4442, %v4536
    %v4538 = vpop.f32.mrb[0].mxu0
    %v4539 = vadd.f32 %v4444, %v4538
    %4540 = vmatprep.mubr.f32.mxu0 0.0
    %v4541 = vand.u32 %v3936, 4294901760
    %4542 = vmatmul.mubr.f32.gmra.mrb[0].mxu0 %v4541
    %v4543 = vpop.f32.mrb[0].mxu0
    %v4544 = vadd.f32 %v4449, %v4543
    %v4545 = vpop.f32.mrb[0].mxu0
    %v4546 = vadd.f32 %v4451, %v4545
    %4547 = vmatprep.mubr.f32.mxu0 0.0
    %v4548 = vand.u32 %v3939, 4294901760
    %4549 = vmatmul.mubr.f32.gmra.mrb[0].mxu0 %v4548
    %v4550 = vpop.f32.mrb[0].mxu0
    %v4551 = vadd.f32 %v4456, %v4550
    %v4552 = vpop.f32.mrb[0].mxu0
    %v4553 = vadd.f32 %v4458, %v4552
    %4554 = vmatprep.mubr.f32.mxu0 0.0
    %v4555 = vand.u32 %v3942, 4294901760
    %4556 = vmatmul.mubr.f32.gmra.mrb[0].mxu0 %v4555
    %v4557 = vpop.f32.mrb[0].mxu0
    %v4558 = vadd.f32 %v4463, %v4557
    %v4559 = vpop.f32.mrb[0].mxu0
    %v4560 = vadd.f32 %v4465, %v4559
    %4561 = vdwg.mxu0
    %v4562 = vadd.f32 %v3903, %v4537
    %v4563 = vadd.f32 %v3905, %v4539
    %v4564 = vadd.f32 %v3910, %v4544
    %v4565 = vadd.f32 %v3912, %v4546
    %v4566 = vadd.f32 %v3917, %v4551
    %v4567 = vadd.f32 %v3919, %v4553
    %v4568 = vadd.f32 %v3924, %v4558
    %v4569 = vadd.f32 %v3926, %v4560
    %v4570 = vld [vmem:[%s7] sm:$0xff]
    %v4571 = vld [vmem:[%s7 + $0x8] sm:$0xff]
    %v4572 = vld [vmem:[%s7 + $0x10] sm:$0xff]
    %v4573 = vld [vmem:[%s7 + $0x18] sm:$0xff]
    %v4575 = vsel %vm2560, %v4570, 0
    %v4578 = vsel %vm2560, %v4571, 0
    %v4581 = vsel %vm2560, %v4572, 0
    %v4584 = vsel %vm2560, %v4573, 0
    %v4587 = vsel %vm2573, %v2554, 0
    %v4590 = vsel %vm2573, %v2555, 0
    %v4592 = vand.u32 %v4590, 4294901760
    %4593 = vmatprep.subr.mxu0 %v4592
    %v4594 = vand.u32 %v4587, 4294901760
    %4595 = vmatpush1.msra.mxu0 %v4594
    %4596 = vmatprep.subr.mxu0 0.0
    %4597 = vmatpush1.msra.mxu0 0.0
    %4598 = vmatprep.subr.mxu0 0.0
    %4599 = vmatpush1.msra.mxu0 0.0
    %4600 = vmatprep.subr.mxu0 0.0
    %4601 = vmatpush1.msra.mxu0 0.0
    %4602 = vmatprep.subr.mxu0 0.0
    %4603 = vmatpush1.msra.mxu0 0.0
    %4604 = vmatprep.subr.mxu0 0.0
    %4605 = vmatpush1.msra.mxu0 0.0
    %4606 = vmatprep.subr.mxu0 0.0
    %4607 = vmatpush1.msra.mxu0 0.0
    %4608 = vmatprep.subr.mxu0 0.0
    %4609 = vmatpush1.msra.mxu0 0.0
    %4610 = vmatprep.subr.mxu0 0.0
    %4611 = vmatpush1.msra.mxu0 0.0
    %4612 = vmatprep.subr.mxu0 0.0
    %4613 = vmatpush1.msra.mxu0 0.0
    %4614 = vmatprep.subr.mxu0 0.0
    %4615 = vmatpush1.msra.mxu0 0.0
    %4616 = vmatprep.subr.mxu0 0.0
    %4617 = vmatpush1.msra.mxu0 0.0
    %4618 = vmatprep.subr.mxu0 0.0
    %4619 = vmatpush1.msra.mxu0 0.0
    %4620 = vmatprep.subr.mxu0 0.0
    %4621 = vmatpush1.msra.mxu0 0.0
    %4622 = vmatprep.subr.mxu0 0.0
    %4623 = vmatpush1.msra.mxu0 0.0
    %4624 = vmatprep.subr.mxu0 0.0
    %4625 = vmatpush1.msra.mxu0 0.0
    %4626 = vmatprep.subr.mxu0 0.0
    %4627 = vmatpush1.msra.mxu0 0.0
    %4628 = vmatprep.subr.mxu0 0.0
    %4629 = vmatpush1.msra.mxu0 0.0
    %4630 = vmatprep.subr.mxu0 0.0
    %4631 = vmatpush1.msra.mxu0 0.0
    %4632 = vmatprep.subr.mxu0 0.0
    %4633 = vmatpush1.msra.mxu0 0.0
    %4634 = vmatprep.subr.mxu0 0.0
    %4635 = vmatpush1.msra.mxu0 0.0
    %4636 = vmatprep.subr.mxu0 0.0
    %4637 = vmatpush1.msra.mxu0 0.0
    %4638 = vmatprep.subr.mxu0 0.0
    %4639 = vmatpush1.msra.mxu0 0.0
    %4640 = vmatprep.subr.mxu0 0.0
    %4641 = vmatpush1.msra.mxu0 0.0
    %4642 = vmatprep.subr.mxu0 0.0
    %4643 = vmatpush1.msra.mxu0 0.0
    %4644 = vmatprep.subr.mxu0 0.0
    %4645 = vmatpush1.msra.mxu0 0.0
    %4646 = vmatprep.subr.mxu0 0.0
    %4647 = vmatpush1.msra.mxu0 0.0
    %4648 = vmatprep.subr.mxu0 0.0
    %4649 = vmatpush1.msra.mxu0 0.0
    %4650 = vmatprep.subr.mxu0 0.0
    %4651 = vmatpush1.msra.mxu0 0.0
    %4652 = vmatprep.subr.mxu0 0.0
    %4653 = vmatpush1.msra.mxu0 0.0
    %4654 = vmatprep.subr.mxu0 0.0
    %4655 = vmatpush1.msra.mxu0 0.0
    %4656 = vmatprep.subr.mxu0 0.0
    %4657 = vmatpush1.msra.mxu0 0.0
    %4658 = vmatprep.mubr.f32.mxu0 0.0
    %v4659 = vand.u32 %v4575, 4294901760
    %v4660 = vsub.f32 %v4575, %v4659
    %v4661 = vand.u32 %v4660, 4294901760
    %v4662 = vsub.f32 %v4660, %v4661
    %v4663 = vand.u32 %v4662, 4294901760
    %4664 = vmatmul.mubr.f32.gmra.mrb[0].mxu0 %v4663
    %v4665 = vpop.f32.mrb[0].mxu0
    %v4666 = vadd.f32 0.0, %v4665
    %v4667 = vpop.f32.mrb[0].mxu0
    %v4668 = vadd.f32 0.0, %v4667
    %4669 = vmatprep.mubr.f32.mxu0 0.0
    %v4670 = vand.u32 %v4578, 4294901760
    %v4671 = vsub.f32 %v4578, %v4670
    %v4672 = vand.u32 %v4671, 4294901760
    %v4673 = vsub.f32 %v4671, %v4672
    %v4674 = vand.u32 %v4673, 4294901760
    %4675 = vmatmul.mubr.f32.gmra.mrb[0].mxu0 %v4674
    %v4676 = vpop.f32.mrb[0].mxu0
    %v4677 = vadd.f32 0.0, %v4676
    %v4678 = vpop.f32.mrb[0].mxu0
    %v4679 = vadd.f32 0.0, %v4678
    %4680 = vmatprep.mubr.f32.mxu0 0.0
    %v4681 = vand.u32 %v4581, 4294901760
    %v4682 = vsub.f32 %v4581, %v4681
    %v4683 = vand.u32 %v4682, 4294901760
    %v4684 = vsub.f32 %v4682, %v4683
    %v4685 = vand.u32 %v4684, 4294901760
    %4686 = vmatmul.mubr.f32.gmra.mrb[0].mxu0 %v4685
    %v4687 = vpop.f32.mrb[0].mxu0
    %v4688 = vadd.f32 0.0, %v4687
    %v4689 = vpop.f32.mrb[0].mxu0
    %v4690 = vadd.f32 0.0, %v4689
    %4691 = vmatprep.mubr.f32.mxu0 0.0
    %v4692 = vand.u32 %v4584, 4294901760
    %v4693 = vsub.f32 %v4584, %v4692
    %v4694 = vand.u32 %v4693, 4294901760
    %v4695 = vsub.f32 %v4693, %v4694
    %v4696 = vand.u32 %v4695, 4294901760
    %4697 = vmatmul.mubr.f32.gmra.mrb[0].mxu0 %v4696
    %v4698 = vpop.f32.mrb[0].mxu0
    %v4699 = vadd.f32 0.0, %v4698
    %v4700 = vpop.f32.mrb[0].mxu0
    %v4701 = vadd.f32 0.0, %v4700
    %4702 = vdwg.mxu0
    %v4703 = vand.u32 %v4590, 4294901760
    %v4704 = vsub.f32 %v4590, %v4703
    %v4705 = vand.u32 %v4704, 4294901760
    %v4706 = vsub.f32 %v4704, %v4705
    %v4707 = vand.u32 %v4706, 4294901760
    %4708 = vmatprep.subr.mxu0 %v4707
    %v4709 = vand.u32 %v4587, 4294901760
    %v4710 = vsub.f32 %v4587, %v4709
    %v4711 = vand.u32 %v4710, 4294901760
    %v4712 = vsub.f32 %v4710, %v4711
    %v4713 = vand.u32 %v4712, 4294901760
    %4714 = vmatpush1.msra.mxu0 %v4713
    %4715 = vmatprep.subr.mxu0 0.0
    %4716 = vmatpush1.msra.mxu0 0.0
    %4717 = vmatprep.subr.mxu0 0.0
    %4718 = vmatpush1.msra.mxu0 0.0
    %4719 = vmatprep.subr.mxu0 0.0
    %4720 = vmatpush1.msra.mxu0 0.0
    %4721 = vmatprep.subr.mxu0 0.0
    %4722 = vmatpush1.msra.mxu0 0.0
    %4723 = vmatprep.subr.mxu0 0.0
    %4724 = vmatpush1.msra.mxu0 0.0
    %4725 = vmatprep.subr.mxu0 0.0
    %4726 = vmatpush1.msra.mxu0 0.0
    %4727 = vmatprep.subr.mxu0 0.0
    %4728 = vmatpush1.msra.mxu0 0.0
    %4729 = vmatprep.subr.mxu0 0.0
    %4730 = vmatpush1.msra.mxu0 0.0
    %4731 = vmatprep.subr.mxu0 0.0
    %4732 = vmatpush1.msra.mxu0 0.0
    %4733 = vmatprep.subr.mxu0 0.0
    %4734 = vmatpush1.msra.mxu0 0.0
    %4735 = vmatprep.subr.mxu0 0.0
    %4736 = vmatpush1.msra.mxu0 0.0
    %4737 = vmatprep.subr.mxu0 0.0
    %4738 = vmatpush1.msra.mxu0 0.0
    %4739 = vmatprep.subr.mxu0 0.0
    %4740 = vmatpush1.msra.mxu0 0.0
    %4741 = vmatprep.subr.mxu0 0.0
    %4742 = vmatpush1.msra.mxu0 0.0
    %4743 = vmatprep.subr.mxu0 0.0
    %4744 = vmatpush1.msra.mxu0 0.0
    %4745 = vmatprep.subr.mxu0 0.0
    %4746 = vmatpush1.msra.mxu0 0.0
    %4747 = vmatprep.subr.mxu0 0.0
    %4748 = vmatpush1.msra.mxu0 0.0
    %4749 = vmatprep.subr.mxu0 0.0
    %4750 = vmatpush1.msra.mxu0 0.0
    %4751 = vmatprep.subr.mxu0 0.0
    %4752 = vmatpush1.msra.mxu0 0.0
    %4753 = vmatprep.subr.mxu0 0.0
    %4754 = vmatpush1.msra.mxu0 0.0
    %4755 = vmatprep.subr.mxu0 0.0
    %4756 = vmatpush1.msra.mxu0 0.0
    %4757 = vmatprep.subr.mxu0 0.0
    %4758 = vmatpush1.msra.mxu0 0.0
    %4759 = vmatprep.subr.mxu0 0.0
    %4760 = vmatpush1.msra.mxu0 0.0
    %4761 = vmatprep.subr.mxu0 0.0
    %4762 = vmatpush1.msra.mxu0 0.0
    %4763 = vmatprep.subr.mxu0 0.0
    %4764 = vmatpush1.msra.mxu0 0.0
    %4765 = vmatprep.subr.mxu0 0.0
    %4766 = vmatpush1.msra.mxu0 0.0
    %4767 = vmatprep.subr.mxu0 0.0
    %4768 = vmatpush1.msra.mxu0 0.0
    %4769 = vmatprep.subr.mxu0 0.0
    %4770 = vmatpush1.msra.mxu0 0.0
    %4771 = vmatprep.subr.mxu0 0.0
    %4772 = vmatpush1.msra.mxu0 0.0
    %4773 = vmatprep.subr.mxu0 0.0
    %4774 = vmatpush1.msra.mxu0 0.0
    %4775 = vmatprep.subr.mxu0 0.0
    %4776 = vmatpush1.msra.mxu0 0.0
    %4777 = vmatprep.mubr.f32.mxu0 0.0
    %v4778 = vand.u32 %v4575, 4294901760
    %4779 = vmatmul.mubr.f32.gmra.mrb[0].mxu0 %v4778
    %v4780 = vpop.f32.mrb[0].mxu0
    %v4781 = vadd.f32 %v4666, %v4780
    %v4782 = vpop.f32.mrb[0].mxu0
    %v4783 = vadd.f32 %v4668, %v4782
    %4784 = vmatprep.mubr.f32.mxu0 0.0
    %v4785 = vand.u32 %v4578, 4294901760
    %4786 = vmatmul.mubr.f32.gmra.mrb[0].mxu0 %v4785
    %v4787 = vpop.f32.mrb[0].mxu0
    %v4788 = vadd.f32 %v4677, %v4787
    %v4789 = vpop.f32.mrb[0].mxu0
    %v4790 = vadd.f32 %v4679, %v4789
    %4791 = vmatprep.mubr.f32.mxu0 0.0
    %v4792 = vand.u32 %v4581, 4294901760
    %4793 = vmatmul.mubr.f32.gmra.mrb[0].mxu0 %v4792
    %v4794 = vpop.f32.mrb[0].mxu0
    %v4795 = vadd.f32 %v4688, %v4794
    %v4796 = vpop.f32.mrb[0].mxu0
    %v4797 = vadd.f32 %v4690, %v4796
    %4798 = vmatprep.mubr.f32.mxu0 0.0
    %v4799 = vand.u32 %v4584, 4294901760
    %4800 = vmatmul.mubr.f32.gmra.mrb[0].mxu0 %v4799
    %v4801 = vpop.f32.mrb[0].mxu0
    %v4802 = vadd.f32 %v4699, %v4801
    %v4803 = vpop.f32.mrb[0].mxu0
    %v4804 = vadd.f32 %v4701, %v4803
    %4805 = vdwg.mxu0
    %v4806 = vand.u32 %v4590, 4294901760
    %v4807 = vsub.f32 %v4590, %v4806
    %4808 = vmatprep.subr.mxu0 %v4807
    %v4809 = vand.u32 %v4587, 4294901760
    %v4810 = vsub.f32 %v4587, %v4809
    %4811 = vmatpush1.msra.mxu0 %v4810
    %4812 = vmatprep.subr.mxu0 0.0
    %4813 = vmatpush1.msra.mxu0 0.0
    %4814 = vmatprep.subr.mxu0 0.0
    %4815 = vmatpush1.msra.mxu0 0.0
    %4816 = vmatprep.subr.mxu0 0.0
    %4817 = vmatpush1.msra.mxu0 0.0
    %4818 = vmatprep.subr.mxu0 0.0
    %4819 = vmatpush1.msra.mxu0 0.0
    %4820 = vmatprep.subr.mxu0 0.0
    %4821 = vmatpush1.msra.mxu0 0.0
    %4822 = vmatprep.subr.mxu0 0.0
    %4823 = vmatpush1.msra.mxu0 0.0
    %4824 = vmatprep.subr.mxu0 0.0
    %4825 = vmatpush1.msra.mxu0 0.0
    %4826 = vmatprep.subr.mxu0 0.0
    %4827 = vmatpush1.msra.mxu0 0.0
    %4828 = vmatprep.subr.mxu0 0.0
    %4829 = vmatpush1.msra.mxu0 0.0
    %4830 = vmatprep.subr.mxu0 0.0
    %4831 = vmatpush1.msra.mxu0 0.0
    %4832 = vmatprep.subr.mxu0 0.0
    %4833 = vmatpush1.msra.mxu0 0.0
    %4834 = vmatprep.subr.mxu0 0.0
    %4835 = vmatpush1.msra.mxu0 0.0
    %4836 = vmatprep.subr.mxu0 0.0
    %4837 = vmatpush1.msra.mxu0 0.0
    %4838 = vmatprep.subr.mxu0 0.0
    %4839 = vmatpush1.msra.mxu0 0.0
    %4840 = vmatprep.subr.mxu0 0.0
    %4841 = vmatpush1.msra.mxu0 0.0
    %4842 = vmatprep.subr.mxu0 0.0
    %4843 = vmatpush1.msra.mxu0 0.0
    %4844 = vmatprep.subr.mxu0 0.0
    %4845 = vmatpush1.msra.mxu0 0.0
    %4846 = vmatprep.subr.mxu0 0.0
    %4847 = vmatpush1.msra.mxu0 0.0
    %4848 = vmatprep.subr.mxu0 0.0
    %4849 = vmatpush1.msra.mxu0 0.0
    %4850 = vmatprep.subr.mxu0 0.0
    %4851 = vmatpush1.msra.mxu0 0.0
    %4852 = vmatprep.subr.mxu0 0.0
    %4853 = vmatpush1.msra.mxu0 0.0
    %4854 = vmatprep.subr.mxu0 0.0
    %4855 = vmatpush1.msra.mxu0 0.0
    %4856 = vmatprep.subr.mxu0 0.0
    %4857 = vmatpush1.msra.mxu0 0.0
    %4858 = vmatprep.subr.mxu0 0.0
    %4859 = vmatpush1.msra.mxu0 0.0
    %4860 = vmatprep.subr.mxu0 0.0
    %4861 = vmatpush1.msra.mxu0 0.0
    %4862 = vmatprep.subr.mxu0 0.0
    %4863 = vmatpush1.msra.mxu0 0.0
    %4864 = vmatprep.subr.mxu0 0.0
    %4865 = vmatpush1.msra.mxu0 0.0
    %4866 = vmatprep.subr.mxu0 0.0
    %4867 = vmatpush1.msra.mxu0 0.0
    %4868 = vmatprep.subr.mxu0 0.0
    %4869 = vmatpush1.msra.mxu0 0.0
    %4870 = vmatprep.subr.mxu0 0.0
    %4871 = vmatpush1.msra.mxu0 0.0
    %4872 = vmatprep.subr.mxu0 0.0
    %4873 = vmatpush1.msra.mxu0 0.0
    %4874 = vmatprep.mubr.f32.mxu0 0.0
    %v4875 = vand.u32 %v4575, 4294901760
    %v4876 = vsub.f32 %v4575, %v4875
    %4877 = vmatmul.mubr.f32.gmra.mrb[0].mxu0 %v4876
    %v4878 = vpop.f32.mrb[0].mxu0
    %v4879 = vadd.f32 %v4781, %v4878
    %v4880 = vpop.f32.mrb[0].mxu0
    %v4881 = vadd.f32 %v4783, %v4880
    %4882 = vmatprep.mubr.f32.mxu0 0.0
    %v4883 = vand.u32 %v4578, 4294901760
    %v4884 = vsub.f32 %v4578, %v4883
    %4885 = vmatmul.mubr.f32.gmra.mrb[0].mxu0 %v4884
    %v4886 = vpop.f32.mrb[0].mxu0
    %v4887 = vadd.f32 %v4788, %v4886
    %v4888 = vpop.f32.mrb[0].mxu0
    %v4889 = vadd.f32 %v4790, %v4888
    %4890 = vmatprep.mubr.f32.mxu0 0.0
    %v4891 = vand.u32 %v4581, 4294901760
    %v4892 = vsub.f32 %v4581, %v4891
    %4893 = vmatmul.mubr.f32.gmra.mrb[0].mxu0 %v4892
    %v4894 = vpop.f32.mrb[0].mxu0
    %v4895 = vadd.f32 %v4795, %v4894
    %v4896 = vpop.f32.mrb[0].mxu0
    %v4897 = vadd.f32 %v4797, %v4896
    %4898 = vmatprep.mubr.f32.mxu0 0.0
    %v4899 = vand.u32 %v4584, 4294901760
    %v4900 = vsub.f32 %v4584, %v4899
    %4901 = vmatmul.mubr.f32.gmra.mrb[0].mxu0 %v4900
    %v4902 = vpop.f32.mrb[0].mxu0
    %v4903 = vadd.f32 %v4802, %v4902
    %v4904 = vpop.f32.mrb[0].mxu0
    %v4905 = vadd.f32 %v4804, %v4904
    %4906 = vdwg.mxu0
    %v4907 = vand.u32 %v4590, 4294901760
    %4908 = vmatprep.subr.mxu0 %v4907
    %v4909 = vand.u32 %v4587, 4294901760
    %4910 = vmatpush1.msra.mxu0 %v4909
    %4911 = vmatprep.subr.mxu0 0.0
    %4912 = vmatpush1.msra.mxu0 0.0
    %4913 = vmatprep.subr.mxu0 0.0
    %4914 = vmatpush1.msra.mxu0 0.0
    %4915 = vmatprep.subr.mxu0 0.0
    %4916 = vmatpush1.msra.mxu0 0.0
    %4917 = vmatprep.subr.mxu0 0.0
    %4918 = vmatpush1.msra.mxu0 0.0
    %4919 = vmatprep.subr.mxu0 0.0
    %4920 = vmatpush1.msra.mxu0 0.0
    %4921 = vmatprep.subr.mxu0 0.0
    %4922 = vmatpush1.msra.mxu0 0.0
    %4923 = vmatprep.subr.mxu0 0.0
    %4924 = vmatpush1.msra.mxu0 0.0
    %4925 = vmatprep.subr.mxu0 0.0
    %4926 = vmatpush1.msra.mxu0 0.0
    %4927 = vmatprep.subr.mxu0 0.0
    %4928 = vmatpush1.msra.mxu0 0.0
    %4929 = vmatprep.subr.mxu0 0.0
    %4930 = vmatpush1.msra.mxu0 0.0
    %4931 = vmatprep.subr.mxu0 0.0
    %4932 = vmatpush1.msra.mxu0 0.0
    %4933 = vmatprep.subr.mxu0 0.0
    %4934 = vmatpush1.msra.mxu0 0.0
    %4935 = vmatprep.subr.mxu0 0.0
    %4936 = vmatpush1.msra.mxu0 0.0
    %4937 = vmatprep.subr.mxu0 0.0
    %4938 = vmatpush1.msra.mxu0 0.0
    %4939 = vmatprep.subr.mxu0 0.0
    %4940 = vmatpush1.msra.mxu0 0.0
    %4941 = vmatprep.subr.mxu0 0.0
    %4942 = vmatpush1.msra.mxu0 0.0
    %4943 = vmatprep.subr.mxu0 0.0
    %4944 = vmatpush1.msra.mxu0 0.0
    %4945 = vmatprep.subr.mxu0 0.0
    %4946 = vmatpush1.msra.mxu0 0.0
    %4947 = vmatprep.subr.mxu0 0.0
    %4948 = vmatpush1.msra.mxu0 0.0
    %4949 = vmatprep.subr.mxu0 0.0
    %4950 = vmatpush1.msra.mxu0 0.0
    %4951 = vmatprep.subr.mxu0 0.0
    %4952 = vmatpush1.msra.mxu0 0.0
    %4953 = vmatprep.subr.mxu0 0.0
    %4954 = vmatpush1.msra.mxu0 0.0
    %4955 = vmatprep.subr.mxu0 0.0
    %4956 = vmatpush1.msra.mxu0 0.0
    %4957 = vmatprep.subr.mxu0 0.0
    %4958 = vmatpush1.msra.mxu0 0.0
    %4959 = vmatprep.subr.mxu0 0.0
    %4960 = vmatpush1.msra.mxu0 0.0
    %4961 = vmatprep.subr.mxu0 0.0
    %4962 = vmatpush1.msra.mxu0 0.0
    %4963 = vmatprep.subr.mxu0 0.0
    %4964 = vmatpush1.msra.mxu0 0.0
    %4965 = vmatprep.subr.mxu0 0.0
    %4966 = vmatpush1.msra.mxu0 0.0
    %4967 = vmatprep.subr.mxu0 0.0
    %4968 = vmatpush1.msra.mxu0 0.0
    %4969 = vmatprep.subr.mxu0 0.0
    %4970 = vmatpush1.msra.mxu0 0.0
    %4971 = vmatprep.subr.mxu0 0.0
    %4972 = vmatpush1.msra.mxu0 0.0
    %4973 = vmatprep.mubr.f32.mxu0 0.0
    %v4974 = vand.u32 %v4575, 4294901760
    %v4975 = vsub.f32 %v4575, %v4974
    %v4976 = vand.u32 %v4975, 4294901760
    %4977 = vmatmul.mubr.f32.gmra.mrb[0].mxu0 %v4976
    %v4978 = vpop.f32.mrb[0].mxu0
    %v4979 = vadd.f32 %v4879, %v4978
    %v4980 = vpop.f32.mrb[0].mxu0
    %v4981 = vadd.f32 %v4881, %v4980
    %4982 = vmatprep.mubr.f32.mxu0 0.0
    %v4983 = vand.u32 %v4578, 4294901760
    %v4984 = vsub.f32 %v4578, %v4983
    %v4985 = vand.u32 %v4984, 4294901760
    %4986 = vmatmul.mubr.f32.gmra.mrb[0].mxu0 %v4985
    %v4987 = vpop.f32.mrb[0].mxu0
    %v4988 = vadd.f32 %v4887, %v4987
    %v4989 = vpop.f32.mrb[0].mxu0
    %v4990 = vadd.f32 %v4889, %v4989
    %4991 = vmatprep.mubr.f32.mxu0 0.0
    %v4992 = vand.u32 %v4581, 4294901760
    %v4993 = vsub.f32 %v4581, %v4992
    %v4994 = vand.u32 %v4993, 4294901760
    %4995 = vmatmul.mubr.f32.gmra.mrb[0].mxu0 %v4994
    %v4996 = vpop.f32.mrb[0].mxu0
    %v4997 = vadd.f32 %v4895, %v4996
    %v4998 = vpop.f32.mrb[0].mxu0
    %v4999 = vadd.f32 %v4897, %v4998
    %5000 = vmatprep.mubr.f32.mxu0 0.0
    %v5001 = vand.u32 %v4584, 4294901760
    %v5002 = vsub.f32 %v4584, %v5001
    %v5003 = vand.u32 %v5002, 4294901760
    %5004 = vmatmul.mubr.f32.gmra.mrb[0].mxu0 %v5003
    %v5005 = vpop.f32.mrb[0].mxu0
    %v5006 = vadd.f32 %v4903, %v5005
    %v5007 = vpop.f32.mrb[0].mxu0
    %v5008 = vadd.f32 %v4905, %v5007
    %5009 = vdwg.mxu0
    %v5010 = vand.u32 %v4590, 4294901760
    %v5011 = vsub.f32 %v4590, %v5010
    %v5012 = vand.u32 %v5011, 4294901760
    %5013 = vmatprep.subr.mxu0 %v5012
    %v5014 = vand.u32 %v4587, 4294901760
    %v5015 = vsub.f32 %v4587, %v5014
    %v5016 = vand.u32 %v5015, 4294901760
    %5017 = vmatpush1.msra.mxu0 %v5016
    %5018 = vmatprep.subr.mxu0 0.0
    %5019 = vmatpush1.msra.mxu0 0.0
    %5020 = vmatprep.subr.mxu0 0.0
    %5021 = vmatpush1.msra.mxu0 0.0
    %5022 = vmatprep.subr.mxu0 0.0
    %5023 = vmatpush1.msra.mxu0 0.0
    %5024 = vmatprep.subr.mxu0 0.0
    %5025 = vmatpush1.msra.mxu0 0.0
    %5026 = vmatprep.subr.mxu0 0.0
    %5027 = vmatpush1.msra.mxu0 0.0
    %5028 = vmatprep.subr.mxu0 0.0
    %5029 = vmatpush1.msra.mxu0 0.0
    %5030 = vmatprep.subr.mxu0 0.0
    %5031 = vmatpush1.msra.mxu0 0.0
    %5032 = vmatprep.subr.mxu0 0.0
    %5033 = vmatpush1.msra.mxu0 0.0
    %5034 = vmatprep.subr.mxu0 0.0
    %5035 = vmatpush1.msra.mxu0 0.0
    %5036 = vmatprep.subr.mxu0 0.0
    %5037 = vmatpush1.msra.mxu0 0.0
    %5038 = vmatprep.subr.mxu0 0.0
    %5039 = vmatpush1.msra.mxu0 0.0
    %5040 = vmatprep.subr.mxu0 0.0
    %5041 = vmatpush1.msra.mxu0 0.0
    %5042 = vmatprep.subr.mxu0 0.0
    %5043 = vmatpush1.msra.mxu0 0.0
    %5044 = vmatprep.subr.mxu0 0.0
    %5045 = vmatpush1.msra.mxu0 0.0
    %5046 = vmatprep.subr.mxu0 0.0
    %5047 = vmatpush1.msra.mxu0 0.0
    %5048 = vmatprep.subr.mxu0 0.0
    %5049 = vmatpush1.msra.mxu0 0.0
    %5050 = vmatprep.subr.mxu0 0.0
    %5051 = vmatpush1.msra.mxu0 0.0
    %5052 = vmatprep.subr.mxu0 0.0
    %5053 = vmatpush1.msra.mxu0 0.0
    %5054 = vmatprep.subr.mxu0 0.0
    %5055 = vmatpush1.msra.mxu0 0.0
    %5056 = vmatprep.subr.mxu0 0.0
    %5057 = vmatpush1.msra.mxu0 0.0
    %5058 = vmatprep.subr.mxu0 0.0
    %5059 = vmatpush1.msra.mxu0 0.0
    %5060 = vmatprep.subr.mxu0 0.0
    %5061 = vmatpush1.msra.mxu0 0.0
    %5062 = vmatprep.subr.mxu0 0.0
    %5063 = vmatpush1.msra.mxu0 0.0
    %5064 = vmatprep.subr.mxu0 0.0
    %5065 = vmatpush1.msra.mxu0 0.0
    %5066 = vmatprep.subr.mxu0 0.0
    %5067 = vmatpush1.msra.mxu0 0.0
    %5068 = vmatprep.subr.mxu0 0.0
    %5069 = vmatpush1.msra.mxu0 0.0
    %5070 = vmatprep.subr.mxu0 0.0
    %5071 = vmatpush1.msra.mxu0 0.0
    %5072 = vmatprep.subr.mxu0 0.0
    %5073 = vmatpush1.msra.mxu0 0.0
    %5074 = vmatprep.subr.mxu0 0.0
    %5075 = vmatpush1.msra.mxu0 0.0
    %5076 = vmatprep.subr.mxu0 0.0
    %5077 = vmatpush1.msra.mxu0 0.0
    %5078 = vmatprep.subr.mxu0 0.0
    %5079 = vmatpush1.msra.mxu0 0.0
    %5080 = vmatprep.mubr.f32.mxu0 0.0
    %v5081 = vand.u32 %v4575, 4294901760
    %5082 = vmatmul.mubr.f32.gmra.mrb[0].mxu0 %v5081
    %v5083 = vpop.f32.mrb[0].mxu0
    %v5084 = vadd.f32 %v4979, %v5083
    %v5085 = vpop.f32.mrb[0].mxu0
    %v5086 = vadd.f32 %v4981, %v5085
    %5087 = vmatprep.mubr.f32.mxu0 0.0
    %v5088 = vand.u32 %v4578, 4294901760
    %5089 = vmatmul.mubr.f32.gmra.mrb[0].mxu0 %v5088
    %v5090 = vpop.f32.mrb[0].mxu0
    %v5091 = vadd.f32 %v4988, %v5090
    %v5092 = vpop.f32.mrb[0].mxu0
    %v5093 = vadd.f32 %v4990, %v5092
    %5094 = vmatprep.mubr.f32.mxu0 0.0
    %v5095 = vand.u32 %v4581, 4294901760
    %5096 = vmatmul.mubr.f32.gmra.mrb[0].mxu0 %v5095
    %v5097 = vpop.f32.mrb[0].mxu0
    %v5098 = vadd.f32 %v4997, %v5097
    %v5099 = vpop.f32.mrb[0].mxu0
    %v5100 = vadd.f32 %v4999, %v5099
    %5101 = vmatprep.mubr.f32.mxu0 0.0
    %v5102 = vand.u32 %v4584, 4294901760
    %5103 = vmatmul.mubr.f32.gmra.mrb[0].mxu0 %v5102
    %v5104 = vpop.f32.mrb[0].mxu0
    %v5105 = vadd.f32 %v5006, %v5104
    %v5106 = vpop.f32.mrb[0].mxu0
    %v5107 = vadd.f32 %v5008, %v5106
    %5108 = vdwg.mxu0
    %v5109 = vand.u32 %v4590, 4294901760
    %5110 = vmatprep.subr.mxu0 %v5109
    %v5111 = vand.u32 %v4587, 4294901760
    %5112 = vmatpush1.msra.mxu0 %v5111
    %5113 = vmatprep.subr.mxu0 0.0
    %5114 = vmatpush1.msra.mxu0 0.0
    %5115 = vmatprep.subr.mxu0 0.0
    %5116 = vmatpush1.msra.mxu0 0.0
    %5117 = vmatprep.subr.mxu0 0.0
    %5118 = vmatpush1.msra.mxu0 0.0
    %5119 = vmatprep.subr.mxu0 0.0
    %5120 = vmatpush1.msra.mxu0 0.0
    %5121 = vmatprep.subr.mxu0 0.0
    %5122 = vmatpush1.msra.mxu0 0.0
    %5123 = vmatprep.subr.mxu0 0.0
    %5124 = vmatpush1.msra.mxu0 0.0
    %5125 = vmatprep.subr.mxu0 0.0
    %5126 = vmatpush1.msra.mxu0 0.0
    %5127 = vmatprep.subr.mxu0 0.0
    %5128 = vmatpush1.msra.mxu0 0.0
    %5129 = vmatprep.subr.mxu0 0.0
    %5130 = vmatpush1.msra.mxu0 0.0
    %5131 = vmatprep.subr.mxu0 0.0
    %5132 = vmatpush1.msra.mxu0 0.0
    %5133 = vmatprep.subr.mxu0 0.0
    %5134 = vmatpush1.msra.mxu0 0.0
    %5135 = vmatprep.subr.mxu0 0.0
    %5136 = vmatpush1.msra.mxu0 0.0
    %5137 = vmatprep.subr.mxu0 0.0
    %5138 = vmatpush1.msra.mxu0 0.0
    %5139 = vmatprep.subr.mxu0 0.0
    %5140 = vmatpush1.msra.mxu0 0.0
    %5141 = vmatprep.subr.mxu0 0.0
    %5142 = vmatpush1.msra.mxu0 0.0
    %5143 = vmatprep.subr.mxu0 0.0
    %5144 = vmatpush1.msra.mxu0 0.0
    %5145 = vmatprep.subr.mxu0 0.0
    %5146 = vmatpush1.msra.mxu0 0.0
    %5147 = vmatprep.subr.mxu0 0.0
    %5148 = vmatpush1.msra.mxu0 0.0
    %5149 = vmatprep.subr.mxu0 0.0
    %5150 = vmatpush1.msra.mxu0 0.0
    %5151 = vmatprep.subr.mxu0 0.0
    %5152 = vmatpush1.msra.mxu0 0.0
    %5153 = vmatprep.subr.mxu0 0.0
    %5154 = vmatpush1.msra.mxu0 0.0
    %5155 = vmatprep.subr.mxu0 0.0
    %5156 = vmatpush1.msra.mxu0 0.0
    %5157 = vmatprep.subr.mxu0 0.0
    %5158 = vmatpush1.msra.mxu0 0.0
    %5159 = vmatprep.subr.mxu0 0.0
    %5160 = vmatpush1.msra.mxu0 0.0
    %5161 = vmatprep.subr.mxu0 0.0
    %5162 = vmatpush1.msra.mxu0 0.0
    %5163 = vmatprep.subr.mxu0 0.0
    %5164 = vmatpush1.msra.mxu0 0.0
    %5165 = vmatprep.subr.mxu0 0.0
    %5166 = vmatpush1.msra.mxu0 0.0
    %5167 = vmatprep.subr.mxu0 0.0
    %5168 = vmatpush1.msra.mxu0 0.0
    %5169 = vmatprep.subr.mxu0 0.0
    %5170 = vmatpush1.msra.mxu0 0.0
    %5171 = vmatprep.subr.mxu0 0.0
    %5172 = vmatpush1.msra.mxu0 0.0
    %5173 = vmatprep.subr.mxu0 0.0
    %5174 = vmatpush1.msra.mxu0 0.0
    %5175 = vmatprep.mubr.f32.mxu0 0.0
    %v5176 = vand.u32 %v4575, 4294901760
    %5177 = vmatmul.mubr.f32.gmra.mrb[0].mxu0 %v5176
    %v5178 = vpop.f32.mrb[0].mxu0
    %v5179 = vadd.f32 %v5084, %v5178
    %v5180 = vpop.f32.mrb[0].mxu0
    %v5181 = vadd.f32 %v5086, %v5180
    %5182 = vmatprep.mubr.f32.mxu0 0.0
    %v5183 = vand.u32 %v4578, 4294901760
    %5184 = vmatmul.mubr.f32.gmra.mrb[0].mxu0 %v5183
    %v5185 = vpop.f32.mrb[0].mxu0
    %v5186 = vadd.f32 %v5091, %v5185
    %v5187 = vpop.f32.mrb[0].mxu0
    %v5188 = vadd.f32 %v5093, %v5187
    %5189 = vmatprep.mubr.f32.mxu0 0.0
    %v5190 = vand.u32 %v4581, 4294901760
    %5191 = vmatmul.mubr.f32.gmra.mrb[0].mxu0 %v5190
    %v5192 = vpop.f32.mrb[0].mxu0
    %v5193 = vadd.f32 %v5098, %v5192
    %v5194 = vpop.f32.mrb[0].mxu0
    %v5195 = vadd.f32 %v5100, %v5194
    %5196 = vmatprep.mubr.f32.mxu0 0.0
    %v5197 = vand.u32 %v4584, 4294901760
    %5198 = vmatmul.mubr.f32.gmra.mrb[0].mxu0 %v5197
    %v5199 = vpop.f32.mrb[0].mxu0
    %v5200 = vadd.f32 %v5105, %v5199
    %v5201 = vpop.f32.mrb[0].mxu0
    %v5202 = vadd.f32 %v5107, %v5201
    %5203 = vdwg.mxu0
    %v5204 = vadd.f32 %v4562, %v5179
    %v5205 = vadd.f32 %v4563, %v5181
    %v5206 = vadd.f32 %v4564, %v5186
    %v5207 = vadd.f32 %v4565, %v5188
    %v5208 = vadd.f32 %v4566, %v5193
    %v5209 = vadd.f32 %v4567, %v5195
    %v5210 = vadd.f32 %v4568, %v5200
    %v5211 = vadd.f32 %v4569, %v5202
    %5212 = vst [vmem:[#allocation2] sm:$0xff] %v5204
    %5213 = vst [vmem:[#allocation2 + $0x8] sm:$0xff] %v5205
    %5214 = vst [vmem:[#allocation2 + $0x10] sm:$0xff] %v5206
    %5215 = vst [vmem:[#allocation2 + $0x18] sm:$0xff] %v5207
    %5216 = vst [vmem:[#allocation2 + $0x20] sm:$0xff] %v5208
    %5217 = vst [vmem:[#allocation2 + $0x28] sm:$0xff] %v5209
    %5218 = vst [vmem:[#allocation2 + $0x30] sm:$0xff] %v5210
    %5219 = vst [vmem:[#allocation2 + $0x38] sm:$0xff] %v5211
    // Predicated region
    $region46: #{tpu_custom_call.1} parent=1 // pred_check
      _
    $region47: #{tpu_custom_call.1} parent=1 // pred_check_branch
      %5221 = sbr.rel (0) target = $region49
    $region48: #{tpu_custom_call.1} parent=1 // pred_region
      %s5223 = ssub.s32 1024, 1024
      %5224 = vsyncadd [#allocation3], %s5223
      %s5225 = sshll.u32 [#allocation2], 4
      %s5226 = int_to_ptr.vmem [resolvable:$true] %s5225
      %5231 = dma.vmem_to_hbm [thread:$0]  %s5226, 1024, %s11, [#allocation3], 256, 256, 16
    $region49: #{tpu_custom_call.1} parent=1 // pred_fallthru
      _
    // Predicated region
    $region50: #{tpu_custom_call.1} parent=1 // pred_check
      _
    $region51: #{tpu_custom_call.1} parent=1 // pred_check_branch
      %5233 = sbr.rel (0) target = $region53
    $region52: #{tpu_custom_call.1} parent=1 // pred_region
      %5234 = dma.done [#allocation3], 1024
    $region53: #{tpu_custom_call.1} parent=1 // pred_fallthru
      _
    %5235 = vsyncpa [#allocation3], 1

</llo_original>
